<compile_context>
chip_gen: v5e
topology: v5e:2x2
jax: 0.10.0
libtpu: 0.0.40
codegen_flags: <defaults>
</compile_context>

<pallas_src>
import jax
import jax.numpy as jnp
from jax.experimental import pallas as pl
from jax.experimental.pallas import tpu as pltpu
import numpy as np


def _lstm_fc_kernel(x_ref,      # (T*B, D)   time-major, flattened input
                    wih0_ref,   # (D, 4H)    layer-0 W_ih^T
                    whh0_ref,   # (H, 4H)    layer-0 W_hh^T
                    b0_ref,     # (1, 4H)    layer-0 (b_ih + b_hh)
                    wih1_ref,   # (H, 4H)    layer-1 W_ih^T
                    whh1_ref,   # (H, 4H)    layer-1 W_hh^T
                    b1_ref,     # (1, 4H)    layer-1 (b_ih + b_hh)
                    wfc_ref,    # (H, Opad)  fc weight^T, zero-padded to 128 lanes
                    bfc_ref,    # (1, Opad)  fc bias, zero-padded
                    out_ref,    # (B, Opad)  sigmoid(fc(h1_T)), lane-dense
                    hseq_ref):  # scratch VMEM (T*B, H): layer-0 hidden sequence
    TB = x_ref.shape[0]
    H = whh0_ref.shape[0]
    B = out_ref.shape[0]
    T = TB // B

    def lstm_gates(pre, c):
        # pre: (B, 4H) pre-activations, PyTorch gate order i, f, g, o.
        i = jax.nn.sigmoid(pre[:, 0 * H:1 * H])
        f = jax.nn.sigmoid(pre[:, 1 * H:2 * H])
        g = jnp.tanh(pre[:, 2 * H:3 * H])
        o = jax.nn.sigmoid(pre[:, 3 * H:4 * H])
        c_new = f * c + i * g
        h_new = o * jnp.tanh(c_new)
        return h_new, c_new

    # ---- Layer 0: hoisted input projection (one big MXU call for all T steps,
    #      bias broadcast folded in once).
    xg0 = (jnp.dot(x_ref[...], wih0_ref[...], preferred_element_type=jnp.float32)
           + b0_ref[...])                                           # (T*B, 4H)

    h = jnp.zeros((B, H), jnp.float32)
    c = jnp.zeros((B, H), jnp.float32)
    for t in range(T):                                              # fully unrolled
        pre = xg0[t * B:(t + 1) * B, :] + jnp.dot(
            h, whh0_ref[...], preferred_element_type=jnp.float32)
        h, c = lstm_gates(pre, c)
        hseq_ref[pl.ds(t * B, B), :] = h                            # static-offset store

    # ---- Layer 1: hoisted input projection over the full layer-0 output sequence.
    xg1 = (jnp.dot(hseq_ref[...], wih1_ref[...], preferred_element_type=jnp.float32)
           + b1_ref[...])                                           # (T*B, 4H)

    h = jnp.zeros((B, H), jnp.float32)
    c = jnp.zeros((B, H), jnp.float32)
    for t in range(T):                                              # fully unrolled
        pre = xg1[t * B:(t + 1) * B, :] + jnp.dot(
            h, whh1_ref[...], preferred_element_type=jnp.float32)
        h, c = lstm_gates(pre, c)

    # ---- fc + sigmoid on the last top-layer hidden state (lane-dense padded output).
    logits = (jnp.dot(h, wfc_ref[...], preferred_element_type=jnp.float32)
              + bfc_ref[...])
    out_ref[...] = jax.nn.sigmoid(logits).astype(out_ref.dtype)


def prepare_params(params):
    """One-time (model-load) weight prep: transposes, bias sums, lane padding."""
    H = params["whh0"].shape[1]
    O = params["wfc"].shape[0]
    OPAD = 128 * ((O + 127) // 128)                     # lane-dense output width
    wfc_p = jnp.zeros((H, OPAD), jnp.float32).at[:, :O].set(
        params["wfc"].T.astype(jnp.float32))
    bfc_p = jnp.zeros((1, OPAD), jnp.float32).at[:, :O].set(
        params["bfc"].reshape(1, O).astype(jnp.float32))
    return {
        "wih0": params["wih0"].T.astype(jnp.float32),                         # (D, 4H)
        "whh0": params["whh0"].T.astype(jnp.float32),                         # (H, 4H)
        "b0":   (params["bih0"] + params["bhh0"]).reshape(1, 4 * H).astype(jnp.float32),
        "wih1": params["wih1"].T.astype(jnp.float32),                         # (H, 4H)
        "whh1": params["whh1"].T.astype(jnp.float32),                         # (H, 4H)
        "b1":   (params["bih1"] + params["bhh1"]).reshape(1, 4 * H).astype(jnp.float32),
        "wfc":  wfc_p,                                                        # (H, OPAD)
        "bfc":  bfc_p,                                                        # (1, OPAD)
        "out_size": O,
    }


@jax.jit
def _forward(x, wih0, whh0, b0, wih1, whh1, b1, wfc, bfc):
    B, T, D = x.shape
    H = whh0.shape[0]
    OPAD = wfc.shape[1]
    # time-major + flatten so each timestep is a contiguous (B, D) row block
    x_tm = jnp.transpose(x, (1, 0, 2)).reshape(T * B, D).astype(jnp.float32)
    vmem = pl.BlockSpec(memory_space=pltpu.MemorySpace.VMEM)
    return pl.pallas_call(
        _lstm_fc_kernel,
        out_shape=jax.ShapeDtypeStruct((B, OPAD), jnp.float32),
        in_specs=[vmem] * 9,
        out_specs=vmem,
        scratch_shapes=[pltpu.VMEM((T * B, H), jnp.float32)],
    )(x_tm, wih0, whh0, b0, wih1, whh1, b1, wfc, bfc)


def fault_prediction_lstm(x, prepped):
    """x: (B, T, D) batch_first, like the PyTorch module. Returns (B, O)."""
    out_pad = _forward(x, prepped["wih0"], prepped["whh0"], prepped["b0"],
                       prepped["wih1"], prepped["whh1"], prepped["b1"],
                       prepped["wfc"], prepped["bfc"])
    return out_pad[:, :prepped["out_size"]]


def _reference(x, params):
    """Pure-JAX reference reproducing nn.LSTM(num_layers=2, batch_first=True) + fc + sigmoid."""
    B, T, D = x.shape
    H = params["whh0"].shape[1]

    def run_layer(seq, wih, whh, bih, bhh):
        h = jnp.zeros((B, H), jnp.float32)
        c = jnp.zeros((B, H), jnp.float32)
        outs = []
        for t in range(T):
            gates = seq[:, t, :] @ wih.T + h @ whh.T + bih + bhh
            i = jax.nn.sigmoid(gates[:, 0 * H:1 * H])
            f = jax.nn.sigmoid(gates[:, 1 * H:2 * H])
            g = jnp.tanh(gates[:, 2 * H:3 * H])
            o = jax.nn.sigmoid(gates[:, 3 * H:4 * H])
            c = f * c + i * g
            h = o * jnp.tanh(c)
            outs.append(h)
        return jnp.stack(outs, axis=1)

    out0 = run_layer(x.astype(jnp.float32), params["wih0"], params["whh0"],
                     params["bih0"], params["bhh0"])
    out1 = run_layer(out0, params["wih1"], params["whh1"],
                     params["bih1"], params["bhh1"])
    logits = out1[:, -1, :] @ params["wfc"].T + params["bfc"]
    return jax.nn.sigmoid(logits)


def init_params(key, input_size, hidden_size, output_size):
    """Deterministic init matching PyTorch LSTM/Linear parameter shapes."""
    H = hidden_size
    k = 1.0 / np.sqrt(H)
    keys = jax.random.split(key, 10)
    u = lambda kk, shape: jax.random.uniform(kk, shape, jnp.float32, -k, k)
    return {
        "wih0": u(keys[0], (4 * H, input_size)),
        "whh0": u(keys[1], (4 * H, H)),
        "bih0": u(keys[2], (4 * H,)),
        "bhh0": u(keys[3], (4 * H,)),
        "wih1": u(keys[4], (4 * H, H)),
        "whh1": u(keys[5], (4 * H, H)),
        "bih1": u(keys[6], (4 * H,)),
        "bhh1": u(keys[7], (4 * H,)),
        "wfc":  u(keys[8], (output_size, H)),
        "bfc":  u(keys[9], (output_size,)),
    }


if __name__ == "__main__":
    # Module spec shapes: input_size=318, hidden_size=128, num_layers=2, output_size=1.
    B, T, D, H, O = 2, 8, 318, 128, 1

    key = jax.random.PRNGKey(0)
    kx, kp = jax.random.split(key)
    x = jax.random.normal(kx, (B, T, D), jnp.float32)
    params = init_params(kp, D, H, O)

    prepped = prepare_params(params)          # one-time weight prep (model load)
    out = fault_prediction_lstm(x, prepped)
    out = jax.block_until_ready(out)

    ref = _reference(x, params)
    np.testing.assert_allclose(np.asarray(out), np.asarray(ref), rtol=2e-4, atol=2e-4)

    print("KERNEL_OK")
</pallas_src>

<mosaic_0001>
module attributes {stable_mosaic.version = 11 : i64} {
  func.func @_lstm_fc_kernel(%arg0: memref<16x318xf32, #tpu.memory_space<vmem>>, %arg1: memref<318x512xf32, #tpu.memory_space<vmem>>, %arg2: memref<128x512xf32, #tpu.memory_space<vmem>>, %arg3: memref<1x512xf32, #tpu.memory_space<vmem>>, %arg4: memref<128x512xf32, #tpu.memory_space<vmem>>, %arg5: memref<128x512xf32, #tpu.memory_space<vmem>>, %arg6: memref<1x512xf32, #tpu.memory_space<vmem>>, %arg7: memref<128x128xf32, #tpu.memory_space<vmem>>, %arg8: memref<1x128xf32, #tpu.memory_space<vmem>>, %arg9: memref<2x128xf32, #tpu.memory_space<vmem>>, %arg10: memref<16x128xf32, #tpu.memory_space<vmem>>) attributes {dimension_semantics = [], scalar_prefetch = 0 : i64, scratch_operands = 1 : i64, tpu.core_type = #tpu.core_type<tc>} {
    %c0 = arith.constant 0 : index
    %c0_0 = arith.constant 0 : index
    %0 = vector.load %arg0[%c0, %c0_0] : memref<16x318xf32, #tpu.memory_space<vmem>>, vector<16x318xf32>
    %c0_1 = arith.constant 0 : index
    %c0_2 = arith.constant 0 : index
    %1 = vector.load %arg1[%c0_1, %c0_2] : memref<318x512xf32, #tpu.memory_space<vmem>>, vector<318x512xf32>
    %cst = arith.constant dense<0.000000e+00> : vector<16x512xf32>
    %2 = tpu.matmul %0, %1, %cst {dimension_numbers = #tpu.dot_dimension_numbers<[1], [0], [0], [1], [0, 0, 1, 1], [], []>} : vector<16x318xf32>, vector<318x512xf32>, vector<16x512xf32> -> vector<16x512xf32>
    %c0_3 = arith.constant 0 : index
    %c0_4 = arith.constant 0 : index
    %3 = vector.load %arg3[%c0_3, %c0_4] : memref<1x512xf32, #tpu.memory_space<vmem>>, vector<1x512xf32>
    %4 = vector.broadcast %3 : vector<1x512xf32> to vector<16x512xf32>
    %5 = arith.addf %2, %4 : vector<16x512xf32>
    %cst_5 = arith.constant 0.000000e+00 : f32
    %6 = vector.broadcast %cst_5 : f32 to vector<2x128xf32>
    %cst_6 = arith.constant 0.000000e+00 : f32
    %7 = vector.broadcast %cst_6 : f32 to vector<2x128xf32>
    %8 = vector.extract_strided_slice %5 {offsets = [0, 0], sizes = [2, 512], strides = [1, 1]} : vector<16x512xf32> to vector<2x512xf32>
    %c0_7 = arith.constant 0 : index
    %c0_8 = arith.constant 0 : index
    %9 = vector.load %arg2[%c0_7, %c0_8] : memref<128x512xf32, #tpu.memory_space<vmem>>, vector<128x512xf32>
    %cst_9 = arith.constant dense<0.000000e+00> : vector<2x512xf32>
    %10 = tpu.matmul %6, %9, %cst_9 {dimension_numbers = #tpu.dot_dimension_numbers<[1], [0], [0], [1], [0, 0, 1, 1], [], []>} : vector<2x128xf32>, vector<128x512xf32>, vector<2x512xf32> -> vector<2x512xf32>
    %11 = arith.addf %8, %10 : vector<2x512xf32>
    %12 = vector.extract_strided_slice %11 {offsets = [0, 0], sizes = [2, 128], strides = [1, 1]} : vector<2x512xf32> to vector<2x128xf32>
    %13 = arith.negf %12 : vector<2x128xf32>
    %14 = math.exp %13 : vector<2x128xf32>
    %cst_10 = arith.constant 1.000000e+00 : f32
    %15 = vector.broadcast %cst_10 : f32 to vector<2x128xf32>
    %16 = arith.addf %15, %14 : vector<2x128xf32>
    %17 = arith.divf %15, %16 : vector<2x128xf32>
    %18 = vector.extract_strided_slice %11 {offsets = [0, 128], sizes = [2, 128], strides = [1, 1]} : vector<2x512xf32> to vector<2x128xf32>
    %19 = arith.negf %18 : vector<2x128xf32>
    %20 = math.exp %19 : vector<2x128xf32>
    %cst_11 = arith.constant 1.000000e+00 : f32
    %21 = vector.broadcast %cst_11 : f32 to vector<2x128xf32>
    %22 = arith.addf %21, %20 : vector<2x128xf32>
    %23 = arith.divf %21, %22 : vector<2x128xf32>
    %24 = vector.extract_strided_slice %11 {offsets = [0, 256], sizes = [2, 128], strides = [1, 1]} : vector<2x512xf32> to vector<2x128xf32>
    %25 = math.tanh %24 : vector<2x128xf32>
    %26 = vector.extract_strided_slice %11 {offsets = [0, 384], sizes = [2, 128], strides = [1, 1]} : vector<2x512xf32> to vector<2x128xf32>
    %27 = arith.negf %26 : vector<2x128xf32>
    %28 = math.exp %27 : vector<2x128xf32>
    %cst_12 = arith.constant 1.000000e+00 : f32
    %29 = vector.broadcast %cst_12 : f32 to vector<2x128xf32>
    %30 = arith.addf %29, %28 : vector<2x128xf32>
    %31 = arith.divf %29, %30 : vector<2x128xf32>
    %32 = arith.mulf %23, %7 : vector<2x128xf32>
    %33 = arith.mulf %17, %25 : vector<2x128xf32>
    %34 = arith.addf %32, %33 : vector<2x128xf32>
    %35 = math.tanh %34 : vector<2x128xf32>
    %36 = arith.mulf %31, %35 : vector<2x128xf32>
    %c0_13 = arith.constant 0 : index
    %c0_14 = arith.constant 0 : index
    %37 = vector.load %arg10[%c0_13, %c0_14] : memref<16x128xf32, #tpu.memory_space<vmem>>, vector<2x128xf32>
    tpu.vector_store %arg10[%c0_13, %c0_14], %36 {strides = array<i32>} : memref<16x128xf32, #tpu.memory_space<vmem>>, vector<2x128xf32>,
    %38 = vector.extract_strided_slice %5 {offsets = [2, 0], sizes = [2, 512], strides = [1, 1]} : vector<16x512xf32> to vector<2x512xf32>
    %c0_15 = arith.constant 0 : index
    %c0_16 = arith.constant 0 : index
    %39 = vector.load %arg2[%c0_15, %c0_16] : memref<128x512xf32, #tpu.memory_space<vmem>>, vector<128x512xf32>
    %cst_17 = arith.constant dense<0.000000e+00> : vector<2x512xf32>
    %40 = tpu.matmul %36, %39, %cst_17 {dimension_numbers = #tpu.dot_dimension_numbers<[1], [0], [0], [1], [0, 0, 1, 1], [], []>} : vector<2x128xf32>, vector<128x512xf32>, vector<2x512xf32> -> vector<2x512xf32>
    %41 = arith.addf %38, %40 : vector<2x512xf32>
    %42 = vector.extract_strided_slice %41 {offsets = [0, 0], sizes = [2, 128], strides = [1, 1]} : vector<2x512xf32> to vector<2x128xf32>
    %43 = arith.negf %42 : vector<2x128xf32>
    %44 = math.exp %43 : vector<2x128xf32>
    %cst_18 = arith.constant 1.000000e+00 : f32
    %45 = vector.broadcast %cst_18 : f32 to vector<2x128xf32>
    %46 = arith.addf %45, %44 : vector<2x128xf32>
    %47 = arith.divf %45, %46 : vector<2x128xf32>
    %48 = vector.extract_strided_slice %41 {offsets = [0, 128], sizes = [2, 128], strides = [1, 1]} : vector<2x512xf32> to vector<2x128xf32>
    %49 = arith.negf %48 : vector<2x128xf32>
    %50 = math.exp %49 : vector<2x128xf32>
    %cst_19 = arith.constant 1.000000e+00 : f32
    %51 = vector.broadcast %cst_19 : f32 to vector<2x128xf32>
    %52 = arith.addf %51, %50 : vector<2x128xf32>
    %53 = arith.divf %51, %52 : vector<2x128xf32>
    %54 = vector.extract_strided_slice %41 {offsets = [0, 256], sizes = [2, 128], strides = [1, 1]} : vector<2x512xf32> to vector<2x128xf32>
    %55 = math.tanh %54 : vector<2x128xf32>
    %56 = vector.extract_strided_slice %41 {offsets = [0, 384], sizes = [2, 128], strides = [1, 1]} : vector<2x512xf32> to vector<2x128xf32>
    %57 = arith.negf %56 : vector<2x128xf32>
    %58 = math.exp %57 : vector<2x128xf32>
    %cst_20 = arith.constant 1.000000e+00 : f32
    %59 = vector.broadcast %cst_20 : f32 to vector<2x128xf32>
    %60 = arith.addf %59, %58 : vector<2x128xf32>
    %61 = arith.divf %59, %60 : vector<2x128xf32>
    %62 = arith.mulf %53, %34 : vector<2x128xf32>
    %63 = arith.mulf %47, %55 : vector<2x128xf32>
    %64 = arith.addf %62, %63 : vector<2x128xf32>
    %65 = math.tanh %64 : vector<2x128xf32>
    %66 = arith.mulf %61, %65 : vector<2x128xf32>
    %c2 = arith.constant 2 : index
    %c0_21 = arith.constant 0 : index
    %67 = vector.load %arg10[%c2, %c0_21] : memref<16x128xf32, #tpu.memory_space<vmem>>, vector<2x128xf32>
    tpu.vector_store %arg10[%c2, %c0_21], %66 {strides = array<i32>} : memref<16x128xf32, #tpu.memory_space<vmem>>, vector<2x128xf32>,
    %68 = vector.extract_strided_slice %5 {offsets = [4, 0], sizes = [2, 512], strides = [1, 1]} : vector<16x512xf32> to vector<2x512xf32>
    %c0_22 = arith.constant 0 : index
    %c0_23 = arith.constant 0 : index
    %69 = vector.load %arg2[%c0_22, %c0_23] : memref<128x512xf32, #tpu.memory_space<vmem>>, vector<128x512xf32>
    %cst_24 = arith.constant dense<0.000000e+00> : vector<2x512xf32>
    %70 = tpu.matmul %66, %69, %cst_24 {dimension_numbers = #tpu.dot_dimension_numbers<[1], [0], [0], [1], [0, 0, 1, 1], [], []>} : vector<2x128xf32>, vector<128x512xf32>, vector<2x512xf32> -> vector<2x512xf32>
    %71 = arith.addf %68, %70 : vector<2x512xf32>
    %72 = vector.extract_strided_slice %71 {offsets = [0, 0], sizes = [2, 128], strides = [1, 1]} : vector<2x512xf32> to vector<2x128xf32>
    %73 = arith.negf %72 : vector<2x128xf32>
    %74 = math.exp %73 : vector<2x128xf32>
    %cst_25 = arith.constant 1.000000e+00 : f32
    %75 = vector.broadcast %cst_25 : f32 to vector<2x128xf32>
    %76 = arith.addf %75, %74 : vector<2x128xf32>
    %77 = arith.divf %75, %76 : vector<2x128xf32>
    %78 = vector.extract_strided_slice %71 {offsets = [0, 128], sizes = [2, 128], strides = [1, 1]} : vector<2x512xf32> to vector<2x128xf32>
    %79 = arith.negf %78 : vector<2x128xf32>
    %80 = math.exp %79 : vector<2x128xf32>
    %cst_26 = arith.constant 1.000000e+00 : f32
    %81 = vector.broadcast %cst_26 : f32 to vector<2x128xf32>
    %82 = arith.addf %81, %80 : vector<2x128xf32>
    %83 = arith.divf %81, %82 : vector<2x128xf32>
    %84 = vector.extract_strided_slice %71 {offsets = [0, 256], sizes = [2, 128], strides = [1, 1]} : vector<2x512xf32> to vector<2x128xf32>
    %85 = math.tanh %84 : vector<2x128xf32>
    %86 = vector.extract_strided_slice %71 {offsets = [0, 384], sizes = [2, 128], strides = [1, 1]} : vector<2x512xf32> to vector<2x128xf32>
    %87 = arith.negf %86 : vector<2x128xf32>
    %88 = math.exp %87 : vector<2x128xf32>
    %cst_27 = arith.constant 1.000000e+00 : f32
    %89 = vector.broadcast %cst_27 : f32 to vector<2x128xf32>
    %90 = arith.addf %89, %88 : vector<2x128xf32>
    %91 = arith.divf %89, %90 : vector<2x128xf32>
    %92 = arith.mulf %83, %64 : vector<2x128xf32>
    %93 = arith.mulf %77, %85 : vector<2x128xf32>
    %94 = arith.addf %92, %93 : vector<2x128xf32>
    %95 = math.tanh %94 : vector<2x128xf32>
    %96 = arith.mulf %91, %95 : vector<2x128xf32>
    %c4 = arith.constant 4 : index
    %c0_28 = arith.constant 0 : index
    %97 = vector.load %arg10[%c4, %c0_28] : memref<16x128xf32, #tpu.memory_space<vmem>>, vector<2x128xf32>
    tpu.vector_store %arg10[%c4, %c0_28], %96 {strides = array<i32>} : memref<16x128xf32, #tpu.memory_space<vmem>>, vector<2x128xf32>,
    %98 = vector.extract_strided_slice %5 {offsets = [6, 0], sizes = [2, 512], strides = [1, 1]} : vector<16x512xf32> to vector<2x512xf32>
    %c0_29 = arith.constant 0 : index
    %c0_30 = arith.constant 0 : index
    %99 = vector.load %arg2[%c0_29, %c0_30] : memref<128x512xf32, #tpu.memory_space<vmem>>, vector<128x512xf32>
    %cst_31 = arith.constant dense<0.000000e+00> : vector<2x512xf32>
    %100 = tpu.matmul %96, %99, %cst_31 {dimension_numbers = #tpu.dot_dimension_numbers<[1], [0], [0], [1], [0, 0, 1, 1], [], []>} : vector<2x128xf32>, vector<128x512xf32>, vector<2x512xf32> -> vector<2x512xf32>
    %101 = arith.addf %98, %100 : vector<2x512xf32>
    %102 = vector.extract_strided_slice %101 {offsets = [0, 0], sizes = [2, 128], strides = [1, 1]} : vector<2x512xf32> to vector<2x128xf32>
    %103 = arith.negf %102 : vector<2x128xf32>
    %104 = math.exp %103 : vector<2x128xf32>
    %cst_32 = arith.constant 1.000000e+00 : f32
    %105 = vector.broadcast %cst_32 : f32 to vector<2x128xf32>
    %106 = arith.addf %105, %104 : vector<2x128xf32>
    %107 = arith.divf %105, %106 : vector<2x128xf32>
    %108 = vector.extract_strided_slice %101 {offsets = [0, 128], sizes = [2, 128], strides = [1, 1]} : vector<2x512xf32> to vector<2x128xf32>
    %109 = arith.negf %108 : vector<2x128xf32>
    %110 = math.exp %109 : vector<2x128xf32>
    %cst_33 = arith.constant 1.000000e+00 : f32
    %111 = vector.broadcast %cst_33 : f32 to vector<2x128xf32>
    %112 = arith.addf %111, %110 : vector<2x128xf32>
    %113 = arith.divf %111, %112 : vector<2x128xf32>
    %114 = vector.extract_strided_slice %101 {offsets = [0, 256], sizes = [2, 128], strides = [1, 1]} : vector<2x512xf32> to vector<2x128xf32>
    %115 = math.tanh %114 : vector<2x128xf32>
    %116 = vector.extract_strided_slice %101 {offsets = [0, 384], sizes = [2, 128], strides = [1, 1]} : vector<2x512xf32> to vector<2x128xf32>
    %117 = arith.negf %116 : vector<2x128xf32>
    %118 = math.exp %117 : vector<2x128xf32>
    %cst_34 = arith.constant 1.000000e+00 : f32
    %119 = vector.broadcast %cst_34 : f32 to vector<2x128xf32>
    %120 = arith.addf %119, %118 : vector<2x128xf32>
    %121 = arith.divf %119, %120 : vector<2x128xf32>
    %122 = arith.mulf %113, %94 : vector<2x128xf32>
    %123 = arith.mulf %107, %115 : vector<2x128xf32>
    %124 = arith.addf %122, %123 : vector<2x128xf32>
    %125 = math.tanh %124 : vector<2x128xf32>
    %126 = arith.mulf %121, %125 : vector<2x128xf32>
    %c6 = arith.constant 6 : index
    %c0_35 = arith.constant 0 : index
    %127 = vector.load %arg10[%c6, %c0_35] : memref<16x128xf32, #tpu.memory_space<vmem>>, vector<2x128xf32>
    tpu.vector_store %arg10[%c6, %c0_35], %126 {strides = array<i32>} : memref<16x128xf32, #tpu.memory_space<vmem>>, vector<2x128xf32>,
    %128 = vector.extract_strided_slice %5 {offsets = [8, 0], sizes = [2, 512], strides = [1, 1]} : vector<16x512xf32> to vector<2x512xf32>
    %c0_36 = arith.constant 0 : index
    %c0_37 = arith.constant 0 : index
    %129 = vector.load %arg2[%c0_36, %c0_37] : memref<128x512xf32, #tpu.memory_space<vmem>>, vector<128x512xf32>
    %cst_38 = arith.constant dense<0.000000e+00> : vector<2x512xf32>
    %130 = tpu.matmul %126, %129, %cst_38 {dimension_numbers = #tpu.dot_dimension_numbers<[1], [0], [0], [1], [0, 0, 1, 1], [], []>} : vector<2x128xf32>, vector<128x512xf32>, vector<2x512xf32> -> vector<2x512xf32>
    %131 = arith.addf %128, %130 : vector<2x512xf32>
    %132 = vector.extract_strided_slice %131 {offsets = [0, 0], sizes = [2, 128], strides = [1, 1]} : vector<2x512xf32> to vector<2x128xf32>
    %133 = arith.negf %132 : vector<2x128xf32>
    %134 = math.exp %133 : vector<2x128xf32>
    %cst_39 = arith.constant 1.000000e+00 : f32
    %135 = vector.broadcast %cst_39 : f32 to vector<2x128xf32>
    %136 = arith.addf %135, %134 : vector<2x128xf32>
    %137 = arith.divf %135, %136 : vector<2x128xf32>
    %138 = vector.extract_strided_slice %131 {offsets = [0, 128], sizes = [2, 128], strides = [1, 1]} : vector<2x512xf32> to vector<2x128xf32>
    %139 = arith.negf %138 : vector<2x128xf32>
    %140 = math.exp %139 : vector<2x128xf32>
    %cst_40 = arith.constant 1.000000e+00 : f32
    %141 = vector.broadcast %cst_40 : f32 to vector<2x128xf32>
    %142 = arith.addf %141, %140 : vector<2x128xf32>
    %143 = arith.divf %141, %142 : vector<2x128xf32>
    %144 = vector.extract_strided_slice %131 {offsets = [0, 256], sizes = [2, 128], strides = [1, 1]} : vector<2x512xf32> to vector<2x128xf32>
    %145 = math.tanh %144 : vector<2x128xf32>
    %146 = vector.extract_strided_slice %131 {offsets = [0, 384], sizes = [2, 128], strides = [1, 1]} : vector<2x512xf32> to vector<2x128xf32>
    %147 = arith.negf %146 : vector<2x128xf32>
    %148 = math.exp %147 : vector<2x128xf32>
    %cst_41 = arith.constant 1.000000e+00 : f32
    %149 = vector.broadcast %cst_41 : f32 to vector<2x128xf32>
    %150 = arith.addf %149, %148 : vector<2x128xf32>
    %151 = arith.divf %149, %150 : vector<2x128xf32>
    %152 = arith.mulf %143, %124 : vector<2x128xf32>
    %153 = arith.mulf %137, %145 : vector<2x128xf32>
    %154 = arith.addf %152, %153 : vector<2x128xf32>
    %155 = math.tanh %154 : vector<2x128xf32>
    %156 = arith.mulf %151, %155 : vector<2x128xf32>
    %c8 = arith.constant 8 : index
    %c0_42 = arith.constant 0 : index
    %157 = vector.load %arg10[%c8, %c0_42] : memref<16x128xf32, #tpu.memory_space<vmem>>, vector<2x128xf32>
    tpu.vector_store %arg10[%c8, %c0_42], %156 {strides = array<i32>} : memref<16x128xf32, #tpu.memory_space<vmem>>, vector<2x128xf32>,
    %158 = vector.extract_strided_slice %5 {offsets = [10, 0], sizes = [2, 512], strides = [1, 1]} : vector<16x512xf32> to vector<2x512xf32>
    %c0_43 = arith.constant 0 : index
    %c0_44 = arith.constant 0 : index
    %159 = vector.load %arg2[%c0_43, %c0_44] : memref<128x512xf32, #tpu.memory_space<vmem>>, vector<128x512xf32>
    %cst_45 = arith.constant dense<0.000000e+00> : vector<2x512xf32>
    %160 = tpu.matmul %156, %159, %cst_45 {dimension_numbers = #tpu.dot_dimension_numbers<[1], [0], [0], [1], [0, 0, 1, 1], [], []>} : vector<2x128xf32>, vector<128x512xf32>, vector<2x512xf32> -> vector<2x512xf32>
    %161 = arith.addf %158, %160 : vector<2x512xf32>
    %162 = vector.extract_strided_slice %161 {offsets = [0, 0], sizes = [2, 128], strides = [1, 1]} : vector<2x512xf32> to vector<2x128xf32>
    %163 = arith.negf %162 : vector<2x128xf32>
    %164 = math.exp %163 : vector<2x128xf32>
    %cst_46 = arith.constant 1.000000e+00 : f32
    %165 = vector.broadcast %cst_46 : f32 to vector<2x128xf32>
    %166 = arith.addf %165, %164 : vector<2x128xf32>
    %167 = arith.divf %165, %166 : vector<2x128xf32>
    %168 = vector.extract_strided_slice %161 {offsets = [0, 128], sizes = [2, 128], strides = [1, 1]} : vector<2x512xf32> to vector<2x128xf32>
    %169 = arith.negf %168 : vector<2x128xf32>
    %170 = math.exp %169 : vector<2x128xf32>
    %cst_47 = arith.constant 1.000000e+00 : f32
    %171 = vector.broadcast %cst_47 : f32 to vector<2x128xf32>
    %172 = arith.addf %171, %170 : vector<2x128xf32>
    %173 = arith.divf %171, %172 : vector<2x128xf32>
    %174 = vector.extract_strided_slice %161 {offsets = [0, 256], sizes = [2, 128], strides = [1, 1]} : vector<2x512xf32> to vector<2x128xf32>
    %175 = math.tanh %174 : vector<2x128xf32>
    %176 = vector.extract_strided_slice %161 {offsets = [0, 384], sizes = [2, 128], strides = [1, 1]} : vector<2x512xf32> to vector<2x128xf32>
    %177 = arith.negf %176 : vector<2x128xf32>
    %178 = math.exp %177 : vector<2x128xf32>
    %cst_48 = arith.constant 1.000000e+00 : f32
    %179 = vector.broadcast %cst_48 : f32 to vector<2x128xf32>
    %180 = arith.addf %179, %178 : vector<2x128xf32>
    %181 = arith.divf %179, %180 : vector<2x128xf32>
    %182 = arith.mulf %173, %154 : vector<2x128xf32>
    %183 = arith.mulf %167, %175 : vector<2x128xf32>
    %184 = arith.addf %182, %183 : vector<2x128xf32>
    %185 = math.tanh %184 : vector<2x128xf32>
    %186 = arith.mulf %181, %185 : vector<2x128xf32>
    %c10 = arith.constant 10 : index
    %c0_49 = arith.constant 0 : index
    %187 = vector.load %arg10[%c10, %c0_49] : memref<16x128xf32, #tpu.memory_space<vmem>>, vector<2x128xf32>
    tpu.vector_store %arg10[%c10, %c0_49], %186 {strides = array<i32>} : memref<16x128xf32, #tpu.memory_space<vmem>>, vector<2x128xf32>,
    %188 = vector.extract_strided_slice %5 {offsets = [12, 0], sizes = [2, 512], strides = [1, 1]} : vector<16x512xf32> to vector<2x512xf32>
    %c0_50 = arith.constant 0 : index
    %c0_51 = arith.constant 0 : index
    %189 = vector.load %arg2[%c0_50, %c0_51] : memref<128x512xf32, #tpu.memory_space<vmem>>, vector<128x512xf32>
    %cst_52 = arith.constant dense<0.000000e+00> : vector<2x512xf32>
    %190 = tpu.matmul %186, %189, %cst_52 {dimension_numbers = #tpu.dot_dimension_numbers<[1], [0], [0], [1], [0, 0, 1, 1], [], []>} : vector<2x128xf32>, vector<128x512xf32>, vector<2x512xf32> -> vector<2x512xf32>
    %191 = arith.addf %188, %190 : vector<2x512xf32>
    %192 = vector.extract_strided_slice %191 {offsets = [0, 0], sizes = [2, 128], strides = [1, 1]} : vector<2x512xf32> to vector<2x128xf32>
    %193 = arith.negf %192 : vector<2x128xf32>
    %194 = math.exp %193 : vector<2x128xf32>
    %cst_53 = arith.constant 1.000000e+00 : f32
    %195 = vector.broadcast %cst_53 : f32 to vector<2x128xf32>
    %196 = arith.addf %195, %194 : vector<2x128xf32>
    %197 = arith.divf %195, %196 : vector<2x128xf32>
    %198 = vector.extract_strided_slice %191 {offsets = [0, 128], sizes = [2, 128], strides = [1, 1]} : vector<2x512xf32> to vector<2x128xf32>
    %199 = arith.negf %198 : vector<2x128xf32>
    %200 = math.exp %199 : vector<2x128xf32>
    %cst_54 = arith.constant 1.000000e+00 : f32
    %201 = vector.broadcast %cst_54 : f32 to vector<2x128xf32>
    %202 = arith.addf %201, %200 : vector<2x128xf32>
    %203 = arith.divf %201, %202 : vector<2x128xf32>
    %204 = vector.extract_strided_slice %191 {offsets = [0, 256], sizes = [2, 128], strides = [1, 1]} : vector<2x512xf32> to vector<2x128xf32>
    %205 = math.tanh %204 : vector<2x128xf32>
    %206 = vector.extract_strided_slice %191 {offsets = [0, 384], sizes = [2, 128], strides = [1, 1]} : vector<2x512xf32> to vector<2x128xf32>
    %207 = arith.negf %206 : vector<2x128xf32>
    %208 = math.exp %207 : vector<2x128xf32>
    %cst_55 = arith.constant 1.000000e+00 : f32
    %209 = vector.broadcast %cst_55 : f32 to vector<2x128xf32>
    %210 = arith.addf %209, %208 : vector<2x128xf32>
    %211 = arith.divf %209, %210 : vector<2x128xf32>
    %212 = arith.mulf %203, %184 : vector<2x128xf32>
    %213 = arith.mulf %197, %205 : vector<2x128xf32>
    %214 = arith.addf %212, %213 : vector<2x128xf32>
    %215 = math.tanh %214 : vector<2x128xf32>
    %216 = arith.mulf %211, %215 : vector<2x128xf32>
    %c12 = arith.constant 12 : index
    %c0_56 = arith.constant 0 : index
    %217 = vector.load %arg10[%c12, %c0_56] : memref<16x128xf32, #tpu.memory_space<vmem>>, vector<2x128xf32>
    tpu.vector_store %arg10[%c12, %c0_56], %216 {strides = array<i32>} : memref<16x128xf32, #tpu.memory_space<vmem>>, vector<2x128xf32>,
    %218 = vector.extract_strided_slice %5 {offsets = [14, 0], sizes = [2, 512], strides = [1, 1]} : vector<16x512xf32> to vector<2x512xf32>
    %c0_57 = arith.constant 0 : index
    %c0_58 = arith.constant 0 : index
    %219 = vector.load %arg2[%c0_57, %c0_58] : memref<128x512xf32, #tpu.memory_space<vmem>>, vector<128x512xf32>
    %cst_59 = arith.constant dense<0.000000e+00> : vector<2x512xf32>
    %220 = tpu.matmul %216, %219, %cst_59 {dimension_numbers = #tpu.dot_dimension_numbers<[1], [0], [0], [1], [0, 0, 1, 1], [], []>} : vector<2x128xf32>, vector<128x512xf32>, vector<2x512xf32> -> vector<2x512xf32>
    %221 = arith.addf %218, %220 : vector<2x512xf32>
    %222 = vector.extract_strided_slice %221 {offsets = [0, 0], sizes = [2, 128], strides = [1, 1]} : vector<2x512xf32> to vector<2x128xf32>
    %223 = arith.negf %222 : vector<2x128xf32>
    %224 = math.exp %223 : vector<2x128xf32>
    %cst_60 = arith.constant 1.000000e+00 : f32
    %225 = vector.broadcast %cst_60 : f32 to vector<2x128xf32>
    %226 = arith.addf %225, %224 : vector<2x128xf32>
    %227 = arith.divf %225, %226 : vector<2x128xf32>
    %228 = vector.extract_strided_slice %221 {offsets = [0, 128], sizes = [2, 128], strides = [1, 1]} : vector<2x512xf32> to vector<2x128xf32>
    %229 = arith.negf %228 : vector<2x128xf32>
    %230 = math.exp %229 : vector<2x128xf32>
    %cst_61 = arith.constant 1.000000e+00 : f32
    %231 = vector.broadcast %cst_61 : f32 to vector<2x128xf32>
    %232 = arith.addf %231, %230 : vector<2x128xf32>
    %233 = arith.divf %231, %232 : vector<2x128xf32>
    %234 = vector.extract_strided_slice %221 {offsets = [0, 256], sizes = [2, 128], strides = [1, 1]} : vector<2x512xf32> to vector<2x128xf32>
    %235 = math.tanh %234 : vector<2x128xf32>
    %236 = vector.extract_strided_slice %221 {offsets = [0, 384], sizes = [2, 128], strides = [1, 1]} : vector<2x512xf32> to vector<2x128xf32>
    %237 = arith.negf %236 : vector<2x128xf32>
    %238 = math.exp %237 : vector<2x128xf32>
    %cst_62 = arith.constant 1.000000e+00 : f32
    %239 = vector.broadcast %cst_62 : f32 to vector<2x128xf32>
    %240 = arith.addf %239, %238 : vector<2x128xf32>
    %241 = arith.divf %239, %240 : vector<2x128xf32>
    %242 = arith.mulf %233, %214 : vector<2x128xf32>
    %243 = arith.mulf %227, %235 : vector<2x128xf32>
    %244 = arith.addf %242, %243 : vector<2x128xf32>
    %245 = math.tanh %244 : vector<2x128xf32>
    %246 = arith.mulf %241, %245 : vector<2x128xf32>
    %c14 = arith.constant 14 : index
    %c0_63 = arith.constant 0 : index
    %247 = vector.load %arg10[%c14, %c0_63] : memref<16x128xf32, #tpu.memory_space<vmem>>, vector<2x128xf32>
    tpu.vector_store %arg10[%c14, %c0_63], %246 {strides = array<i32>} : memref<16x128xf32, #tpu.memory_space<vmem>>, vector<2x128xf32>,
    %c0_64 = arith.constant 0 : index
    %c0_65 = arith.constant 0 : index
    %248 = vector.load %arg10[%c0_64, %c0_65] : memref<16x128xf32, #tpu.memory_space<vmem>>, vector<16x128xf32>
    %c0_66 = arith.constant 0 : index
    %c0_67 = arith.constant 0 : index
    %249 = vector.load %arg4[%c0_66, %c0_67] : memref<128x512xf32, #tpu.memory_space<vmem>>, vector<128x512xf32>
    %cst_68 = arith.constant dense<0.000000e+00> : vector<16x512xf32>
    %250 = tpu.matmul %248, %249, %cst_68 {dimension_numbers = #tpu.dot_dimension_numbers<[1], [0], [0], [1], [0, 0, 1, 1], [], []>} : vector<16x128xf32>, vector<128x512xf32>, vector<16x512xf32> -> vector<16x512xf32>
    %c0_69 = arith.constant 0 : index
    %c0_70 = arith.constant 0 : index
    %251 = vector.load %arg6[%c0_69, %c0_70] : memref<1x512xf32, #tpu.memory_space<vmem>>, vector<1x512xf32>
    %252 = vector.broadcast %251 : vector<1x512xf32> to vector<16x512xf32>
    %253 = arith.addf %250, %252 : vector<16x512xf32>
    %cst_71 = arith.constant 0.000000e+00 : f32
    %254 = vector.broadcast %cst_71 : f32 to vector<2x128xf32>
    %cst_72 = arith.constant 0.000000e+00 : f32
    %255 = vector.broadcast %cst_72 : f32 to vector<2x128xf32>
    %256 = vector.extract_strided_slice %253 {offsets = [0, 0], sizes = [2, 512], strides = [1, 1]} : vector<16x512xf32> to vector<2x512xf32>
    %c0_73 = arith.constant 0 : index
    %c0_74 = arith.constant 0 : index
    %257 = vector.load %arg5[%c0_73, %c0_74] : memref<128x512xf32, #tpu.memory_space<vmem>>, vector<128x512xf32>
    %cst_75 = arith.constant dense<0.000000e+00> : vector<2x512xf32>
    %258 = tpu.matmul %254, %257, %cst_75 {dimension_numbers = #tpu.dot_dimension_numbers<[1], [0], [0], [1], [0, 0, 1, 1], [], []>} : vector<2x128xf32>, vector<128x512xf32>, vector<2x512xf32> -> vector<2x512xf32>
    %259 = arith.addf %256, %258 : vector<2x512xf32>
    %260 = vector.extract_strided_slice %259 {offsets = [0, 0], sizes = [2, 128], strides = [1, 1]} : vector<2x512xf32> to vector<2x128xf32>
    %261 = arith.negf %260 : vector<2x128xf32>
    %262 = math.exp %261 : vector<2x128xf32>
    %cst_76 = arith.constant 1.000000e+00 : f32
    %263 = vector.broadcast %cst_76 : f32 to vector<2x128xf32>
    %264 = arith.addf %263, %262 : vector<2x128xf32>
    %265 = arith.divf %263, %264 : vector<2x128xf32>
    %266 = vector.extract_strided_slice %259 {offsets = [0, 128], sizes = [2, 128], strides = [1, 1]} : vector<2x512xf32> to vector<2x128xf32>
    %267 = arith.negf %266 : vector<2x128xf32>
    %268 = math.exp %267 : vector<2x128xf32>
    %cst_77 = arith.constant 1.000000e+00 : f32
    %269 = vector.broadcast %cst_77 : f32 to vector<2x128xf32>
    %270 = arith.addf %269, %268 : vector<2x128xf32>
    %271 = arith.divf %269, %270 : vector<2x128xf32>
    %272 = vector.extract_strided_slice %259 {offsets = [0, 256], sizes = [2, 128], strides = [1, 1]} : vector<2x512xf32> to vector<2x128xf32>
    %273 = math.tanh %272 : vector<2x128xf32>
    %274 = vector.extract_strided_slice %259 {offsets = [0, 384], sizes = [2, 128], strides = [1, 1]} : vector<2x512xf32> to vector<2x128xf32>
    %275 = arith.negf %274 : vector<2x128xf32>
    %276 = math.exp %275 : vector<2x128xf32>
    %cst_78 = arith.constant 1.000000e+00 : f32
    %277 = vector.broadcast %cst_78 : f32 to vector<2x128xf32>
    %278 = arith.addf %277, %276 : vector<2x128xf32>
    %279 = arith.divf %277, %278 : vector<2x128xf32>
    %280 = arith.mulf %271, %255 : vector<2x128xf32>
    %281 = arith.mulf %265, %273 : vector<2x128xf32>
    %282 = arith.addf %280, %281 : vector<2x128xf32>
    %283 = math.tanh %282 : vector<2x128xf32>
    %284 = arith.mulf %279, %283 : vector<2x128xf32>
    %285 = vector.extract_strided_slice %253 {offsets = [2, 0], sizes = [2, 512], strides = [1, 1]} : vector<16x512xf32> to vector<2x512xf32>
    %c0_79 = arith.constant 0 : index
    %c0_80 = arith.constant 0 : index
    %286 = vector.load %arg5[%c0_79, %c0_80] : memref<128x512xf32, #tpu.memory_space<vmem>>, vector<128x512xf32>
    %cst_81 = arith.constant dense<0.000000e+00> : vector<2x512xf32>
    %287 = tpu.matmul %284, %286, %cst_81 {dimension_numbers = #tpu.dot_dimension_numbers<[1], [0], [0], [1], [0, 0, 1, 1], [], []>} : vector<2x128xf32>, vector<128x512xf32>, vector<2x512xf32> -> vector<2x512xf32>
    %288 = arith.addf %285, %287 : vector<2x512xf32>
    %289 = vector.extract_strided_slice %288 {offsets = [0, 0], sizes = [2, 128], strides = [1, 1]} : vector<2x512xf32> to vector<2x128xf32>
    %290 = arith.negf %289 : vector<2x128xf32>
    %291 = math.exp %290 : vector<2x128xf32>
    %cst_82 = arith.constant 1.000000e+00 : f32
    %292 = vector.broadcast %cst_82 : f32 to vector<2x128xf32>
    %293 = arith.addf %292, %291 : vector<2x128xf32>
    %294 = arith.divf %292, %293 : vector<2x128xf32>
    %295 = vector.extract_strided_slice %288 {offsets = [0, 128], sizes = [2, 128], strides = [1, 1]} : vector<2x512xf32> to vector<2x128xf32>
    %296 = arith.negf %295 : vector<2x128xf32>
    %297 = math.exp %296 : vector<2x128xf32>
    %cst_83 = arith.constant 1.000000e+00 : f32
    %298 = vector.broadcast %cst_83 : f32 to vector<2x128xf32>
    %299 = arith.addf %298, %297 : vector<2x128xf32>
    %300 = arith.divf %298, %299 : vector<2x128xf32>
    %301 = vector.extract_strided_slice %288 {offsets = [0, 256], sizes = [2, 128], strides = [1, 1]} : vector<2x512xf32> to vector<2x128xf32>
    %302 = math.tanh %301 : vector<2x128xf32>
    %303 = vector.extract_strided_slice %288 {offsets = [0, 384], sizes = [2, 128], strides = [1, 1]} : vector<2x512xf32> to vector<2x128xf32>
    %304 = arith.negf %303 : vector<2x128xf32>
    %305 = math.exp %304 : vector<2x128xf32>
    %cst_84 = arith.constant 1.000000e+00 : f32
    %306 = vector.broadcast %cst_84 : f32 to vector<2x128xf32>
    %307 = arith.addf %306, %305 : vector<2x128xf32>
    %308 = arith.divf %306, %307 : vector<2x128xf32>
    %309 = arith.mulf %300, %282 : vector<2x128xf32>
    %310 = arith.mulf %294, %302 : vector<2x128xf32>
    %311 = arith.addf %309, %310 : vector<2x128xf32>
    %312 = math.tanh %311 : vector<2x128xf32>
    %313 = arith.mulf %308, %312 : vector<2x128xf32>
    %314 = vector.extract_strided_slice %253 {offsets = [4, 0], sizes = [2, 512], strides = [1, 1]} : vector<16x512xf32> to vector<2x512xf32>
    %c0_85 = arith.constant 0 : index
    %c0_86 = arith.constant 0 : index
    %315 = vector.load %arg5[%c0_85, %c0_86] : memref<128x512xf32, #tpu.memory_space<vmem>>, vector<128x512xf32>
    %cst_87 = arith.constant dense<0.000000e+00> : vector<2x512xf32>
    %316 = tpu.matmul %313, %315, %cst_87 {dimension_numbers = #tpu.dot_dimension_numbers<[1], [0], [0], [1], [0, 0, 1, 1], [], []>} : vector<2x128xf32>, vector<128x512xf32>, vector<2x512xf32> -> vector<2x512xf32>
    %317 = arith.addf %314, %316 : vector<2x512xf32>
    %318 = vector.extract_strided_slice %317 {offsets = [0, 0], sizes = [2, 128], strides = [1, 1]} : vector<2x512xf32> to vector<2x128xf32>
    %319 = arith.negf %318 : vector<2x128xf32>
    %320 = math.exp %319 : vector<2x128xf32>
    %cst_88 = arith.constant 1.000000e+00 : f32
    %321 = vector.broadcast %cst_88 : f32 to vector<2x128xf32>
    %322 = arith.addf %321, %320 : vector<2x128xf32>
    %323 = arith.divf %321, %322 : vector<2x128xf32>
    %324 = vector.extract_strided_slice %317 {offsets = [0, 128], sizes = [2, 128], strides = [1, 1]} : vector<2x512xf32> to vector<2x128xf32>
    %325 = arith.negf %324 : vector<2x128xf32>
    %326 = math.exp %325 : vector<2x128xf32>
    %cst_89 = arith.constant 1.000000e+00 : f32
    %327 = vector.broadcast %cst_89 : f32 to vector<2x128xf32>
    %328 = arith.addf %327, %326 : vector<2x128xf32>
    %329 = arith.divf %327, %328 : vector<2x128xf32>
    %330 = vector.extract_strided_slice %317 {offsets = [0, 256], sizes = [2, 128], strides = [1, 1]} : vector<2x512xf32> to vector<2x128xf32>
    %331 = math.tanh %330 : vector<2x128xf32>
    %332 = vector.extract_strided_slice %317 {offsets = [0, 384], sizes = [2, 128], strides = [1, 1]} : vector<2x512xf32> to vector<2x128xf32>
    %333 = arith.negf %332 : vector<2x128xf32>
    %334 = math.exp %333 : vector<2x128xf32>
    %cst_90 = arith.constant 1.000000e+00 : f32
    %335 = vector.broadcast %cst_90 : f32 to vector<2x128xf32>
    %336 = arith.addf %335, %334 : vector<2x128xf32>
    %337 = arith.divf %335, %336 : vector<2x128xf32>
    %338 = arith.mulf %329, %311 : vector<2x128xf32>
    %339 = arith.mulf %323, %331 : vector<2x128xf32>
    %340 = arith.addf %338, %339 : vector<2x128xf32>
    %341 = math.tanh %340 : vector<2x128xf32>
    %342 = arith.mulf %337, %341 : vector<2x128xf32>
    %343 = vector.extract_strided_slice %253 {offsets = [6, 0], sizes = [2, 512], strides = [1, 1]} : vector<16x512xf32> to vector<2x512xf32>
    %c0_91 = arith.constant 0 : index
    %c0_92 = arith.constant 0 : index
    %344 = vector.load %arg5[%c0_91, %c0_92] : memref<128x512xf32, #tpu.memory_space<vmem>>, vector<128x512xf32>
    %cst_93 = arith.constant dense<0.000000e+00> : vector<2x512xf32>
    %345 = tpu.matmul %342, %344, %cst_93 {dimension_numbers = #tpu.dot_dimension_numbers<[1], [0], [0], [1], [0, 0, 1, 1], [], []>} : vector<2x128xf32>, vector<128x512xf32>, vector<2x512xf32> -> vector<2x512xf32>
    %346 = arith.addf %343, %345 : vector<2x512xf32>
    %347 = vector.extract_strided_slice %346 {offsets = [0, 0], sizes = [2, 128], strides = [1, 1]} : vector<2x512xf32> to vector<2x128xf32>
    %348 = arith.negf %347 : vector<2x128xf32>
    %349 = math.exp %348 : vector<2x128xf32>
    %cst_94 = arith.constant 1.000000e+00 : f32
    %350 = vector.broadcast %cst_94 : f32 to vector<2x128xf32>
    %351 = arith.addf %350, %349 : vector<2x128xf32>
    %352 = arith.divf %350, %351 : vector<2x128xf32>
    %353 = vector.extract_strided_slice %346 {offsets = [0, 128], sizes = [2, 128], strides = [1, 1]} : vector<2x512xf32> to vector<2x128xf32>
    %354 = arith.negf %353 : vector<2x128xf32>
    %355 = math.exp %354 : vector<2x128xf32>
    %cst_95 = arith.constant 1.000000e+00 : f32
    %356 = vector.broadcast %cst_95 : f32 to vector<2x128xf32>
    %357 = arith.addf %356, %355 : vector<2x128xf32>
    %358 = arith.divf %356, %357 : vector<2x128xf32>
    %359 = vector.extract_strided_slice %346 {offsets = [0, 256], sizes = [2, 128], strides = [1, 1]} : vector<2x512xf32> to vector<2x128xf32>
    %360 = math.tanh %359 : vector<2x128xf32>
    %361 = vector.extract_strided_slice %346 {offsets = [0, 384], sizes = [2, 128], strides = [1, 1]} : vector<2x512xf32> to vector<2x128xf32>
    %362 = arith.negf %361 : vector<2x128xf32>
    %363 = math.exp %362 : vector<2x128xf32>
    %cst_96 = arith.constant 1.000000e+00 : f32
    %364 = vector.broadcast %cst_96 : f32 to vector<2x128xf32>
    %365 = arith.addf %364, %363 : vector<2x128xf32>
    %366 = arith.divf %364, %365 : vector<2x128xf32>
    %367 = arith.mulf %358, %340 : vector<2x128xf32>
    %368 = arith.mulf %352, %360 : vector<2x128xf32>
    %369 = arith.addf %367, %368 : vector<2x128xf32>
    %370 = math.tanh %369 : vector<2x128xf32>
    %371 = arith.mulf %366, %370 : vector<2x128xf32>
    %372 = vector.extract_strided_slice %253 {offsets = [8, 0], sizes = [2, 512], strides = [1, 1]} : vector<16x512xf32> to vector<2x512xf32>
    %c0_97 = arith.constant 0 : index
    %c0_98 = arith.constant 0 : index
    %373 = vector.load %arg5[%c0_97, %c0_98] : memref<128x512xf32, #tpu.memory_space<vmem>>, vector<128x512xf32>
    %cst_99 = arith.constant dense<0.000000e+00> : vector<2x512xf32>
    %374 = tpu.matmul %371, %373, %cst_99 {dimension_numbers = #tpu.dot_dimension_numbers<[1], [0], [0], [1], [0, 0, 1, 1], [], []>} : vector<2x128xf32>, vector<128x512xf32>, vector<2x512xf32> -> vector<2x512xf32>
    %375 = arith.addf %372, %374 : vector<2x512xf32>
    %376 = vector.extract_strided_slice %375 {offsets = [0, 0], sizes = [2, 128], strides = [1, 1]} : vector<2x512xf32> to vector<2x128xf32>
    %377 = arith.negf %376 : vector<2x128xf32>
    %378 = math.exp %377 : vector<2x128xf32>
    %cst_100 = arith.constant 1.000000e+00 : f32
    %379 = vector.broadcast %cst_100 : f32 to vector<2x128xf32>
    %380 = arith.addf %379, %378 : vector<2x128xf32>
    %381 = arith.divf %379, %380 : vector<2x128xf32>
    %382 = vector.extract_strided_slice %375 {offsets = [0, 128], sizes = [2, 128], strides = [1, 1]} : vector<2x512xf32> to vector<2x128xf32>
    %383 = arith.negf %382 : vector<2x128xf32>
    %384 = math.exp %383 : vector<2x128xf32>
    %cst_101 = arith.constant 1.000000e+00 : f32
    %385 = vector.broadcast %cst_101 : f32 to vector<2x128xf32>
    %386 = arith.addf %385, %384 : vector<2x128xf32>
    %387 = arith.divf %385, %386 : vector<2x128xf32>
    %388 = vector.extract_strided_slice %375 {offsets = [0, 256], sizes = [2, 128], strides = [1, 1]} : vector<2x512xf32> to vector<2x128xf32>
    %389 = math.tanh %388 : vector<2x128xf32>
    %390 = vector.extract_strided_slice %375 {offsets = [0, 384], sizes = [2, 128], strides = [1, 1]} : vector<2x512xf32> to vector<2x128xf32>
    %391 = arith.negf %390 : vector<2x128xf32>
    %392 = math.exp %391 : vector<2x128xf32>
    %cst_102 = arith.constant 1.000000e+00 : f32
    %393 = vector.broadcast %cst_102 : f32 to vector<2x128xf32>
    %394 = arith.addf %393, %392 : vector<2x128xf32>
    %395 = arith.divf %393, %394 : vector<2x128xf32>
    %396 = arith.mulf %387, %369 : vector<2x128xf32>
    %397 = arith.mulf %381, %389 : vector<2x128xf32>
    %398 = arith.addf %396, %397 : vector<2x128xf32>
    %399 = math.tanh %398 : vector<2x128xf32>
    %400 = arith.mulf %395, %399 : vector<2x128xf32>
    %401 = vector.extract_strided_slice %253 {offsets = [10, 0], sizes = [2, 512], strides = [1, 1]} : vector<16x512xf32> to vector<2x512xf32>
    %c0_103 = arith.constant 0 : index
    %c0_104 = arith.constant 0 : index
    %402 = vector.load %arg5[%c0_103, %c0_104] : memref<128x512xf32, #tpu.memory_space<vmem>>, vector<128x512xf32>
    %cst_105 = arith.constant dense<0.000000e+00> : vector<2x512xf32>
    %403 = tpu.matmul %400, %402, %cst_105 {dimension_numbers = #tpu.dot_dimension_numbers<[1], [0], [0], [1], [0, 0, 1, 1], [], []>} : vector<2x128xf32>, vector<128x512xf32>, vector<2x512xf32> -> vector<2x512xf32>
    %404 = arith.addf %401, %403 : vector<2x512xf32>
    %405 = vector.extract_strided_slice %404 {offsets = [0, 0], sizes = [2, 128], strides = [1, 1]} : vector<2x512xf32> to vector<2x128xf32>
    %406 = arith.negf %405 : vector<2x128xf32>
    %407 = math.exp %406 : vector<2x128xf32>
    %cst_106 = arith.constant 1.000000e+00 : f32
    %408 = vector.broadcast %cst_106 : f32 to vector<2x128xf32>
    %409 = arith.addf %408, %407 : vector<2x128xf32>
    %410 = arith.divf %408, %409 : vector<2x128xf32>
    %411 = vector.extract_strided_slice %404 {offsets = [0, 128], sizes = [2, 128], strides = [1, 1]} : vector<2x512xf32> to vector<2x128xf32>
    %412 = arith.negf %411 : vector<2x128xf32>
    %413 = math.exp %412 : vector<2x128xf32>
    %cst_107 = arith.constant 1.000000e+00 : f32
    %414 = vector.broadcast %cst_107 : f32 to vector<2x128xf32>
    %415 = arith.addf %414, %413 : vector<2x128xf32>
    %416 = arith.divf %414, %415 : vector<2x128xf32>
    %417 = vector.extract_strided_slice %404 {offsets = [0, 256], sizes = [2, 128], strides = [1, 1]} : vector<2x512xf32> to vector<2x128xf32>
    %418 = math.tanh %417 : vector<2x128xf32>
    %419 = vector.extract_strided_slice %404 {offsets = [0, 384], sizes = [2, 128], strides = [1, 1]} : vector<2x512xf32> to vector<2x128xf32>
    %420 = arith.negf %419 : vector<2x128xf32>
    %421 = math.exp %420 : vector<2x128xf32>
    %cst_108 = arith.constant 1.000000e+00 : f32
    %422 = vector.broadcast %cst_108 : f32 to vector<2x128xf32>
    %423 = arith.addf %422, %421 : vector<2x128xf32>
    %424 = arith.divf %422, %423 : vector<2x128xf32>
    %425 = arith.mulf %416, %398 : vector<2x128xf32>
    %426 = arith.mulf %410, %418 : vector<2x128xf32>
    %427 = arith.addf %425, %426 : vector<2x128xf32>
    %428 = math.tanh %427 : vector<2x128xf32>
    %429 = arith.mulf %424, %428 : vector<2x128xf32>
    %430 = vector.extract_strided_slice %253 {offsets = [12, 0], sizes = [2, 512], strides = [1, 1]} : vector<16x512xf32> to vector<2x512xf32>
    %c0_109 = arith.constant 0 : index
    %c0_110 = arith.constant 0 : index
    %431 = vector.load %arg5[%c0_109, %c0_110] : memref<128x512xf32, #tpu.memory_space<vmem>>, vector<128x512xf32>
    %cst_111 = arith.constant dense<0.000000e+00> : vector<2x512xf32>
    %432 = tpu.matmul %429, %431, %cst_111 {dimension_numbers = #tpu.dot_dimension_numbers<[1], [0], [0], [1], [0, 0, 1, 1], [], []>} : vector<2x128xf32>, vector<128x512xf32>, vector<2x512xf32> -> vector<2x512xf32>
    %433 = arith.addf %430, %432 : vector<2x512xf32>
    %434 = vector.extract_strided_slice %433 {offsets = [0, 0], sizes = [2, 128], strides = [1, 1]} : vector<2x512xf32> to vector<2x128xf32>
    %435 = arith.negf %434 : vector<2x128xf32>
    %436 = math.exp %435 : vector<2x128xf32>
    %cst_112 = arith.constant 1.000000e+00 : f32
    %437 = vector.broadcast %cst_112 : f32 to vector<2x128xf32>
    %438 = arith.addf %437, %436 : vector<2x128xf32>
    %439 = arith.divf %437, %438 : vector<2x128xf32>
    %440 = vector.extract_strided_slice %433 {offsets = [0, 128], sizes = [2, 128], strides = [1, 1]} : vector<2x512xf32> to vector<2x128xf32>
    %441 = arith.negf %440 : vector<2x128xf32>
    %442 = math.exp %441 : vector<2x128xf32>
    %cst_113 = arith.constant 1.000000e+00 : f32
    %443 = vector.broadcast %cst_113 : f32 to vector<2x128xf32>
    %444 = arith.addf %443, %442 : vector<2x128xf32>
    %445 = arith.divf %443, %444 : vector<2x128xf32>
    %446 = vector.extract_strided_slice %433 {offsets = [0, 256], sizes = [2, 128], strides = [1, 1]} : vector<2x512xf32> to vector<2x128xf32>
    %447 = math.tanh %446 : vector<2x128xf32>
    %448 = vector.extract_strided_slice %433 {offsets = [0, 384], sizes = [2, 128], strides = [1, 1]} : vector<2x512xf32> to vector<2x128xf32>
    %449 = arith.negf %448 : vector<2x128xf32>
    %450 = math.exp %449 : vector<2x128xf32>
    %cst_114 = arith.constant 1.000000e+00 : f32
    %451 = vector.broadcast %cst_114 : f32 to vector<2x128xf32>
    %452 = arith.addf %451, %450 : vector<2x128xf32>
    %453 = arith.divf %451, %452 : vector<2x128xf32>
    %454 = arith.mulf %445, %427 : vector<2x128xf32>
    %455 = arith.mulf %439, %447 : vector<2x128xf32>
    %456 = arith.addf %454, %455 : vector<2x128xf32>
    %457 = math.tanh %456 : vector<2x128xf32>
    %458 = arith.mulf %453, %457 : vector<2x128xf32>
    %459 = vector.extract_strided_slice %253 {offsets = [14, 0], sizes = [2, 512], strides = [1, 1]} : vector<16x512xf32> to vector<2x512xf32>
    %c0_115 = arith.constant 0 : index
    %c0_116 = arith.constant 0 : index
    %460 = vector.load %arg5[%c0_115, %c0_116] : memref<128x512xf32, #tpu.memory_space<vmem>>, vector<128x512xf32>
    %cst_117 = arith.constant dense<0.000000e+00> : vector<2x512xf32>
    %461 = tpu.matmul %458, %460, %cst_117 {dimension_numbers = #tpu.dot_dimension_numbers<[1], [0], [0], [1], [0, 0, 1, 1], [], []>} : vector<2x128xf32>, vector<128x512xf32>, vector<2x512xf32> -> vector<2x512xf32>
    %462 = arith.addf %459, %461 : vector<2x512xf32>
    %463 = vector.extract_strided_slice %462 {offsets = [0, 0], sizes = [2, 128], strides = [1, 1]} : vector<2x512xf32> to vector<2x128xf32>
    %464 = arith.negf %463 : vector<2x128xf32>
    %465 = math.exp %464 : vector<2x128xf32>
    %cst_118 = arith.constant 1.000000e+00 : f32
    %466 = vector.broadcast %cst_118 : f32 to vector<2x128xf32>
    %467 = arith.addf %466, %465 : vector<2x128xf32>
    %468 = arith.divf %466, %467 : vector<2x128xf32>
    %469 = vector.extract_strided_slice %462 {offsets = [0, 128], sizes = [2, 128], strides = [1, 1]} : vector<2x512xf32> to vector<2x128xf32>
    %470 = arith.negf %469 : vector<2x128xf32>
    %471 = math.exp %470 : vector<2x128xf32>
    %cst_119 = arith.constant 1.000000e+00 : f32
    %472 = vector.broadcast %cst_119 : f32 to vector<2x128xf32>
    %473 = arith.addf %472, %471 : vector<2x128xf32>
    %474 = arith.divf %472, %473 : vector<2x128xf32>
    %475 = vector.extract_strided_slice %462 {offsets = [0, 256], sizes = [2, 128], strides = [1, 1]} : vector<2x512xf32> to vector<2x128xf32>
    %476 = math.tanh %475 : vector<2x128xf32>
    %477 = vector.extract_strided_slice %462 {offsets = [0, 384], sizes = [2, 128], strides = [1, 1]} : vector<2x512xf32> to vector<2x128xf32>
    %478 = arith.negf %477 : vector<2x128xf32>
    %479 = math.exp %478 : vector<2x128xf32>
    %cst_120 = arith.constant 1.000000e+00 : f32
    %480 = vector.broadcast %cst_120 : f32 to vector<2x128xf32>
    %481 = arith.addf %480, %479 : vector<2x128xf32>
    %482 = arith.divf %480, %481 : vector<2x128xf32>
    %483 = arith.mulf %474, %456 : vector<2x128xf32>
    %484 = arith.mulf %468, %476 : vector<2x128xf32>
    %485 = arith.addf %483, %484 : vector<2x128xf32>
    %486 = math.tanh %485 : vector<2x128xf32>
    %487 = arith.mulf %482, %486 : vector<2x128xf32>
    %c0_121 = arith.constant 0 : index
    %c0_122 = arith.constant 0 : index
    %488 = vector.load %arg7[%c0_121, %c0_122] : memref<128x128xf32, #tpu.memory_space<vmem>>, vector<128x128xf32>
    %cst_123 = arith.constant dense<0.000000e+00> : vector<2x128xf32>
    %489 = tpu.matmul %487, %488, %cst_123 {dimension_numbers = #tpu.dot_dimension_numbers<[1], [0], [0], [1], [0, 0, 1, 1], [], []>} : vector<2x128xf32>, vector<128x128xf32>, vector<2x128xf32> -> vector<2x128xf32>
    %c0_124 = arith.constant 0 : index
    %c0_125 = arith.constant 0 : index
    %490 = vector.load %arg8[%c0_124, %c0_125] : memref<1x128xf32, #tpu.memory_space<vmem>>, vector<1x128xf32>
    %491 = vector.broadcast %490 : vector<1x128xf32> to vector<2x128xf32>
    %492 = arith.addf %489, %491 : vector<2x128xf32>
    %493 = arith.negf %492 : vector<2x128xf32>
    %494 = math.exp %493 : vector<2x128xf32>
    %cst_126 = arith.constant 1.000000e+00 : f32
    %495 = vector.broadcast %cst_126 : f32 to vector<2x128xf32>
    %496 = arith.addf %495, %494 : vector<2x128xf32>
    %497 = arith.divf %495, %496 : vector<2x128xf32>
    %c0_127 = arith.constant 0 : index
    %c0_128 = arith.constant 0 : index
    %498 = vector.load %arg9[%c0_127, %c0_128] : memref<2x128xf32, #tpu.memory_space<vmem>>, vector<2x128xf32>
    tpu.vector_store %arg9[%c0_127, %c0_128], %497 {strides = array<i32>} : memref<2x128xf32, #tpu.memory_space<vmem>>, vector<2x128xf32>,
    return
  }
}

</mosaic_0001>

<llo_original>
// kernel: _forward.1
$region0: #{_forward.1}
  #allocation0 [shape = 'u32[]', space=smem, size = 0x4, offset = 0x4, fixed_abs, tag = 'smem constant byte address 0x4 - core index']
  #allocation1 [shape = 'u32[72,128]{1,0:T(1,128)}', space=vmem, size = 0x9000, scoped, tag = 'internal scratch']
  #allocation2 [shape = 'f32[16,128]{1,0:T(8,128)}', space=vmem, size = 0x2000, scoped, tag = 'scratch operand']
  %s0 = inlined_call_operand.vmem [shape: f32[16,318], index: 0, kind: input, shape index: {}]
  %s1 = inlined_call_operand.hbm [shape: f32[318,512], index: 1, kind: input, shape index: {}]
  %s2 = inlined_call_operand.hbm [shape: f32[128,512], index: 2, kind: input, shape index: {}]
  %s3 = inlined_call_operand.vmem [shape: f32[1,512], index: 3, kind: input, shape index: {}]
  %s4 = inlined_call_operand.hbm [shape: f32[128,512], index: 4, kind: input, shape index: {}]
  %s5 = inlined_call_operand.hbm [shape: f32[128,512], index: 5, kind: input, shape index: {}]
  %s6 = inlined_call_operand.vmem [shape: f32[1,512], index: 6, kind: input, shape index: {}]
  %s7 = inlined_call_operand.vmem [shape: f32[128,128], index: 7, kind: input, shape index: {}]
  %s8 = inlined_call_operand.vmem [shape: f32[1,128], index: 8, kind: input, shape index: {}]
  %s9 = inlined_call_operand.hbm [shape: f32[2,128], index: 9, kind: output, shape index: {}]
  %s10 = sld [smem:[#allocation0]]
  $region62: #{_forward.1} parent=0
    _
  %s12 = ssub.s32 1, %s10
  %s13 = scalar_select 0, %s12, %s10
  $region1: #{_forward.1} parent=0
    #allocation3 [shape = 'u8[655360]{0}', space=vmem, size = 0xa0000, scoped, tag = 'input window, operand 1, single buffered']
    #allocation4 [shape = 's32[1]{0}', space=sflag, size = 0x4, scoped, tag = 'scoped memory for _forward.1']
    #allocation5 [shape = 's32[1]{0}', space=sflag, size = 0x4, scoped, tag = 'scoped memory for _forward.1']
    #allocation6 [shape = 'u8[262144]{0}', space=vmem, size = 0x40000, scoped, tag = 'input window, operand 2, single buffered']
    #allocation7 [shape = 's32[1]{0}', space=sflag, size = 0x4, scoped, tag = 'scoped memory for _forward.1']
    #allocation8 [shape = 'u8[262144]{0}', space=vmem, size = 0x40000, scoped, tag = 'input window, operand 4, single buffered']
    #allocation9 [shape = 'u8[262144]{0}', space=vmem, size = 0x40000, scoped, tag = 'input window, operand 5, single buffered']
    #allocation10 [shape = 's32[1]{0}', space=sflag, size = 0x4, scoped, tag = 'scoped memory for _forward.1']
    #allocation11 [shape = 'u8[1024]{0}', space=vmem, size = 0x400, scoped, tag = 'output window, operand 0, single buffered']
    %14 = vsyncpa [#allocation4], 0
    %15 = vsyncpa [#allocation7], 0
    %16 = vsyncpa [#allocation10], 0
    %17 = vsyncpa [#allocation5], 0
    // Predicated region
    $region2: #{_forward.1} parent=1 // pred_check
      _
    $region3: #{_forward.1} parent=1 // pred_check_branch
      %19 = sbr.rel (0) target = $region5
    $region4: #{_forward.1} parent=1 // pred_region
      _
    $region5: #{_forward.1} parent=1 // pred_fallthru
      _
    // Predicated region
    $region6: #{_forward.1} parent=1 // pred_check
      _
    $region7: #{_forward.1} parent=1 // pred_check_branch
      %21 = sbr.rel (0) target = $region9
    $region8: #{_forward.1} parent=1 // pred_region
      %23 = vsyncadd [#allocation4], 0
      %s24 = sshll.u32 %s1, 4
      %s25 = int_to_ptr.hbm [resolvable:$true] %s24
      %s26 = sshll.u32 [#allocation3], 4
      %s27 = int_to_ptr.vmem [resolvable:$true] %s26
      %32 = dma.hbm_to_vmem [thread:$0]  %s25, 20480, %s27, [#allocation4], 512, 512, 32
    $region9: #{_forward.1} parent=1 // pred_fallthru
      _
    // Predicated region
    $region10: #{_forward.1} parent=1 // pred_check
      _
    $region11: #{_forward.1} parent=1 // pred_check_branch
      %34 = sbr.rel (0) target = $region13
    $region12: #{_forward.1} parent=1 // pred_region
      %36 = vsyncadd [#allocation7], 0
      %s37 = sshll.u32 %s2, 4
      %s38 = int_to_ptr.hbm [resolvable:$true] %s37
      %s39 = sshll.u32 [#allocation6], 4
      %s40 = int_to_ptr.vmem [resolvable:$true] %s39
      %45 = dma.hbm_to_vmem [thread:$0]  %s38, 8192, %s40, [#allocation7], 512, 512, 32
    $region13: #{_forward.1} parent=1 // pred_fallthru
      _
    // Predicated region
    $region14: #{_forward.1} parent=1 // pred_check
      _
    $region15: #{_forward.1} parent=1 // pred_check_branch
      %47 = sbr.rel (0) target = $region17
    $region16: #{_forward.1} parent=1 // pred_region
      _
    $region17: #{_forward.1} parent=1 // pred_fallthru
      _
    // Predicated region
    $region18: #{_forward.1} parent=1 // pred_check
      _
    $region19: #{_forward.1} parent=1 // pred_check_branch
      %49 = sbr.rel (0) target = $region21
    $region20: #{_forward.1} parent=1 // pred_region
      %51 = vsyncadd [#allocation7], 0
      %s52 = sshll.u32 %s4, 4
      %s53 = int_to_ptr.hbm [resolvable:$true] %s52
      %s54 = sshll.u32 [#allocation8], 4
      %s55 = int_to_ptr.vmem [resolvable:$true] %s54
      %60 = dma.hbm_to_vmem [thread:$0]  %s53, 8192, %s55, [#allocation7], 512, 512, 32
    $region21: #{_forward.1} parent=1 // pred_fallthru
      _
    // Predicated region
    $region22: #{_forward.1} parent=1 // pred_check
      _
    $region23: #{_forward.1} parent=1 // pred_check_branch
      %62 = sbr.rel (0) target = $region25
    $region24: #{_forward.1} parent=1 // pred_region
      %64 = vsyncadd [#allocation10], 0
      %s65 = sshll.u32 %s5, 4
      %s66 = int_to_ptr.hbm [resolvable:$true] %s65
      %s67 = sshll.u32 [#allocation9], 4
      %s68 = int_to_ptr.vmem [resolvable:$true] %s67
      %73 = dma.hbm_to_vmem [thread:$0]  %s66, 8192, %s68, [#allocation10], 512, 512, 32
    $region25: #{_forward.1} parent=1 // pred_fallthru
      _
    // Predicated region
    $region26: #{_forward.1} parent=1 // pred_check
      _
    $region27: #{_forward.1} parent=1 // pred_check_branch
      %75 = sbr.rel (0) target = $region29
    $region28: #{_forward.1} parent=1 // pred_region
      _
    $region29: #{_forward.1} parent=1 // pred_fallthru
      _
    // Predicated region
    $region30: #{_forward.1} parent=1 // pred_check
      _
    $region31: #{_forward.1} parent=1 // pred_check_branch
      %77 = sbr.rel (0) target = $region33
    $region32: #{_forward.1} parent=1 // pred_region
      _
    $region33: #{_forward.1} parent=1 // pred_fallthru
      _
    // Predicated region
    $region34: #{_forward.1} parent=1 // pred_check
      _
    $region35: #{_forward.1} parent=1 // pred_check_branch
      %79 = sbr.rel (0) target = $region37
    $region36: #{_forward.1} parent=1 // pred_region
      _
    $region37: #{_forward.1} parent=1 // pred_fallthru
      _
    // Predicated region
    $region38: #{_forward.1} parent=1 // pred_check
      _
    $region39: #{_forward.1} parent=1 // pred_check_branch
      %81 = sbr.rel (0) target = $region41
    $region40: #{_forward.1} parent=1 // pred_region
      %83 = dma.done [#allocation4], 20480
    $region41: #{_forward.1} parent=1 // pred_fallthru
      _
    // Predicated region
    $region42: #{_forward.1} parent=1 // pred_check
      _
    $region43: #{_forward.1} parent=1 // pred_check_branch
      %85 = sbr.rel (0) target = $region45
    $region44: #{_forward.1} parent=1 // pred_region
      %87 = dma.done [#allocation7], 8192
    $region45: #{_forward.1} parent=1 // pred_fallthru
      _
    // Predicated region
    $region46: #{_forward.1} parent=1 // pred_check
      _
    $region47: #{_forward.1} parent=1 // pred_check_branch
      %89 = sbr.rel (0) target = $region49
    $region48: #{_forward.1} parent=1 // pred_region
      %91 = dma.done [#allocation7], 8192
    $region49: #{_forward.1} parent=1 // pred_fallthru
      _
    // Predicated region
    $region50: #{_forward.1} parent=1 // pred_check
      _
    $region51: #{_forward.1} parent=1 // pred_check_branch
      %93 = sbr.rel (0) target = $region53
    $region52: #{_forward.1} parent=1 // pred_region
      %95 = dma.done [#allocation10], 8192
    $region53: #{_forward.1} parent=1 // pred_fallthru
      _
    %v96 = vld [vmem:[%s0] sm:$0xff]
    %v97 = vld [vmem:[%s0 + $0x8] sm:$0xff]
    %v98 = vld [vmem:[%s0 + $0x10] sm:$0xff]
    %v99 = vld [vmem:[%s0 + $0x18] sm:$0xff]
    %v100 = vld [vmem:[%s0 + $0x20] sm:$0xff]
    %v101 = vld [vmem:[%s0 + $0x28] sm:$0xff]
    %v102 = vld [vmem:[#allocation3] sm:$0xff]
    %v103 = vld [vmem:[#allocation3 + $0x8] sm:$0xff]
    %v104 = vld [vmem:[#allocation3 + $0x10] sm:$0xff]
    %v105 = vld [vmem:[#allocation3 + $0x18] sm:$0xff]
    %v106 = vld [vmem:[#allocation3 + $0x20] sm:$0xff]
    %v107 = vld [vmem:[#allocation3 + $0x28] sm:$0xff]
    %v108 = vld [vmem:[#allocation3 + $0x30] sm:$0xff]
    %v109 = vld [vmem:[#allocation3 + $0x38] sm:$0xff]
    %v110 = vld [vmem:[#allocation3 + $0x40] sm:$0xff]
    %v111 = vld [vmem:[#allocation3 + $0x48] sm:$0xff]
    %v112 = vld [vmem:[#allocation3 + $0x50] sm:$0xff]
    %v113 = vld [vmem:[#allocation3 + $0x58] sm:$0xff]
    %v114 = vld [vmem:[#allocation3 + $0x60] sm:$0xff]
    %v115 = vld [vmem:[#allocation3 + $0x68] sm:$0xff]
    %v116 = vld [vmem:[#allocation3 + $0x70] sm:$0xff]
    %v117 = vld [vmem:[#allocation3 + $0x78] sm:$0xff]
    %v118 = vld [vmem:[#allocation3 + $0x80] sm:$0xff]
    %v119 = vld [vmem:[#allocation3 + $0x88] sm:$0xff]
    %v120 = vld [vmem:[#allocation3 + $0x90] sm:$0xff]
    %v121 = vld [vmem:[#allocation3 + $0x98] sm:$0xff]
    %v122 = vld [vmem:[#allocation3 + $0xa0] sm:$0xff]
    %v123 = vld [vmem:[#allocation3 + $0xa8] sm:$0xff]
    %v124 = vld [vmem:[#allocation3 + $0xb0] sm:$0xff]
    %v125 = vld [vmem:[#allocation3 + $0xb8] sm:$0xff]
    %v126 = vld [vmem:[#allocation3 + $0xc0] sm:$0xff]
    %v127 = vld [vmem:[#allocation3 + $0xc8] sm:$0xff]
    %v128 = vld [vmem:[#allocation3 + $0xd0] sm:$0xff]
    %v129 = vld [vmem:[#allocation3 + $0xd8] sm:$0xff]
    %v130 = vld [vmem:[#allocation3 + $0xe0] sm:$0xff]
    %v131 = vld [vmem:[#allocation3 + $0xe8] sm:$0xff]
    %v132 = vld [vmem:[#allocation3 + $0xf0] sm:$0xff]
    %v133 = vld [vmem:[#allocation3 + $0xf8] sm:$0xff]
    %v134 = vld [vmem:[#allocation3 + $0x100] sm:$0xff]
    %v135 = vld [vmem:[#allocation3 + $0x108] sm:$0xff]
    %v136 = vld [vmem:[#allocation3 + $0x110] sm:$0xff]
    %v137 = vld [vmem:[#allocation3 + $0x118] sm:$0xff]
    %v138 = vld [vmem:[#allocation3 + $0x120] sm:$0xff]
    %v139 = vld [vmem:[#allocation3 + $0x128] sm:$0xff]
    %v140 = vld [vmem:[#allocation3 + $0x130] sm:$0xff]
    %v141 = vld [vmem:[#allocation3 + $0x138] sm:$0xff]
    %v142 = vld [vmem:[#allocation3 + $0x140] sm:$0xff]
    %v143 = vld [vmem:[#allocation3 + $0x148] sm:$0xff]
    %v144 = vld [vmem:[#allocation3 + $0x150] sm:$0xff]
    %v145 = vld [vmem:[#allocation3 + $0x158] sm:$0xff]
    %v146 = vld [vmem:[#allocation3 + $0x160] sm:$0xff]
    %v147 = vld [vmem:[#allocation3 + $0x168] sm:$0xff]
    %v148 = vld [vmem:[#allocation3 + $0x170] sm:$0xff]
    %v149 = vld [vmem:[#allocation3 + $0x178] sm:$0xff]
    %v150 = vld [vmem:[#allocation3 + $0x180] sm:$0xff]
    %v151 = vld [vmem:[#allocation3 + $0x188] sm:$0xff]
    %v152 = vld [vmem:[#allocation3 + $0x190] sm:$0xff]
    %v153 = vld [vmem:[#allocation3 + $0x198] sm:$0xff]
    %v154 = vld [vmem:[#allocation3 + $0x1a0] sm:$0xff]
    %v155 = vld [vmem:[#allocation3 + $0x1a8] sm:$0xff]
    %v156 = vld [vmem:[#allocation3 + $0x1b0] sm:$0xff]
    %v157 = vld [vmem:[#allocation3 + $0x1b8] sm:$0xff]
    %v158 = vld [vmem:[#allocation3 + $0x1c0] sm:$0xff]
    %v159 = vld [vmem:[#allocation3 + $0x1c8] sm:$0xff]
    %v160 = vld [vmem:[#allocation3 + $0x1d0] sm:$0xff]
    %v161 = vld [vmem:[#allocation3 + $0x1d8] sm:$0xff]
    %v162 = vld [vmem:[#allocation3 + $0x1e0] sm:$0xff]
    %v163 = vld [vmem:[#allocation3 + $0x1e8] sm:$0xff]
    %v164 = vld [vmem:[#allocation3 + $0x1f0] sm:$0xff]
    %v165 = vld [vmem:[#allocation3 + $0x1f8] sm:$0xff]
    %v166 = vld [vmem:[#allocation3 + $0x200] sm:$0xff]
    %v167 = vld [vmem:[#allocation3 + $0x208] sm:$0xff]
    %v168 = vld [vmem:[#allocation3 + $0x210] sm:$0xff]
    %v169 = vld [vmem:[#allocation3 + $0x218] sm:$0xff]
    %v170 = vld [vmem:[#allocation3 + $0x220] sm:$0xff]
    %v171 = vld [vmem:[#allocation3 + $0x228] sm:$0xff]
    %v172 = vld [vmem:[#allocation3 + $0x230] sm:$0xff]
    %v173 = vld [vmem:[#allocation3 + $0x238] sm:$0xff]
    %v174 = vld [vmem:[#allocation3 + $0x240] sm:$0xff]
    %v175 = vld [vmem:[#allocation3 + $0x248] sm:$0xff]
    %v176 = vld [vmem:[#allocation3 + $0x250] sm:$0xff]
    %v177 = vld [vmem:[#allocation3 + $0x258] sm:$0xff]
    %v178 = vld [vmem:[#allocation3 + $0x260] sm:$0xff]
    %v179 = vld [vmem:[#allocation3 + $0x268] sm:$0xff]
    %v180 = vld [vmem:[#allocation3 + $0x270] sm:$0xff]
    %v181 = vld [vmem:[#allocation3 + $0x278] sm:$0xff]
    %v182 = vld [vmem:[#allocation3 + $0x280] sm:$0xff]
    %v183 = vld [vmem:[#allocation3 + $0x288] sm:$0xff]
    %v184 = vld [vmem:[#allocation3 + $0x290] sm:$0xff]
    %v185 = vld [vmem:[#allocation3 + $0x298] sm:$0xff]
    %v186 = vld [vmem:[#allocation3 + $0x2a0] sm:$0xff]
    %v187 = vld [vmem:[#allocation3 + $0x2a8] sm:$0xff]
    %v188 = vld [vmem:[#allocation3 + $0x2b0] sm:$0xff]
    %v189 = vld [vmem:[#allocation3 + $0x2b8] sm:$0xff]
    %v190 = vld [vmem:[#allocation3 + $0x2c0] sm:$0xff]
    %v191 = vld [vmem:[#allocation3 + $0x2c8] sm:$0xff]
    %v192 = vld [vmem:[#allocation3 + $0x2d0] sm:$0xff]
    %v193 = vld [vmem:[#allocation3 + $0x2d8] sm:$0xff]
    %v194 = vld [vmem:[#allocation3 + $0x2e0] sm:$0xff]
    %v195 = vld [vmem:[#allocation3 + $0x2e8] sm:$0xff]
    %v196 = vld [vmem:[#allocation3 + $0x2f0] sm:$0xff]
    %v197 = vld [vmem:[#allocation3 + $0x2f8] sm:$0xff]
    %v198 = vld [vmem:[#allocation3 + $0x300] sm:$0xff]
    %v199 = vld [vmem:[#allocation3 + $0x308] sm:$0xff]
    %v200 = vld [vmem:[#allocation3 + $0x310] sm:$0xff]
    %v201 = vld [vmem:[#allocation3 + $0x318] sm:$0xff]
    %v202 = vld [vmem:[#allocation3 + $0x320] sm:$0xff]
    %v203 = vld [vmem:[#allocation3 + $0x328] sm:$0xff]
    %v204 = vld [vmem:[#allocation3 + $0x330] sm:$0xff]
    %v205 = vld [vmem:[#allocation3 + $0x338] sm:$0xff]
    %v206 = vld [vmem:[#allocation3 + $0x340] sm:$0xff]
    %v207 = vld [vmem:[#allocation3 + $0x348] sm:$0xff]
    %v208 = vld [vmem:[#allocation3 + $0x350] sm:$0xff]
    %v209 = vld [vmem:[#allocation3 + $0x358] sm:$0xff]
    %v210 = vld [vmem:[#allocation3 + $0x360] sm:$0xff]
    %v211 = vld [vmem:[#allocation3 + $0x368] sm:$0xff]
    %v212 = vld [vmem:[#allocation3 + $0x370] sm:$0xff]
    %v213 = vld [vmem:[#allocation3 + $0x378] sm:$0xff]
    %v214 = vld [vmem:[#allocation3 + $0x380] sm:$0xff]
    %v215 = vld [vmem:[#allocation3 + $0x388] sm:$0xff]
    %v216 = vld [vmem:[#allocation3 + $0x390] sm:$0xff]
    %v217 = vld [vmem:[#allocation3 + $0x398] sm:$0xff]
    %v218 = vld [vmem:[#allocation3 + $0x3a0] sm:$0xff]
    %v219 = vld [vmem:[#allocation3 + $0x3a8] sm:$0xff]
    %v220 = vld [vmem:[#allocation3 + $0x3b0] sm:$0xff]
    %v221 = vld [vmem:[#allocation3 + $0x3b8] sm:$0xff]
    %v222 = vld [vmem:[#allocation3 + $0x3c0] sm:$0xff]
    %v223 = vld [vmem:[#allocation3 + $0x3c8] sm:$0xff]
    %v224 = vld [vmem:[#allocation3 + $0x3d0] sm:$0xff]
    %v225 = vld [vmem:[#allocation3 + $0x3d8] sm:$0xff]
    %v226 = vld [vmem:[#allocation3 + $0x3e0] sm:$0xff]
    %v227 = vld [vmem:[#allocation3 + $0x3e8] sm:$0xff]
    %v228 = vld [vmem:[#allocation3 + $0x3f0] sm:$0xff]
    %v229 = vld [vmem:[#allocation3 + $0x3f8] sm:$0xff]
    %v230 = vld [vmem:[#allocation3 + $0x400] sm:$0xff]
    %v231 = vld [vmem:[#allocation3 + $0x408] sm:$0xff]
    %v232 = vld [vmem:[#allocation3 + $0x410] sm:$0xff]
    %v233 = vld [vmem:[#allocation3 + $0x418] sm:$0xff]
    %v234 = vld [vmem:[#allocation3 + $0x420] sm:$0xff]
    %v235 = vld [vmem:[#allocation3 + $0x428] sm:$0xff]
    %v236 = vld [vmem:[#allocation3 + $0x430] sm:$0xff]
    %v237 = vld [vmem:[#allocation3 + $0x438] sm:$0xff]
    %v238 = vld [vmem:[#allocation3 + $0x440] sm:$0xff]
    %v239 = vld [vmem:[#allocation3 + $0x448] sm:$0xff]
    %v240 = vld [vmem:[#allocation3 + $0x450] sm:$0xff]
    %v241 = vld [vmem:[#allocation3 + $0x458] sm:$0xff]
    %v242 = vld [vmem:[#allocation3 + $0x460] sm:$0xff]
    %v243 = vld [vmem:[#allocation3 + $0x468] sm:$0xff]
    %v244 = vld [vmem:[#allocation3 + $0x470] sm:$0xff]
    %v245 = vld [vmem:[#allocation3 + $0x478] sm:$0xff]
    %v246 = vld [vmem:[#allocation3 + $0x480] sm:$0xff]
    %v247 = vld [vmem:[#allocation3 + $0x488] sm:$0xff]
    %v248 = vld [vmem:[#allocation3 + $0x490] sm:$0xff]
    %v249 = vld [vmem:[#allocation3 + $0x498] sm:$0xff]
    %v250 = vld [vmem:[#allocation3 + $0x4a0] sm:$0xff]
    %v251 = vld [vmem:[#allocation3 + $0x4a8] sm:$0xff]
    %v252 = vld [vmem:[#allocation3 + $0x4b0] sm:$0xff]
    %v253 = vld [vmem:[#allocation3 + $0x4b8] sm:$0xff]
    %v254 = vld [vmem:[#allocation3 + $0x4c0] sm:$0xff]
    %v255 = vld [vmem:[#allocation3 + $0x4c8] sm:$0xff]
    %v256 = vld [vmem:[#allocation3 + $0x4d0] sm:$0xff]
    %v257 = vld [vmem:[#allocation3 + $0x4d8] sm:$0xff]
    %v258 = vld [vmem:[#allocation3 + $0x4e0] sm:$0x3f]
    %v259 = vld [vmem:[#allocation3 + $0x4e8] sm:$0x3f]
    %v260 = vld [vmem:[#allocation3 + $0x4f0] sm:$0x3f]
    %v261 = vld [vmem:[#allocation3 + $0x4f8] sm:$0x3f]
    %v262 = vld [vmem:[%s3] sm:$0xf]
    %v264 = vperm.slane %v262, 0
    %v265 = vperm.slane %v262, 1
    %v266 = vperm.slane %v262, 2
    %v267 = vperm.slane %v262, 3
    %vm272 = vcmask 506880
    %v274 = vsel %vm272, %v98, 0
    %v277 = vsel %vm272, %v101, 0
    %vm279 = vcmask 1045504
    %v281 = vsel %vm279, %v258, 0
    %v284 = vsel %vm279, %v259, 0
    %v287 = vsel %vm279, %v260, 0
    %v290 = vsel %vm279, %v261, 0
    %292 = vmatpush.msra.mxu0 %v162
    %293 = vmatpush.msra.mxu0 %v158
    %294 = vmatpush.msra.mxu0 %v154
    %295 = vmatpush.msra.mxu0 %v150
    %296 = vmatpush.msra.mxu0 %v146
    %297 = vmatpush.msra.mxu0 %v142
    %298 = vmatpush.msra.mxu0 %v138
    %299 = vmatpush.msra.mxu0 %v134
    %300 = vmatpush.msra.mxu0 %v130
    %301 = vmatpush.msra.mxu0 %v126
    %302 = vmatpush.msra.mxu0 %v122
    %303 = vmatpush.msra.mxu0 %v118
    %304 = vmatpush.msra.mxu0 %v114
    %305 = vmatpush.msra.mxu0 %v110
    %306 = vmatpush.msra.mxu0 %v106
    %307 = vmatpush.msra.mxu0 %v102
    %308 = vmatmul.f32.gmra.mxu0 %v96
    %v309 = vpop.f32.mrf.mxu0
    %v310 = vadd.f32 %v264, %v309
    %311 = vmatmul.f32.gmra.mxu0 %v99
    %v312 = vpop.f32.mrf.mxu0
    %v313 = vadd.f32 %v264, %v312
    %314 = vdwg.mxu0
    %315 = vmatpush.msra.mxu0 %v226
    %316 = vmatpush.msra.mxu0 %v222
    %317 = vmatpush.msra.mxu0 %v218
    %318 = vmatpush.msra.mxu0 %v214
    %319 = vmatpush.msra.mxu0 %v210
    %320 = vmatpush.msra.mxu0 %v206
    %321 = vmatpush.msra.mxu0 %v202
    %322 = vmatpush.msra.mxu0 %v198
    %323 = vmatpush.msra.mxu0 %v194
    %324 = vmatpush.msra.mxu0 %v190
    %325 = vmatpush.msra.mxu0 %v186
    %326 = vmatpush.msra.mxu0 %v182
    %327 = vmatpush.msra.mxu0 %v178
    %328 = vmatpush.msra.mxu0 %v174
    %329 = vmatpush.msra.mxu0 %v170
    %330 = vmatpush.msra.mxu0 %v166
    %331 = vmatmul.f32.gmra.mxu0 %v97
    %v332 = vpop.f32.mrf.mxu0
    %v333 = vadd.f32 %v310, %v332
    %334 = vmatmul.f32.gmra.mxu0 %v100
    %v335 = vpop.f32.mrf.mxu0
    %v336 = vadd.f32 %v313, %v335
    %337 = vdwg.mxu0
    %338 = vmatpush.msra.mxu0 0.0
    %339 = vmatpush.msra.mxu0 0.0
    %340 = vmatpush.msra.mxu0 0.0
    %341 = vmatpush.msra.mxu0 0.0
    %342 = vmatpush.msra.mxu0 0.0
    %343 = vmatpush.msra.mxu0 0.0
    %344 = vmatpush.msra.mxu0 0.0
    %345 = vmatpush.msra.mxu0 0.0
    %346 = vmatpush.msra.mxu0 %v281
    %347 = vmatpush.msra.mxu0 %v254
    %348 = vmatpush.msra.mxu0 %v250
    %349 = vmatpush.msra.mxu0 %v246
    %350 = vmatpush.msra.mxu0 %v242
    %351 = vmatpush.msra.mxu0 %v238
    %352 = vmatpush.msra.mxu0 %v234
    %353 = vmatpush.msra.mxu0 %v230
    %354 = vmatmul.f32.gmra.mxu0 %v274
    %v355 = vpop.f32.mrf.mxu0
    %v356 = vadd.f32 %v333, %v355
    %357 = vmatmul.f32.gmra.mxu0 %v277
    %v358 = vpop.f32.mrf.mxu0
    %v359 = vadd.f32 %v336, %v358
    %360 = vdwg.mxu0
    %361 = vmatpush.msra.mxu0 %v163
    %362 = vmatpush.msra.mxu0 %v159
    %363 = vmatpush.msra.mxu0 %v155
    %364 = vmatpush.msra.mxu0 %v151
    %365 = vmatpush.msra.mxu0 %v147
    %366 = vmatpush.msra.mxu0 %v143
    %367 = vmatpush.msra.mxu0 %v139
    %368 = vmatpush.msra.mxu0 %v135
    %369 = vmatpush.msra.mxu0 %v131
    %370 = vmatpush.msra.mxu0 %v127
    %371 = vmatpush.msra.mxu0 %v123
    %372 = vmatpush.msra.mxu0 %v119
    %373 = vmatpush.msra.mxu0 %v115
    %374 = vmatpush.msra.mxu0 %v111
    %375 = vmatpush.msra.mxu0 %v107
    %376 = vmatpush.msra.mxu0 %v103
    %377 = vmatmul.f32.gmra.mxu0 %v96
    %v378 = vpop.f32.mrf.mxu0
    %v379 = vadd.f32 %v265, %v378
    %380 = vmatmul.f32.gmra.mxu0 %v99
    %v381 = vpop.f32.mrf.mxu0
    %v382 = vadd.f32 %v265, %v381
    %383 = vdwg.mxu0
    %384 = vmatpush.msra.mxu0 %v227
    %385 = vmatpush.msra.mxu0 %v223
    %386 = vmatpush.msra.mxu0 %v219
    %387 = vmatpush.msra.mxu0 %v215
    %388 = vmatpush.msra.mxu0 %v211
    %389 = vmatpush.msra.mxu0 %v207
    %390 = vmatpush.msra.mxu0 %v203
    %391 = vmatpush.msra.mxu0 %v199
    %392 = vmatpush.msra.mxu0 %v195
    %393 = vmatpush.msra.mxu0 %v191
    %394 = vmatpush.msra.mxu0 %v187
    %395 = vmatpush.msra.mxu0 %v183
    %396 = vmatpush.msra.mxu0 %v179
    %397 = vmatpush.msra.mxu0 %v175
    %398 = vmatpush.msra.mxu0 %v171
    %399 = vmatpush.msra.mxu0 %v167
    %400 = vmatmul.f32.gmra.mxu0 %v97
    %v401 = vpop.f32.mrf.mxu0
    %v402 = vadd.f32 %v379, %v401
    %403 = vmatmul.f32.gmra.mxu0 %v100
    %v404 = vpop.f32.mrf.mxu0
    %v405 = vadd.f32 %v382, %v404
    %406 = vdwg.mxu0
    %407 = vmatpush.msra.mxu0 0.0
    %408 = vmatpush.msra.mxu0 0.0
    %409 = vmatpush.msra.mxu0 0.0
    %410 = vmatpush.msra.mxu0 0.0
    %411 = vmatpush.msra.mxu0 0.0
    %412 = vmatpush.msra.mxu0 0.0
    %413 = vmatpush.msra.mxu0 0.0
    %414 = vmatpush.msra.mxu0 0.0
    %415 = vmatpush.msra.mxu0 %v284
    %416 = vmatpush.msra.mxu0 %v255
    %417 = vmatpush.msra.mxu0 %v251
    %418 = vmatpush.msra.mxu0 %v247
    %419 = vmatpush.msra.mxu0 %v243
    %420 = vmatpush.msra.mxu0 %v239
    %421 = vmatpush.msra.mxu0 %v235
    %422 = vmatpush.msra.mxu0 %v231
    %423 = vmatmul.f32.gmra.mxu0 %v274
    %v424 = vpop.f32.mrf.mxu0
    %v425 = vadd.f32 %v402, %v424
    %426 = vmatmul.f32.gmra.mxu0 %v277
    %v427 = vpop.f32.mrf.mxu0
    %v428 = vadd.f32 %v405, %v427
    %429 = vdwg.mxu0
    %430 = vmatpush.msra.mxu0 %v164
    %431 = vmatpush.msra.mxu0 %v160
    %432 = vmatpush.msra.mxu0 %v156
    %433 = vmatpush.msra.mxu0 %v152
    %434 = vmatpush.msra.mxu0 %v148
    %435 = vmatpush.msra.mxu0 %v144
    %436 = vmatpush.msra.mxu0 %v140
    %437 = vmatpush.msra.mxu0 %v136
    %438 = vmatpush.msra.mxu0 %v132
    %439 = vmatpush.msra.mxu0 %v128
    %440 = vmatpush.msra.mxu0 %v124
    %441 = vmatpush.msra.mxu0 %v120
    %442 = vmatpush.msra.mxu0 %v116
    %443 = vmatpush.msra.mxu0 %v112
    %444 = vmatpush.msra.mxu0 %v108
    %445 = vmatpush.msra.mxu0 %v104
    %446 = vmatmul.f32.gmra.mxu0 %v96
    %v447 = vpop.f32.mrf.mxu0
    %v448 = vadd.f32 %v266, %v447
    %449 = vmatmul.f32.gmra.mxu0 %v99
    %v450 = vpop.f32.mrf.mxu0
    %v451 = vadd.f32 %v266, %v450
    %452 = vdwg.mxu0
    %453 = vmatpush.msra.mxu0 %v228
    %454 = vmatpush.msra.mxu0 %v224
    %455 = vmatpush.msra.mxu0 %v220
    %456 = vmatpush.msra.mxu0 %v216
    %457 = vmatpush.msra.mxu0 %v212
    %458 = vmatpush.msra.mxu0 %v208
    %459 = vmatpush.msra.mxu0 %v204
    %460 = vmatpush.msra.mxu0 %v200
    %461 = vmatpush.msra.mxu0 %v196
    %462 = vmatpush.msra.mxu0 %v192
    %463 = vmatpush.msra.mxu0 %v188
    %464 = vmatpush.msra.mxu0 %v184
    %465 = vmatpush.msra.mxu0 %v180
    %466 = vmatpush.msra.mxu0 %v176
    %467 = vmatpush.msra.mxu0 %v172
    %468 = vmatpush.msra.mxu0 %v168
    %469 = vmatmul.f32.gmra.mxu0 %v97
    %v470 = vpop.f32.mrf.mxu0
    %v471 = vadd.f32 %v448, %v470
    %472 = vmatmul.f32.gmra.mxu0 %v100
    %v473 = vpop.f32.mrf.mxu0
    %v474 = vadd.f32 %v451, %v473
    %475 = vdwg.mxu0
    %476 = vmatpush.msra.mxu0 0.0
    %477 = vmatpush.msra.mxu0 0.0
    %478 = vmatpush.msra.mxu0 0.0
    %479 = vmatpush.msra.mxu0 0.0
    %480 = vmatpush.msra.mxu0 0.0
    %481 = vmatpush.msra.mxu0 0.0
    %482 = vmatpush.msra.mxu0 0.0
    %483 = vmatpush.msra.mxu0 0.0
    %484 = vmatpush.msra.mxu0 %v287
    %485 = vmatpush.msra.mxu0 %v256
    %486 = vmatpush.msra.mxu0 %v252
    %487 = vmatpush.msra.mxu0 %v248
    %488 = vmatpush.msra.mxu0 %v244
    %489 = vmatpush.msra.mxu0 %v240
    %490 = vmatpush.msra.mxu0 %v236
    %491 = vmatpush.msra.mxu0 %v232
    %492 = vmatmul.f32.gmra.mxu0 %v274
    %v493 = vpop.f32.mrf.mxu0
    %v494 = vadd.f32 %v471, %v493
    %495 = vmatmul.f32.gmra.mxu0 %v277
    %v496 = vpop.f32.mrf.mxu0
    %v497 = vadd.f32 %v474, %v496
    %498 = vdwg.mxu0
    %499 = vmatpush.msra.mxu0 %v165
    %500 = vmatpush.msra.mxu0 %v161
    %501 = vmatpush.msra.mxu0 %v157
    %502 = vmatpush.msra.mxu0 %v153
    %503 = vmatpush.msra.mxu0 %v149
    %504 = vmatpush.msra.mxu0 %v145
    %505 = vmatpush.msra.mxu0 %v141
    %506 = vmatpush.msra.mxu0 %v137
    %507 = vmatpush.msra.mxu0 %v133
    %508 = vmatpush.msra.mxu0 %v129
    %509 = vmatpush.msra.mxu0 %v125
    %510 = vmatpush.msra.mxu0 %v121
    %511 = vmatpush.msra.mxu0 %v117
    %512 = vmatpush.msra.mxu0 %v113
    %513 = vmatpush.msra.mxu0 %v109
    %514 = vmatpush.msra.mxu0 %v105
    %515 = vmatmul.f32.gmra.mxu0 %v96
    %v516 = vpop.f32.mrf.mxu0
    %v517 = vadd.f32 %v267, %v516
    %518 = vmatmul.f32.gmra.mxu0 %v99
    %v519 = vpop.f32.mrf.mxu0
    %v520 = vadd.f32 %v267, %v519
    %521 = vdwg.mxu0
    %522 = vmatpush.msra.mxu0 %v229
    %523 = vmatpush.msra.mxu0 %v225
    %524 = vmatpush.msra.mxu0 %v221
    %525 = vmatpush.msra.mxu0 %v217
    %526 = vmatpush.msra.mxu0 %v213
    %527 = vmatpush.msra.mxu0 %v209
    %528 = vmatpush.msra.mxu0 %v205
    %529 = vmatpush.msra.mxu0 %v201
    %530 = vmatpush.msra.mxu0 %v197
    %531 = vmatpush.msra.mxu0 %v193
    %532 = vmatpush.msra.mxu0 %v189
    %533 = vmatpush.msra.mxu0 %v185
    %534 = vmatpush.msra.mxu0 %v181
    %535 = vmatpush.msra.mxu0 %v177
    %536 = vmatpush.msra.mxu0 %v173
    %537 = vmatpush.msra.mxu0 %v169
    %538 = vmatmul.f32.gmra.mxu0 %v97
    %v539 = vpop.f32.mrf.mxu0
    %v540 = vadd.f32 %v517, %v539
    %541 = vmatmul.f32.gmra.mxu0 %v100
    %v542 = vpop.f32.mrf.mxu0
    %v543 = vadd.f32 %v520, %v542
    %544 = vdwg.mxu0
    %545 = vmatpush.msra.mxu0 0.0
    %546 = vmatpush.msra.mxu0 0.0
    %547 = vmatpush.msra.mxu0 0.0
    %548 = vmatpush.msra.mxu0 0.0
    %549 = vmatpush.msra.mxu0 0.0
    %550 = vmatpush.msra.mxu0 0.0
    %551 = vmatpush.msra.mxu0 0.0
    %552 = vmatpush.msra.mxu0 0.0
    %553 = vmatpush.msra.mxu0 %v290
    %554 = vmatpush.msra.mxu0 %v257
    %555 = vmatpush.msra.mxu0 %v253
    %556 = vmatpush.msra.mxu0 %v249
    %557 = vmatpush.msra.mxu0 %v245
    %558 = vmatpush.msra.mxu0 %v241
    %559 = vmatpush.msra.mxu0 %v237
    %560 = vmatpush.msra.mxu0 %v233
    %561 = vmatmul.f32.gmra.mxu0 %v274
    %v562 = vpop.f32.mrf.mxu0
    %v563 = vadd.f32 %v540, %v562
    %564 = vmatmul.f32.gmra.mxu0 %v277
    %v565 = vpop.f32.mrf.mxu0
    %v566 = vadd.f32 %v543, %v565
    %567 = vdwg.mxu0
    %v568 = vld [vmem:[#allocation6] sm:$0xff]
    %v569 = vld [vmem:[#allocation6 + $0x8] sm:$0xff]
    %v570 = vld [vmem:[#allocation6 + $0x10] sm:$0xff]
    %v571 = vld [vmem:[#allocation6 + $0x18] sm:$0xff]
    %v572 = vld [vmem:[#allocation6 + $0x20] sm:$0xff]
    %v573 = vld [vmem:[#allocation6 + $0x28] sm:$0xff]
    %v574 = vld [vmem:[#allocation6 + $0x30] sm:$0xff]
    %v575 = vld [vmem:[#allocation6 + $0x38] sm:$0xff]
    %v576 = vld [vmem:[#allocation6 + $0x40] sm:$0xff]
    %v577 = vld [vmem:[#allocation6 + $0x48] sm:$0xff]
    %v578 = vld [vmem:[#allocation6 + $0x50] sm:$0xff]
    %v579 = vld [vmem:[#allocation6 + $0x58] sm:$0xff]
    %v580 = vld [vmem:[#allocation6 + $0x60] sm:$0xff]
    %v581 = vld [vmem:[#allocation6 + $0x68] sm:$0xff]
    %v582 = vld [vmem:[#allocation6 + $0x70] sm:$0xff]
    %v583 = vld [vmem:[#allocation6 + $0x78] sm:$0xff]
    %v584 = vld [vmem:[#allocation6 + $0x80] sm:$0xff]
    %v585 = vld [vmem:[#allocation6 + $0x88] sm:$0xff]
    %v586 = vld [vmem:[#allocation6 + $0x90] sm:$0xff]
    %v587 = vld [vmem:[#allocation6 + $0x98] sm:$0xff]
    %v588 = vld [vmem:[#allocation6 + $0xa0] sm:$0xff]
    %v589 = vld [vmem:[#allocation6 + $0xa8] sm:$0xff]
    %v590 = vld [vmem:[#allocation6 + $0xb0] sm:$0xff]
    %v591 = vld [vmem:[#allocation6 + $0xb8] sm:$0xff]
    %v592 = vld [vmem:[#allocation6 + $0xc0] sm:$0xff]
    %v593 = vld [vmem:[#allocation6 + $0xc8] sm:$0xff]
    %v594 = vld [vmem:[#allocation6 + $0xd0] sm:$0xff]
    %v595 = vld [vmem:[#allocation6 + $0xd8] sm:$0xff]
    %v596 = vld [vmem:[#allocation6 + $0xe0] sm:$0xff]
    %v597 = vld [vmem:[#allocation6 + $0xe8] sm:$0xff]
    %v598 = vld [vmem:[#allocation6 + $0xf0] sm:$0xff]
    %v599 = vld [vmem:[#allocation6 + $0xf8] sm:$0xff]
    %v600 = vld [vmem:[#allocation6 + $0x100] sm:$0xff]
    %v601 = vld [vmem:[#allocation6 + $0x108] sm:$0xff]
    %v602 = vld [vmem:[#allocation6 + $0x110] sm:$0xff]
    %v603 = vld [vmem:[#allocation6 + $0x118] sm:$0xff]
    %v604 = vld [vmem:[#allocation6 + $0x120] sm:$0xff]
    %v605 = vld [vmem:[#allocation6 + $0x128] sm:$0xff]
    %v606 = vld [vmem:[#allocation6 + $0x130] sm:$0xff]
    %v607 = vld [vmem:[#allocation6 + $0x138] sm:$0xff]
    %v608 = vld [vmem:[#allocation6 + $0x140] sm:$0xff]
    %v609 = vld [vmem:[#allocation6 + $0x148] sm:$0xff]
    %v610 = vld [vmem:[#allocation6 + $0x150] sm:$0xff]
    %v611 = vld [vmem:[#allocation6 + $0x158] sm:$0xff]
    %v612 = vld [vmem:[#allocation6 + $0x160] sm:$0xff]
    %v613 = vld [vmem:[#allocation6 + $0x168] sm:$0xff]
    %v614 = vld [vmem:[#allocation6 + $0x170] sm:$0xff]
    %v615 = vld [vmem:[#allocation6 + $0x178] sm:$0xff]
    %v616 = vld [vmem:[#allocation6 + $0x180] sm:$0xff]
    %v617 = vld [vmem:[#allocation6 + $0x188] sm:$0xff]
    %v618 = vld [vmem:[#allocation6 + $0x190] sm:$0xff]
    %v619 = vld [vmem:[#allocation6 + $0x198] sm:$0xff]
    %v620 = vld [vmem:[#allocation6 + $0x1a0] sm:$0xff]
    %v621 = vld [vmem:[#allocation6 + $0x1a8] sm:$0xff]
    %v622 = vld [vmem:[#allocation6 + $0x1b0] sm:$0xff]
    %v623 = vld [vmem:[#allocation6 + $0x1b8] sm:$0xff]
    %v624 = vld [vmem:[#allocation6 + $0x1c0] sm:$0xff]
    %v625 = vld [vmem:[#allocation6 + $0x1c8] sm:$0xff]
    %v626 = vld [vmem:[#allocation6 + $0x1d0] sm:$0xff]
    %v627 = vld [vmem:[#allocation6 + $0x1d8] sm:$0xff]
    %v628 = vld [vmem:[#allocation6 + $0x1e0] sm:$0xff]
    %v629 = vld [vmem:[#allocation6 + $0x1e8] sm:$0xff]
    %v630 = vld [vmem:[#allocation6 + $0x1f0] sm:$0xff]
    %v631 = vld [vmem:[#allocation6 + $0x1f8] sm:$0xff]
    %632 = vmatpush.msra.mxu0 %v628
    %633 = vmatpush.msra.mxu0 %v624
    %634 = vmatpush.msra.mxu0 %v620
    %635 = vmatpush.msra.mxu0 %v616
    %636 = vmatpush.msra.mxu0 %v612
    %637 = vmatpush.msra.mxu0 %v608
    %638 = vmatpush.msra.mxu0 %v604
    %639 = vmatpush.msra.mxu0 %v600
    %640 = vmatpush.msra.mxu0 %v596
    %641 = vmatpush.msra.mxu0 %v592
    %642 = vmatpush.msra.mxu0 %v588
    %643 = vmatpush.msra.mxu0 %v584
    %644 = vmatpush.msra.mxu0 %v580
    %645 = vmatpush.msra.mxu0 %v576
    %646 = vmatpush.msra.mxu0 %v572
    %647 = vmatpush.msra.mxu0 %v568
    %648 = vmatmul.f32.gmra.mxu0 0.0
    %v649 = vpop.f32.mrf.mxu0
    %v650 = vadd.f32 0.0, %v649
    %651 = vdwg.mxu0
    %652 = vmatpush.msra.mxu0 %v629
    %653 = vmatpush.msra.mxu0 %v625
    %654 = vmatpush.msra.mxu0 %v621
    %655 = vmatpush.msra.mxu0 %v617
    %656 = vmatpush.msra.mxu0 %v613
    %657 = vmatpush.msra.mxu0 %v609
    %658 = vmatpush.msra.mxu0 %v605
    %659 = vmatpush.msra.mxu0 %v601
    %660 = vmatpush.msra.mxu0 %v597
    %661 = vmatpush.msra.mxu0 %v593
    %662 = vmatpush.msra.mxu0 %v589
    %663 = vmatpush.msra.mxu0 %v585
    %664 = vmatpush.msra.mxu0 %v581
    %665 = vmatpush.msra.mxu0 %v577
    %666 = vmatpush.msra.mxu0 %v573
    %667 = vmatpush.msra.mxu0 %v569
    %668 = vmatmul.f32.gmra.mxu0 0.0
    %v669 = vpop.f32.mrf.mxu0
    %v670 = vadd.f32 0.0, %v669
    %671 = vdwg.mxu0
    %672 = vmatpush.msra.mxu0 %v630
    %673 = vmatpush.msra.mxu0 %v626
    %674 = vmatpush.msra.mxu0 %v622
    %675 = vmatpush.msra.mxu0 %v618
    %676 = vmatpush.msra.mxu0 %v614
    %677 = vmatpush.msra.mxu0 %v610
    %678 = vmatpush.msra.mxu0 %v606
    %679 = vmatpush.msra.mxu0 %v602
    %680 = vmatpush.msra.mxu0 %v598
    %681 = vmatpush.msra.mxu0 %v594
    %682 = vmatpush.msra.mxu0 %v590
    %683 = vmatpush.msra.mxu0 %v586
    %684 = vmatpush.msra.mxu0 %v582
    %685 = vmatpush.msra.mxu0 %v578
    %686 = vmatpush.msra.mxu0 %v574
    %687 = vmatpush.msra.mxu0 %v570
    %688 = vmatmul.f32.gmra.mxu0 0.0
    %v689 = vpop.f32.mrf.mxu0
    %v690 = vadd.f32 0.0, %v689
    %691 = vdwg.mxu0
    %692 = vmatpush.msra.mxu0 %v631
    %693 = vmatpush.msra.mxu0 %v627
    %694 = vmatpush.msra.mxu0 %v623
    %695 = vmatpush.msra.mxu0 %v619
    %696 = vmatpush.msra.mxu0 %v615
    %697 = vmatpush.msra.mxu0 %v611
    %698 = vmatpush.msra.mxu0 %v607
    %699 = vmatpush.msra.mxu0 %v603
    %700 = vmatpush.msra.mxu0 %v599
    %701 = vmatpush.msra.mxu0 %v595
    %702 = vmatpush.msra.mxu0 %v591
    %703 = vmatpush.msra.mxu0 %v587
    %704 = vmatpush.msra.mxu0 %v583
    %705 = vmatpush.msra.mxu0 %v579
    %706 = vmatpush.msra.mxu0 %v575
    %707 = vmatpush.msra.mxu0 %v571
    %708 = vmatmul.f32.gmra.mxu0 0.0
    %v709 = vpop.f32.mrf.mxu0
    %v710 = vadd.f32 0.0, %v709
    %711 = vdwg.mxu0
    %v712 = vadd.f32 %v356, %v650
    %v713 = vadd.f32 %v425, %v670
    %v714 = vadd.f32 %v494, %v690
    %v715 = vadd.f32 %v563, %v710
    %v716 = vxor.u32 %v712, 2147483648
    %v717 = vmul.f32 %v716, 1.442695
    %v718 = vpow.pop %v717
    %v719 = vadd.f32 %v718, 1.0
    %v720 = vrcp.pop %v719
    %v721 = vmul.f32 %v719, %v720
    %v722 = vsub.f32 1.0, %v721
    %v723 = vmul.f32 %v720, %v722
    %v724 = vadd.f32 %v720, %v723
    %vm725 = vweird.f32 %v719
    %vm726 = vweird.f32 %v720
    %vm727 = vmor %vm725, %vm726
    %v728 = vsel %vm727, %v720, %v724
    %v729 = vand.u32 2147483647, %v719
    %vm730 = vcmp.eq.f32.partialorder %v729, 8.507059e+37
    %v731 = vand.u32 %v719, 2147483648
    %v732 = vor.u32 1.1754944e-38, %v731
    %v733 = vsel %vm730, %v732, %v728
    %v734 = vmul.f32 1.0, %v733
    %v735 = vxor.u32 %v713, 2147483648
    %v736 = vmul.f32 %v735, 1.442695
    %v737 = vpow.pop %v736
    %v738 = vadd.f32 %v737, 1.0
    %v739 = vrcp.pop %v738
    %v740 = vmul.f32 %v738, %v739
    %v741 = vsub.f32 1.0, %v740
    %v742 = vmul.f32 %v739, %v741
    %v743 = vadd.f32 %v739, %v742
    %vm744 = vweird.f32 %v738
    %vm745 = vweird.f32 %v739
    %vm746 = vmor %vm744, %vm745
    %v747 = vsel %vm746, %v739, %v743
    %v748 = vand.u32 2147483647, %v738
    %vm749 = vcmp.eq.f32.partialorder %v748, 8.507059e+37
    %v750 = vand.u32 %v738, 2147483648
    %v751 = vor.u32 1.1754944e-38, %v750
    %v752 = vsel %vm749, %v751, %v747
    %v753 = vmul.f32 1.0, %v752
    %v754 = vtanh.pop %v714
    %v755 = vxor.u32 %v715, 2147483648
    %v756 = vmul.f32 %v755, 1.442695
    %v757 = vpow.pop %v756
    %v758 = vadd.f32 %v757, 1.0
    %v759 = vrcp.pop %v758
    %v760 = vmul.f32 %v758, %v759
    %v761 = vsub.f32 1.0, %v760
    %v762 = vmul.f32 %v759, %v761
    %v763 = vadd.f32 %v759, %v762
    %vm764 = vweird.f32 %v758
    %vm765 = vweird.f32 %v759
    %vm766 = vmor %vm764, %vm765
    %v767 = vsel %vm766, %v759, %v763
    %v768 = vand.u32 2147483647, %v758
    %vm769 = vcmp.eq.f32.partialorder %v768, 8.507059e+37
    %v770 = vand.u32 %v758, 2147483648
    %v771 = vor.u32 1.1754944e-38, %v770
    %v772 = vsel %vm769, %v771, %v767
    %v773 = vmul.f32 1.0, %v772
    %v774 = vmul.f32 %v753, 0.0
    %v775 = vmul.f32 %v734, %v754
    %v776 = vadd.f32 %v774, %v775
    %v777 = vtanh.pop %v776
    %v778 = vmul.f32 %v773, %v777
    %779 = vst [vmem:[#allocation2] sm:$0x3] %v778
    %v780 = vld [vmem:[#allocation6] sm:$0xff]
    %v781 = vld [vmem:[#allocation6 + $0x8] sm:$0xff]
    %v782 = vld [vmem:[#allocation6 + $0x10] sm:$0xff]
    %v783 = vld [vmem:[#allocation6 + $0x18] sm:$0xff]
    %v784 = vld [vmem:[#allocation6 + $0x20] sm:$0xff]
    %v785 = vld [vmem:[#allocation6 + $0x28] sm:$0xff]
    %v786 = vld [vmem:[#allocation6 + $0x30] sm:$0xff]
    %v787 = vld [vmem:[#allocation6 + $0x38] sm:$0xff]
    %v788 = vld [vmem:[#allocation6 + $0x40] sm:$0xff]
    %v789 = vld [vmem:[#allocation6 + $0x48] sm:$0xff]
    %v790 = vld [vmem:[#allocation6 + $0x50] sm:$0xff]
    %v791 = vld [vmem:[#allocation6 + $0x58] sm:$0xff]
    %v792 = vld [vmem:[#allocation6 + $0x60] sm:$0xff]
    %v793 = vld [vmem:[#allocation6 + $0x68] sm:$0xff]
    %v794 = vld [vmem:[#allocation6 + $0x70] sm:$0xff]
    %v795 = vld [vmem:[#allocation6 + $0x78] sm:$0xff]
    %v796 = vld [vmem:[#allocation6 + $0x80] sm:$0xff]
    %v797 = vld [vmem:[#allocation6 + $0x88] sm:$0xff]
    %v798 = vld [vmem:[#allocation6 + $0x90] sm:$0xff]
    %v799 = vld [vmem:[#allocation6 + $0x98] sm:$0xff]
    %v800 = vld [vmem:[#allocation6 + $0xa0] sm:$0xff]
    %v801 = vld [vmem:[#allocation6 + $0xa8] sm:$0xff]
    %v802 = vld [vmem:[#allocation6 + $0xb0] sm:$0xff]
    %v803 = vld [vmem:[#allocation6 + $0xb8] sm:$0xff]
    %v804 = vld [vmem:[#allocation6 + $0xc0] sm:$0xff]
    %v805 = vld [vmem:[#allocation6 + $0xc8] sm:$0xff]
    %v806 = vld [vmem:[#allocation6 + $0xd0] sm:$0xff]
    %v807 = vld [vmem:[#allocation6 + $0xd8] sm:$0xff]
    %v808 = vld [vmem:[#allocation6 + $0xe0] sm:$0xff]
    %v809 = vld [vmem:[#allocation6 + $0xe8] sm:$0xff]
    %v810 = vld [vmem:[#allocation6 + $0xf0] sm:$0xff]
    %v811 = vld [vmem:[#allocation6 + $0xf8] sm:$0xff]
    %v812 = vld [vmem:[#allocation6 + $0x100] sm:$0xff]
    %v813 = vld [vmem:[#allocation6 + $0x108] sm:$0xff]
    %v814 = vld [vmem:[#allocation6 + $0x110] sm:$0xff]
    %v815 = vld [vmem:[#allocation6 + $0x118] sm:$0xff]
    %v816 = vld [vmem:[#allocation6 + $0x120] sm:$0xff]
    %v817 = vld [vmem:[#allocation6 + $0x128] sm:$0xff]
    %v818 = vld [vmem:[#allocation6 + $0x130] sm:$0xff]
    %v819 = vld [vmem:[#allocation6 + $0x138] sm:$0xff]
    %v820 = vld [vmem:[#allocation6 + $0x140] sm:$0xff]
    %v821 = vld [vmem:[#allocation6 + $0x148] sm:$0xff]
    %v822 = vld [vmem:[#allocation6 + $0x150] sm:$0xff]
    %v823 = vld [vmem:[#allocation6 + $0x158] sm:$0xff]
    %v824 = vld [vmem:[#allocation6 + $0x160] sm:$0xff]
    %v825 = vld [vmem:[#allocation6 + $0x168] sm:$0xff]
    %v826 = vld [vmem:[#allocation6 + $0x170] sm:$0xff]
    %v827 = vld [vmem:[#allocation6 + $0x178] sm:$0xff]
    %v828 = vld [vmem:[#allocation6 + $0x180] sm:$0xff]
    %v829 = vld [vmem:[#allocation6 + $0x188] sm:$0xff]
    %v830 = vld [vmem:[#allocation6 + $0x190] sm:$0xff]
    %v831 = vld [vmem:[#allocation6 + $0x198] sm:$0xff]
    %v832 = vld [vmem:[#allocation6 + $0x1a0] sm:$0xff]
    %v833 = vld [vmem:[#allocation6 + $0x1a8] sm:$0xff]
    %v834 = vld [vmem:[#allocation6 + $0x1b0] sm:$0xff]
    %v835 = vld [vmem:[#allocation6 + $0x1b8] sm:$0xff]
    %v836 = vld [vmem:[#allocation6 + $0x1c0] sm:$0xff]
    %v837 = vld [vmem:[#allocation6 + $0x1c8] sm:$0xff]
    %v838 = vld [vmem:[#allocation6 + $0x1d0] sm:$0xff]
    %v839 = vld [vmem:[#allocation6 + $0x1d8] sm:$0xff]
    %v840 = vld [vmem:[#allocation6 + $0x1e0] sm:$0xff]
    %v841 = vld [vmem:[#allocation6 + $0x1e8] sm:$0xff]
    %v842 = vld [vmem:[#allocation6 + $0x1f0] sm:$0xff]
    %v843 = vld [vmem:[#allocation6 + $0x1f8] sm:$0xff]
    %844 = vmatpush.msra.mxu0 %v840
    %845 = vmatpush.msra.mxu0 %v836
    %846 = vmatpush.msra.mxu0 %v832
    %847 = vmatpush.msra.mxu0 %v828
    %848 = vmatpush.msra.mxu0 %v824
    %849 = vmatpush.msra.mxu0 %v820
    %850 = vmatpush.msra.mxu0 %v816
    %851 = vmatpush.msra.mxu0 %v812
    %852 = vmatpush.msra.mxu0 %v808
    %853 = vmatpush.msra.mxu0 %v804
    %854 = vmatpush.msra.mxu0 %v800
    %855 = vmatpush.msra.mxu0 %v796
    %856 = vmatpush.msra.mxu0 %v792
    %857 = vmatpush.msra.mxu0 %v788
    %858 = vmatpush.msra.mxu0 %v784
    %859 = vmatpush.msra.mxu0 %v780
    %860 = vmatmul.f32.gmra.mxu0 %v778
    %v861 = vpop.f32.mrf.mxu0
    %v862 = vadd.f32 0.0, %v861
    %863 = vdwg.mxu0
    %864 = vmatpush.msra.mxu0 %v841
    %865 = vmatpush.msra.mxu0 %v837
    %866 = vmatpush.msra.mxu0 %v833
    %867 = vmatpush.msra.mxu0 %v829
    %868 = vmatpush.msra.mxu0 %v825
    %869 = vmatpush.msra.mxu0 %v821
    %870 = vmatpush.msra.mxu0 %v817
    %871 = vmatpush.msra.mxu0 %v813
    %872 = vmatpush.msra.mxu0 %v809
    %873 = vmatpush.msra.mxu0 %v805
    %874 = vmatpush.msra.mxu0 %v801
    %875 = vmatpush.msra.mxu0 %v797
    %876 = vmatpush.msra.mxu0 %v793
    %877 = vmatpush.msra.mxu0 %v789
    %878 = vmatpush.msra.mxu0 %v785
    %879 = vmatpush.msra.mxu0 %v781
    %880 = vmatmul.f32.gmra.mxu0 %v778
    %v881 = vpop.f32.mrf.mxu0
    %v882 = vadd.f32 0.0, %v881
    %883 = vdwg.mxu0
    %884 = vmatpush.msra.mxu0 %v842
    %885 = vmatpush.msra.mxu0 %v838
    %886 = vmatpush.msra.mxu0 %v834
    %887 = vmatpush.msra.mxu0 %v830
    %888 = vmatpush.msra.mxu0 %v826
    %889 = vmatpush.msra.mxu0 %v822
    %890 = vmatpush.msra.mxu0 %v818
    %891 = vmatpush.msra.mxu0 %v814
    %892 = vmatpush.msra.mxu0 %v810
    %893 = vmatpush.msra.mxu0 %v806
    %894 = vmatpush.msra.mxu0 %v802
    %895 = vmatpush.msra.mxu0 %v798
    %896 = vmatpush.msra.mxu0 %v794
    %897 = vmatpush.msra.mxu0 %v790
    %898 = vmatpush.msra.mxu0 %v786
    %899 = vmatpush.msra.mxu0 %v782
    %900 = vmatmul.f32.gmra.mxu0 %v778
    %v901 = vpop.f32.mrf.mxu0
    %v902 = vadd.f32 0.0, %v901
    %903 = vdwg.mxu0
    %904 = vmatpush.msra.mxu0 %v843
    %905 = vmatpush.msra.mxu0 %v839
    %906 = vmatpush.msra.mxu0 %v835
    %907 = vmatpush.msra.mxu0 %v831
    %908 = vmatpush.msra.mxu0 %v827
    %909 = vmatpush.msra.mxu0 %v823
    %910 = vmatpush.msra.mxu0 %v819
    %911 = vmatpush.msra.mxu0 %v815
    %912 = vmatpush.msra.mxu0 %v811
    %913 = vmatpush.msra.mxu0 %v807
    %914 = vmatpush.msra.mxu0 %v803
    %915 = vmatpush.msra.mxu0 %v799
    %916 = vmatpush.msra.mxu0 %v795
    %917 = vmatpush.msra.mxu0 %v791
    %918 = vmatpush.msra.mxu0 %v787
    %919 = vmatpush.msra.mxu0 %v783
    %920 = vmatmul.f32.gmra.mxu0 %v778
    %v921 = vpop.f32.mrf.mxu0
    %v922 = vadd.f32 0.0, %v921
    %923 = vdwg.mxu0
    %v928 = vrot.slane %v862, 6
    %v929 = vrot.slane %v882, 6
    %v930 = vrot.slane %v902, 6
    %v931 = vrot.slane %v922, 6
    %v936 = vadd.f32 %v356, %v928
    %v937 = vadd.f32 %v425, %v929
    %v938 = vadd.f32 %v494, %v930
    %v939 = vadd.f32 %v563, %v931
    %v940 = vxor.u32 %v936, 2147483648
    %v941 = vmul.f32 %v940, 1.442695
    %v942 = vpow.pop %v941
    %v943 = vadd.f32 %v942, 1.0
    %v944 = vrcp.pop %v943
    %v945 = vmul.f32 %v943, %v944
    %v946 = vsub.f32 1.0, %v945
    %v947 = vmul.f32 %v944, %v946
    %v948 = vadd.f32 %v944, %v947
    %vm949 = vweird.f32 %v943
    %vm950 = vweird.f32 %v944
    %vm951 = vmor %vm949, %vm950
    %v952 = vsel %vm951, %v944, %v948
    %v953 = vand.u32 2147483647, %v943
    %vm954 = vcmp.eq.f32.partialorder %v953, 8.507059e+37
    %v955 = vand.u32 %v943, 2147483648
    %v956 = vor.u32 1.1754944e-38, %v955
    %v957 = vsel %vm954, %v956, %v952
    %v958 = vmul.f32 1.0, %v957
    %v959 = vxor.u32 %v937, 2147483648
    %v960 = vmul.f32 %v959, 1.442695
    %v961 = vpow.pop %v960
    %v962 = vadd.f32 %v961, 1.0
    %v963 = vrcp.pop %v962
    %v964 = vmul.f32 %v962, %v963
    %v965 = vsub.f32 1.0, %v964
    %v966 = vmul.f32 %v963, %v965
    %v967 = vadd.f32 %v963, %v966
    %vm968 = vweird.f32 %v962
    %vm969 = vweird.f32 %v963
    %vm970 = vmor %vm968, %vm969
    %v971 = vsel %vm970, %v963, %v967
    %v972 = vand.u32 2147483647, %v962
    %vm973 = vcmp.eq.f32.partialorder %v972, 8.507059e+37
    %v974 = vand.u32 %v962, 2147483648
    %v975 = vor.u32 1.1754944e-38, %v974
    %v976 = vsel %vm973, %v975, %v971
    %v977 = vmul.f32 1.0, %v976
    %v978 = vtanh.pop %v938
    %v979 = vxor.u32 %v939, 2147483648
    %v980 = vmul.f32 %v979, 1.442695
    %v981 = vpow.pop %v980
    %v982 = vadd.f32 %v981, 1.0
    %v983 = vrcp.pop %v982
    %v984 = vmul.f32 %v982, %v983
    %v985 = vsub.f32 1.0, %v984
    %v986 = vmul.f32 %v983, %v985
    %v987 = vadd.f32 %v983, %v986
    %vm988 = vweird.f32 %v982
    %vm989 = vweird.f32 %v983
    %vm990 = vmor %vm988, %vm989
    %v991 = vsel %vm990, %v983, %v987
    %v992 = vand.u32 2147483647, %v982
    %vm993 = vcmp.eq.f32.partialorder %v992, 8.507059e+37
    %v994 = vand.u32 %v982, 2147483648
    %v995 = vor.u32 1.1754944e-38, %v994
    %v996 = vsel %vm993, %v995, %v991
    %v997 = vmul.f32 1.0, %v996
    %v999 = vrot.slane %v776, 6
    %v1001 = vmul.f32 %v977, %v999
    %v1002 = vmul.f32 %v958, %v978
    %v1003 = vadd.f32 %v1001, %v1002
    %v1004 = vtanh.pop %v1003
    %v1005 = vmul.f32 %v997, %v1004
    %1006 = vst [vmem:[#allocation2] sm:$0xc] %v1005
    %v1007 = vld [vmem:[#allocation6] sm:$0xff]
    %v1008 = vld [vmem:[#allocation6 + $0x8] sm:$0xff]
    %v1009 = vld [vmem:[#allocation6 + $0x10] sm:$0xff]
    %v1010 = vld [vmem:[#allocation6 + $0x18] sm:$0xff]
    %v1011 = vld [vmem:[#allocation6 + $0x20] sm:$0xff]
    %v1012 = vld [vmem:[#allocation6 + $0x28] sm:$0xff]
    %v1013 = vld [vmem:[#allocation6 + $0x30] sm:$0xff]
    %v1014 = vld [vmem:[#allocation6 + $0x38] sm:$0xff]
    %v1015 = vld [vmem:[#allocation6 + $0x40] sm:$0xff]
    %v1016 = vld [vmem:[#allocation6 + $0x48] sm:$0xff]
    %v1017 = vld [vmem:[#allocation6 + $0x50] sm:$0xff]
    %v1018 = vld [vmem:[#allocation6 + $0x58] sm:$0xff]
    %v1019 = vld [vmem:[#allocation6 + $0x60] sm:$0xff]
    %v1020 = vld [vmem:[#allocation6 + $0x68] sm:$0xff]
    %v1021 = vld [vmem:[#allocation6 + $0x70] sm:$0xff]
    %v1022 = vld [vmem:[#allocation6 + $0x78] sm:$0xff]
    %v1023 = vld [vmem:[#allocation6 + $0x80] sm:$0xff]
    %v1024 = vld [vmem:[#allocation6 + $0x88] sm:$0xff]
    %v1025 = vld [vmem:[#allocation6 + $0x90] sm:$0xff]
    %v1026 = vld [vmem:[#allocation6 + $0x98] sm:$0xff]
    %v1027 = vld [vmem:[#allocation6 + $0xa0] sm:$0xff]
    %v1028 = vld [vmem:[#allocation6 + $0xa8] sm:$0xff]
    %v1029 = vld [vmem:[#allocation6 + $0xb0] sm:$0xff]
    %v1030 = vld [vmem:[#allocation6 + $0xb8] sm:$0xff]
    %v1031 = vld [vmem:[#allocation6 + $0xc0] sm:$0xff]
    %v1032 = vld [vmem:[#allocation6 + $0xc8] sm:$0xff]
    %v1033 = vld [vmem:[#allocation6 + $0xd0] sm:$0xff]
    %v1034 = vld [vmem:[#allocation6 + $0xd8] sm:$0xff]
    %v1035 = vld [vmem:[#allocation6 + $0xe0] sm:$0xff]
    %v1036 = vld [vmem:[#allocation6 + $0xe8] sm:$0xff]
    %v1037 = vld [vmem:[#allocation6 + $0xf0] sm:$0xff]
    %v1038 = vld [vmem:[#allocation6 + $0xf8] sm:$0xff]
    %v1039 = vld [vmem:[#allocation6 + $0x100] sm:$0xff]
    %v1040 = vld [vmem:[#allocation6 + $0x108] sm:$0xff]
    %v1041 = vld [vmem:[#allocation6 + $0x110] sm:$0xff]
    %v1042 = vld [vmem:[#allocation6 + $0x118] sm:$0xff]
    %v1043 = vld [vmem:[#allocation6 + $0x120] sm:$0xff]
    %v1044 = vld [vmem:[#allocation6 + $0x128] sm:$0xff]
    %v1045 = vld [vmem:[#allocation6 + $0x130] sm:$0xff]
    %v1046 = vld [vmem:[#allocation6 + $0x138] sm:$0xff]
    %v1047 = vld [vmem:[#allocation6 + $0x140] sm:$0xff]
    %v1048 = vld [vmem:[#allocation6 + $0x148] sm:$0xff]
    %v1049 = vld [vmem:[#allocation6 + $0x150] sm:$0xff]
    %v1050 = vld [vmem:[#allocation6 + $0x158] sm:$0xff]
    %v1051 = vld [vmem:[#allocation6 + $0x160] sm:$0xff]
    %v1052 = vld [vmem:[#allocation6 + $0x168] sm:$0xff]
    %v1053 = vld [vmem:[#allocation6 + $0x170] sm:$0xff]
    %v1054 = vld [vmem:[#allocation6 + $0x178] sm:$0xff]
    %v1055 = vld [vmem:[#allocation6 + $0x180] sm:$0xff]
    %v1056 = vld [vmem:[#allocation6 + $0x188] sm:$0xff]
    %v1057 = vld [vmem:[#allocation6 + $0x190] sm:$0xff]
    %v1058 = vld [vmem:[#allocation6 + $0x198] sm:$0xff]
    %v1059 = vld [vmem:[#allocation6 + $0x1a0] sm:$0xff]
    %v1060 = vld [vmem:[#allocation6 + $0x1a8] sm:$0xff]
    %v1061 = vld [vmem:[#allocation6 + $0x1b0] sm:$0xff]
    %v1062 = vld [vmem:[#allocation6 + $0x1b8] sm:$0xff]
    %v1063 = vld [vmem:[#allocation6 + $0x1c0] sm:$0xff]
    %v1064 = vld [vmem:[#allocation6 + $0x1c8] sm:$0xff]
    %v1065 = vld [vmem:[#allocation6 + $0x1d0] sm:$0xff]
    %v1066 = vld [vmem:[#allocation6 + $0x1d8] sm:$0xff]
    %v1067 = vld [vmem:[#allocation6 + $0x1e0] sm:$0xff]
    %v1068 = vld [vmem:[#allocation6 + $0x1e8] sm:$0xff]
    %v1069 = vld [vmem:[#allocation6 + $0x1f0] sm:$0xff]
    %v1070 = vld [vmem:[#allocation6 + $0x1f8] sm:$0xff]
    %v1072 = vrot.slane %v1005, 2
    %1074 = vmatpush.msra.mxu0 %v1067
    %1075 = vmatpush.msra.mxu0 %v1063
    %1076 = vmatpush.msra.mxu0 %v1059
    %1077 = vmatpush.msra.mxu0 %v1055
    %1078 = vmatpush.msra.mxu0 %v1051
    %1079 = vmatpush.msra.mxu0 %v1047
    %1080 = vmatpush.msra.mxu0 %v1043
    %1081 = vmatpush.msra.mxu0 %v1039
    %1082 = vmatpush.msra.mxu0 %v1035
    %1083 = vmatpush.msra.mxu0 %v1031
    %1084 = vmatpush.msra.mxu0 %v1027
    %1085 = vmatpush.msra.mxu0 %v1023
    %1086 = vmatpush.msra.mxu0 %v1019
    %1087 = vmatpush.msra.mxu0 %v1015
    %1088 = vmatpush.msra.mxu0 %v1011
    %1089 = vmatpush.msra.mxu0 %v1007
    %1090 = vmatmul.f32.gmra.mxu0 %v1072
    %v1091 = vpop.f32.mrf.mxu0
    %v1092 = vadd.f32 0.0, %v1091
    %1093 = vdwg.mxu0
    %1094 = vmatpush.msra.mxu0 %v1068
    %1095 = vmatpush.msra.mxu0 %v1064
    %1096 = vmatpush.msra.mxu0 %v1060
    %1097 = vmatpush.msra.mxu0 %v1056
    %1098 = vmatpush.msra.mxu0 %v1052
    %1099 = vmatpush.msra.mxu0 %v1048
    %1100 = vmatpush.msra.mxu0 %v1044
    %1101 = vmatpush.msra.mxu0 %v1040
    %1102 = vmatpush.msra.mxu0 %v1036
    %1103 = vmatpush.msra.mxu0 %v1032
    %1104 = vmatpush.msra.mxu0 %v1028
    %1105 = vmatpush.msra.mxu0 %v1024
    %1106 = vmatpush.msra.mxu0 %v1020
    %1107 = vmatpush.msra.mxu0 %v1016
    %1108 = vmatpush.msra.mxu0 %v1012
    %1109 = vmatpush.msra.mxu0 %v1008
    %1110 = vmatmul.f32.gmra.mxu0 %v1072
    %v1111 = vpop.f32.mrf.mxu0
    %v1112 = vadd.f32 0.0, %v1111
    %1113 = vdwg.mxu0
    %1114 = vmatpush.msra.mxu0 %v1069
    %1115 = vmatpush.msra.mxu0 %v1065
    %1116 = vmatpush.msra.mxu0 %v1061
    %1117 = vmatpush.msra.mxu0 %v1057
    %1118 = vmatpush.msra.mxu0 %v1053
    %1119 = vmatpush.msra.mxu0 %v1049
    %1120 = vmatpush.msra.mxu0 %v1045
    %1121 = vmatpush.msra.mxu0 %v1041
    %1122 = vmatpush.msra.mxu0 %v1037
    %1123 = vmatpush.msra.mxu0 %v1033
    %1124 = vmatpush.msra.mxu0 %v1029
    %1125 = vmatpush.msra.mxu0 %v1025
    %1126 = vmatpush.msra.mxu0 %v1021
    %1127 = vmatpush.msra.mxu0 %v1017
    %1128 = vmatpush.msra.mxu0 %v1013
    %1129 = vmatpush.msra.mxu0 %v1009
    %1130 = vmatmul.f32.gmra.mxu0 %v1072
    %v1131 = vpop.f32.mrf.mxu0
    %v1132 = vadd.f32 0.0, %v1131
    %1133 = vdwg.mxu0
    %1134 = vmatpush.msra.mxu0 %v1070
    %1135 = vmatpush.msra.mxu0 %v1066
    %1136 = vmatpush.msra.mxu0 %v1062
    %1137 = vmatpush.msra.mxu0 %v1058
    %1138 = vmatpush.msra.mxu0 %v1054
    %1139 = vmatpush.msra.mxu0 %v1050
    %1140 = vmatpush.msra.mxu0 %v1046
    %1141 = vmatpush.msra.mxu0 %v1042
    %1142 = vmatpush.msra.mxu0 %v1038
    %1143 = vmatpush.msra.mxu0 %v1034
    %1144 = vmatpush.msra.mxu0 %v1030
    %1145 = vmatpush.msra.mxu0 %v1026
    %1146 = vmatpush.msra.mxu0 %v1022
    %1147 = vmatpush.msra.mxu0 %v1018
    %1148 = vmatpush.msra.mxu0 %v1014
    %1149 = vmatpush.msra.mxu0 %v1010
    %1150 = vmatmul.f32.gmra.mxu0 %v1072
    %v1151 = vpop.f32.mrf.mxu0
    %v1152 = vadd.f32 0.0, %v1151
    %1153 = vdwg.mxu0
    %v1158 = vrot.slane %v1092, 4
    %v1159 = vrot.slane %v1112, 4
    %v1160 = vrot.slane %v1132, 4
    %v1161 = vrot.slane %v1152, 4
    %v1166 = vadd.f32 %v356, %v1158
    %v1167 = vadd.f32 %v425, %v1159
    %v1168 = vadd.f32 %v494, %v1160
    %v1169 = vadd.f32 %v563, %v1161
    %v1170 = vxor.u32 %v1166, 2147483648
    %v1171 = vmul.f32 %v1170, 1.442695
    %v1172 = vpow.pop %v1171
    %v1173 = vadd.f32 %v1172, 1.0
    %v1174 = vrcp.pop %v1173
    %v1175 = vmul.f32 %v1173, %v1174
    %v1176 = vsub.f32 1.0, %v1175
    %v1177 = vmul.f32 %v1174, %v1176
    %v1178 = vadd.f32 %v1174, %v1177
    %vm1179 = vweird.f32 %v1173
    %vm1180 = vweird.f32 %v1174
    %vm1181 = vmor %vm1179, %vm1180
    %v1182 = vsel %vm1181, %v1174, %v1178
    %v1183 = vand.u32 2147483647, %v1173
    %vm1184 = vcmp.eq.f32.partialorder %v1183, 8.507059e+37
    %v1185 = vand.u32 %v1173, 2147483648
    %v1186 = vor.u32 1.1754944e-38, %v1185
    %v1187 = vsel %vm1184, %v1186, %v1182
    %v1188 = vmul.f32 1.0, %v1187
    %v1189 = vxor.u32 %v1167, 2147483648
    %v1190 = vmul.f32 %v1189, 1.442695
    %v1191 = vpow.pop %v1190
    %v1192 = vadd.f32 %v1191, 1.0
    %v1193 = vrcp.pop %v1192
    %v1194 = vmul.f32 %v1192, %v1193
    %v1195 = vsub.f32 1.0, %v1194
    %v1196 = vmul.f32 %v1193, %v1195
    %v1197 = vadd.f32 %v1193, %v1196
    %vm1198 = vweird.f32 %v1192
    %vm1199 = vweird.f32 %v1193
    %vm1200 = vmor %vm1198, %vm1199
    %v1201 = vsel %vm1200, %v1193, %v1197
    %v1202 = vand.u32 2147483647, %v1192
    %vm1203 = vcmp.eq.f32.partialorder %v1202, 8.507059e+37
    %v1204 = vand.u32 %v1192, 2147483648
    %v1205 = vor.u32 1.1754944e-38, %v1204
    %v1206 = vsel %vm1203, %v1205, %v1201
    %v1207 = vmul.f32 1.0, %v1206
    %v1208 = vtanh.pop %v1168
    %v1209 = vxor.u32 %v1169, 2147483648
    %v1210 = vmul.f32 %v1209, 1.442695
    %v1211 = vpow.pop %v1210
    %v1212 = vadd.f32 %v1211, 1.0
    %v1213 = vrcp.pop %v1212
    %v1214 = vmul.f32 %v1212, %v1213
    %v1215 = vsub.f32 1.0, %v1214
    %v1216 = vmul.f32 %v1213, %v1215
    %v1217 = vadd.f32 %v1213, %v1216
    %vm1218 = vweird.f32 %v1212
    %vm1219 = vweird.f32 %v1213
    %vm1220 = vmor %vm1218, %vm1219
    %v1221 = vsel %vm1220, %v1213, %v1217
    %v1222 = vand.u32 2147483647, %v1212
    %vm1223 = vcmp.eq.f32.partialorder %v1222, 8.507059e+37
    %v1224 = vand.u32 %v1212, 2147483648
    %v1225 = vor.u32 1.1754944e-38, %v1224
    %v1226 = vsel %vm1223, %v1225, %v1221
    %v1227 = vmul.f32 1.0, %v1226
    %v1229 = vrot.slane %v1003, 6
    %v1231 = vmul.f32 %v1207, %v1229
    %v1232 = vmul.f32 %v1188, %v1208
    %v1233 = vadd.f32 %v1231, %v1232
    %v1234 = vtanh.pop %v1233
    %v1235 = vmul.f32 %v1227, %v1234
    %1236 = vst [vmem:[#allocation2] sm:$0x30] %v1235
    %v1237 = vld [vmem:[#allocation6] sm:$0xff]
    %v1238 = vld [vmem:[#allocation6 + $0x8] sm:$0xff]
    %v1239 = vld [vmem:[#allocation6 + $0x10] sm:$0xff]
    %v1240 = vld [vmem:[#allocation6 + $0x18] sm:$0xff]
    %v1241 = vld [vmem:[#allocation6 + $0x20] sm:$0xff]
    %v1242 = vld [vmem:[#allocation6 + $0x28] sm:$0xff]
    %v1243 = vld [vmem:[#allocation6 + $0x30] sm:$0xff]
    %v1244 = vld [vmem:[#allocation6 + $0x38] sm:$0xff]
    %v1245 = vld [vmem:[#allocation6 + $0x40] sm:$0xff]
    %v1246 = vld [vmem:[#allocation6 + $0x48] sm:$0xff]
    %v1247 = vld [vmem:[#allocation6 + $0x50] sm:$0xff]
    %v1248 = vld [vmem:[#allocation6 + $0x58] sm:$0xff]
    %v1249 = vld [vmem:[#allocation6 + $0x60] sm:$0xff]
    %v1250 = vld [vmem:[#allocation6 + $0x68] sm:$0xff]
    %v1251 = vld [vmem:[#allocation6 + $0x70] sm:$0xff]
    %v1252 = vld [vmem:[#allocation6 + $0x78] sm:$0xff]
    %v1253 = vld [vmem:[#allocation6 + $0x80] sm:$0xff]
    %v1254 = vld [vmem:[#allocation6 + $0x88] sm:$0xff]
    %v1255 = vld [vmem:[#allocation6 + $0x90] sm:$0xff]
    %v1256 = vld [vmem:[#allocation6 + $0x98] sm:$0xff]
    %v1257 = vld [vmem:[#allocation6 + $0xa0] sm:$0xff]
    %v1258 = vld [vmem:[#allocation6 + $0xa8] sm:$0xff]
    %v1259 = vld [vmem:[#allocation6 + $0xb0] sm:$0xff]
    %v1260 = vld [vmem:[#allocation6 + $0xb8] sm:$0xff]
    %v1261 = vld [vmem:[#allocation6 + $0xc0] sm:$0xff]
    %v1262 = vld [vmem:[#allocation6 + $0xc8] sm:$0xff]
    %v1263 = vld [vmem:[#allocation6 + $0xd0] sm:$0xff]
    %v1264 = vld [vmem:[#allocation6 + $0xd8] sm:$0xff]
    %v1265 = vld [vmem:[#allocation6 + $0xe0] sm:$0xff]
    %v1266 = vld [vmem:[#allocation6 + $0xe8] sm:$0xff]
    %v1267 = vld [vmem:[#allocation6 + $0xf0] sm:$0xff]
    %v1268 = vld [vmem:[#allocation6 + $0xf8] sm:$0xff]
    %v1269 = vld [vmem:[#allocation6 + $0x100] sm:$0xff]
    %v1270 = vld [vmem:[#allocation6 + $0x108] sm:$0xff]
    %v1271 = vld [vmem:[#allocation6 + $0x110] sm:$0xff]
    %v1272 = vld [vmem:[#allocation6 + $0x118] sm:$0xff]
    %v1273 = vld [vmem:[#allocation6 + $0x120] sm:$0xff]
    %v1274 = vld [vmem:[#allocation6 + $0x128] sm:$0xff]
    %v1275 = vld [vmem:[#allocation6 + $0x130] sm:$0xff]
    %v1276 = vld [vmem:[#allocation6 + $0x138] sm:$0xff]
    %v1277 = vld [vmem:[#allocation6 + $0x140] sm:$0xff]
    %v1278 = vld [vmem:[#allocation6 + $0x148] sm:$0xff]
    %v1279 = vld [vmem:[#allocation6 + $0x150] sm:$0xff]
    %v1280 = vld [vmem:[#allocation6 + $0x158] sm:$0xff]
    %v1281 = vld [vmem:[#allocation6 + $0x160] sm:$0xff]
    %v1282 = vld [vmem:[#allocation6 + $0x168] sm:$0xff]
    %v1283 = vld [vmem:[#allocation6 + $0x170] sm:$0xff]
    %v1284 = vld [vmem:[#allocation6 + $0x178] sm:$0xff]
    %v1285 = vld [vmem:[#allocation6 + $0x180] sm:$0xff]
    %v1286 = vld [vmem:[#allocation6 + $0x188] sm:$0xff]
    %v1287 = vld [vmem:[#allocation6 + $0x190] sm:$0xff]
    %v1288 = vld [vmem:[#allocation6 + $0x198] sm:$0xff]
    %v1289 = vld [vmem:[#allocation6 + $0x1a0] sm:$0xff]
    %v1290 = vld [vmem:[#allocation6 + $0x1a8] sm:$0xff]
    %v1291 = vld [vmem:[#allocation6 + $0x1b0] sm:$0xff]
    %v1292 = vld [vmem:[#allocation6 + $0x1b8] sm:$0xff]
    %v1293 = vld [vmem:[#allocation6 + $0x1c0] sm:$0xff]
    %v1294 = vld [vmem:[#allocation6 + $0x1c8] sm:$0xff]
    %v1295 = vld [vmem:[#allocation6 + $0x1d0] sm:$0xff]
    %v1296 = vld [vmem:[#allocation6 + $0x1d8] sm:$0xff]
    %v1297 = vld [vmem:[#allocation6 + $0x1e0] sm:$0xff]
    %v1298 = vld [vmem:[#allocation6 + $0x1e8] sm:$0xff]
    %v1299 = vld [vmem:[#allocation6 + $0x1f0] sm:$0xff]
    %v1300 = vld [vmem:[#allocation6 + $0x1f8] sm:$0xff]
    %v1302 = vrot.slane %v1235, 4
    %1304 = vmatpush.msra.mxu0 %v1297
    %1305 = vmatpush.msra.mxu0 %v1293
    %1306 = vmatpush.msra.mxu0 %v1289
    %1307 = vmatpush.msra.mxu0 %v1285
    %1308 = vmatpush.msra.mxu0 %v1281
    %1309 = vmatpush.msra.mxu0 %v1277
    %1310 = vmatpush.msra.mxu0 %v1273
    %1311 = vmatpush.msra.mxu0 %v1269
    %1312 = vmatpush.msra.mxu0 %v1265
    %1313 = vmatpush.msra.mxu0 %v1261
    %1314 = vmatpush.msra.mxu0 %v1257
    %1315 = vmatpush.msra.mxu0 %v1253
    %1316 = vmatpush.msra.mxu0 %v1249
    %1317 = vmatpush.msra.mxu0 %v1245
    %1318 = vmatpush.msra.mxu0 %v1241
    %1319 = vmatpush.msra.mxu0 %v1237
    %1320 = vmatmul.f32.gmra.mxu0 %v1302
    %v1321 = vpop.f32.mrf.mxu0
    %v1322 = vadd.f32 0.0, %v1321
    %1323 = vdwg.mxu0
    %1324 = vmatpush.msra.mxu0 %v1298
    %1325 = vmatpush.msra.mxu0 %v1294
    %1326 = vmatpush.msra.mxu0 %v1290
    %1327 = vmatpush.msra.mxu0 %v1286
    %1328 = vmatpush.msra.mxu0 %v1282
    %1329 = vmatpush.msra.mxu0 %v1278
    %1330 = vmatpush.msra.mxu0 %v1274
    %1331 = vmatpush.msra.mxu0 %v1270
    %1332 = vmatpush.msra.mxu0 %v1266
    %1333 = vmatpush.msra.mxu0 %v1262
    %1334 = vmatpush.msra.mxu0 %v1258
    %1335 = vmatpush.msra.mxu0 %v1254
    %1336 = vmatpush.msra.mxu0 %v1250
    %1337 = vmatpush.msra.mxu0 %v1246
    %1338 = vmatpush.msra.mxu0 %v1242
    %1339 = vmatpush.msra.mxu0 %v1238
    %1340 = vmatmul.f32.gmra.mxu0 %v1302
    %v1341 = vpop.f32.mrf.mxu0
    %v1342 = vadd.f32 0.0, %v1341
    %1343 = vdwg.mxu0
    %1344 = vmatpush.msra.mxu0 %v1299
    %1345 = vmatpush.msra.mxu0 %v1295
    %1346 = vmatpush.msra.mxu0 %v1291
    %1347 = vmatpush.msra.mxu0 %v1287
    %1348 = vmatpush.msra.mxu0 %v1283
    %1349 = vmatpush.msra.mxu0 %v1279
    %1350 = vmatpush.msra.mxu0 %v1275
    %1351 = vmatpush.msra.mxu0 %v1271
    %1352 = vmatpush.msra.mxu0 %v1267
    %1353 = vmatpush.msra.mxu0 %v1263
    %1354 = vmatpush.msra.mxu0 %v1259
    %1355 = vmatpush.msra.mxu0 %v1255
    %1356 = vmatpush.msra.mxu0 %v1251
    %1357 = vmatpush.msra.mxu0 %v1247
    %1358 = vmatpush.msra.mxu0 %v1243
    %1359 = vmatpush.msra.mxu0 %v1239
    %1360 = vmatmul.f32.gmra.mxu0 %v1302
    %v1361 = vpop.f32.mrf.mxu0
    %v1362 = vadd.f32 0.0, %v1361
    %1363 = vdwg.mxu0
    %1364 = vmatpush.msra.mxu0 %v1300
    %1365 = vmatpush.msra.mxu0 %v1296
    %1366 = vmatpush.msra.mxu0 %v1292
    %1367 = vmatpush.msra.mxu0 %v1288
    %1368 = vmatpush.msra.mxu0 %v1284
    %1369 = vmatpush.msra.mxu0 %v1280
    %1370 = vmatpush.msra.mxu0 %v1276
    %1371 = vmatpush.msra.mxu0 %v1272
    %1372 = vmatpush.msra.mxu0 %v1268
    %1373 = vmatpush.msra.mxu0 %v1264
    %1374 = vmatpush.msra.mxu0 %v1260
    %1375 = vmatpush.msra.mxu0 %v1256
    %1376 = vmatpush.msra.mxu0 %v1252
    %1377 = vmatpush.msra.mxu0 %v1248
    %1378 = vmatpush.msra.mxu0 %v1244
    %1379 = vmatpush.msra.mxu0 %v1240
    %1380 = vmatmul.f32.gmra.mxu0 %v1302
    %v1381 = vpop.f32.mrf.mxu0
    %v1382 = vadd.f32 0.0, %v1381
    %1383 = vdwg.mxu0
    %v1388 = vrot.slane %v1322, 2
    %v1389 = vrot.slane %v1342, 2
    %v1390 = vrot.slane %v1362, 2
    %v1391 = vrot.slane %v1382, 2
    %v1396 = vadd.f32 %v356, %v1388
    %v1397 = vadd.f32 %v425, %v1389
    %v1398 = vadd.f32 %v494, %v1390
    %v1399 = vadd.f32 %v563, %v1391
    %v1400 = vxor.u32 %v1396, 2147483648
    %v1401 = vmul.f32 %v1400, 1.442695
    %v1402 = vpow.pop %v1401
    %v1403 = vadd.f32 %v1402, 1.0
    %v1404 = vrcp.pop %v1403
    %v1405 = vmul.f32 %v1403, %v1404
    %v1406 = vsub.f32 1.0, %v1405
    %v1407 = vmul.f32 %v1404, %v1406
    %v1408 = vadd.f32 %v1404, %v1407
    %vm1409 = vweird.f32 %v1403
    %vm1410 = vweird.f32 %v1404
    %vm1411 = vmor %vm1409, %vm1410
    %v1412 = vsel %vm1411, %v1404, %v1408
    %v1413 = vand.u32 2147483647, %v1403
    %vm1414 = vcmp.eq.f32.partialorder %v1413, 8.507059e+37
    %v1415 = vand.u32 %v1403, 2147483648
    %v1416 = vor.u32 1.1754944e-38, %v1415
    %v1417 = vsel %vm1414, %v1416, %v1412
    %v1418 = vmul.f32 1.0, %v1417
    %v1419 = vxor.u32 %v1397, 2147483648
    %v1420 = vmul.f32 %v1419, 1.442695
    %v1421 = vpow.pop %v1420
    %v1422 = vadd.f32 %v1421, 1.0
    %v1423 = vrcp.pop %v1422
    %v1424 = vmul.f32 %v1422, %v1423
    %v1425 = vsub.f32 1.0, %v1424
    %v1426 = vmul.f32 %v1423, %v1425
    %v1427 = vadd.f32 %v1423, %v1426
    %vm1428 = vweird.f32 %v1422
    %vm1429 = vweird.f32 %v1423
    %vm1430 = vmor %vm1428, %vm1429
    %v1431 = vsel %vm1430, %v1423, %v1427
    %v1432 = vand.u32 2147483647, %v1422
    %vm1433 = vcmp.eq.f32.partialorder %v1432, 8.507059e+37
    %v1434 = vand.u32 %v1422, 2147483648
    %v1435 = vor.u32 1.1754944e-38, %v1434
    %v1436 = vsel %vm1433, %v1435, %v1431
    %v1437 = vmul.f32 1.0, %v1436
    %v1438 = vtanh.pop %v1398
    %v1439 = vxor.u32 %v1399, 2147483648
    %v1440 = vmul.f32 %v1439, 1.442695
    %v1441 = vpow.pop %v1440
    %v1442 = vadd.f32 %v1441, 1.0
    %v1443 = vrcp.pop %v1442
    %v1444 = vmul.f32 %v1442, %v1443
    %v1445 = vsub.f32 1.0, %v1444
    %v1446 = vmul.f32 %v1443, %v1445
    %v1447 = vadd.f32 %v1443, %v1446
    %vm1448 = vweird.f32 %v1442
    %vm1449 = vweird.f32 %v1443
    %vm1450 = vmor %vm1448, %vm1449
    %v1451 = vsel %vm1450, %v1443, %v1447
    %v1452 = vand.u32 2147483647, %v1442
    %vm1453 = vcmp.eq.f32.partialorder %v1452, 8.507059e+37
    %v1454 = vand.u32 %v1442, 2147483648
    %v1455 = vor.u32 1.1754944e-38, %v1454
    %v1456 = vsel %vm1453, %v1455, %v1451
    %v1457 = vmul.f32 1.0, %v1456
    %v1459 = vrot.slane %v1233, 6
    %v1461 = vmul.f32 %v1437, %v1459
    %v1462 = vmul.f32 %v1418, %v1438
    %v1463 = vadd.f32 %v1461, %v1462
    %v1464 = vtanh.pop %v1463
    %v1465 = vmul.f32 %v1457, %v1464
    %1466 = vst [vmem:[#allocation2] sm:$0xc0] %v1465
    %v1467 = vld [vmem:[#allocation6] sm:$0xff]
    %v1468 = vld [vmem:[#allocation6 + $0x8] sm:$0xff]
    %v1469 = vld [vmem:[#allocation6 + $0x10] sm:$0xff]
    %v1470 = vld [vmem:[#allocation6 + $0x18] sm:$0xff]
    %v1471 = vld [vmem:[#allocation6 + $0x20] sm:$0xff]
    %v1472 = vld [vmem:[#allocation6 + $0x28] sm:$0xff]
    %v1473 = vld [vmem:[#allocation6 + $0x30] sm:$0xff]
    %v1474 = vld [vmem:[#allocation6 + $0x38] sm:$0xff]
    %v1475 = vld [vmem:[#allocation6 + $0x40] sm:$0xff]
    %v1476 = vld [vmem:[#allocation6 + $0x48] sm:$0xff]
    %v1477 = vld [vmem:[#allocation6 + $0x50] sm:$0xff]
    %v1478 = vld [vmem:[#allocation6 + $0x58] sm:$0xff]
    %v1479 = vld [vmem:[#allocation6 + $0x60] sm:$0xff]
    %v1480 = vld [vmem:[#allocation6 + $0x68] sm:$0xff]
    %v1481 = vld [vmem:[#allocation6 + $0x70] sm:$0xff]
    %v1482 = vld [vmem:[#allocation6 + $0x78] sm:$0xff]
    %v1483 = vld [vmem:[#allocation6 + $0x80] sm:$0xff]
    %v1484 = vld [vmem:[#allocation6 + $0x88] sm:$0xff]
    %v1485 = vld [vmem:[#allocation6 + $0x90] sm:$0xff]
    %v1486 = vld [vmem:[#allocation6 + $0x98] sm:$0xff]
    %v1487 = vld [vmem:[#allocation6 + $0xa0] sm:$0xff]
    %v1488 = vld [vmem:[#allocation6 + $0xa8] sm:$0xff]
    %v1489 = vld [vmem:[#allocation6 + $0xb0] sm:$0xff]
    %v1490 = vld [vmem:[#allocation6 + $0xb8] sm:$0xff]
    %v1491 = vld [vmem:[#allocation6 + $0xc0] sm:$0xff]
    %v1492 = vld [vmem:[#allocation6 + $0xc8] sm:$0xff]
    %v1493 = vld [vmem:[#allocation6 + $0xd0] sm:$0xff]
    %v1494 = vld [vmem:[#allocation6 + $0xd8] sm:$0xff]
    %v1495 = vld [vmem:[#allocation6 + $0xe0] sm:$0xff]
    %v1496 = vld [vmem:[#allocation6 + $0xe8] sm:$0xff]
    %v1497 = vld [vmem:[#allocation6 + $0xf0] sm:$0xff]
    %v1498 = vld [vmem:[#allocation6 + $0xf8] sm:$0xff]
    %v1499 = vld [vmem:[#allocation6 + $0x100] sm:$0xff]
    %v1500 = vld [vmem:[#allocation6 + $0x108] sm:$0xff]
    %v1501 = vld [vmem:[#allocation6 + $0x110] sm:$0xff]
    %v1502 = vld [vmem:[#allocation6 + $0x118] sm:$0xff]
    %v1503 = vld [vmem:[#allocation6 + $0x120] sm:$0xff]
    %v1504 = vld [vmem:[#allocation6 + $0x128] sm:$0xff]
    %v1505 = vld [vmem:[#allocation6 + $0x130] sm:$0xff]
    %v1506 = vld [vmem:[#allocation6 + $0x138] sm:$0xff]
    %v1507 = vld [vmem:[#allocation6 + $0x140] sm:$0xff]
    %v1508 = vld [vmem:[#allocation6 + $0x148] sm:$0xff]
    %v1509 = vld [vmem:[#allocation6 + $0x150] sm:$0xff]
    %v1510 = vld [vmem:[#allocation6 + $0x158] sm:$0xff]
    %v1511 = vld [vmem:[#allocation6 + $0x160] sm:$0xff]
    %v1512 = vld [vmem:[#allocation6 + $0x168] sm:$0xff]
    %v1513 = vld [vmem:[#allocation6 + $0x170] sm:$0xff]
    %v1514 = vld [vmem:[#allocation6 + $0x178] sm:$0xff]
    %v1515 = vld [vmem:[#allocation6 + $0x180] sm:$0xff]
    %v1516 = vld [vmem:[#allocation6 + $0x188] sm:$0xff]
    %v1517 = vld [vmem:[#allocation6 + $0x190] sm:$0xff]
    %v1518 = vld [vmem:[#allocation6 + $0x198] sm:$0xff]
    %v1519 = vld [vmem:[#allocation6 + $0x1a0] sm:$0xff]
    %v1520 = vld [vmem:[#allocation6 + $0x1a8] sm:$0xff]
    %v1521 = vld [vmem:[#allocation6 + $0x1b0] sm:$0xff]
    %v1522 = vld [vmem:[#allocation6 + $0x1b8] sm:$0xff]
    %v1523 = vld [vmem:[#allocation6 + $0x1c0] sm:$0xff]
    %v1524 = vld [vmem:[#allocation6 + $0x1c8] sm:$0xff]
    %v1525 = vld [vmem:[#allocation6 + $0x1d0] sm:$0xff]
    %v1526 = vld [vmem:[#allocation6 + $0x1d8] sm:$0xff]
    %v1527 = vld [vmem:[#allocation6 + $0x1e0] sm:$0xff]
    %v1528 = vld [vmem:[#allocation6 + $0x1e8] sm:$0xff]
    %v1529 = vld [vmem:[#allocation6 + $0x1f0] sm:$0xff]
    %v1530 = vld [vmem:[#allocation6 + $0x1f8] sm:$0xff]
    %v1532 = vrot.slane %v1465, 6
    %1534 = vmatpush.msra.mxu0 %v1527
    %1535 = vmatpush.msra.mxu0 %v1523
    %1536 = vmatpush.msra.mxu0 %v1519
    %1537 = vmatpush.msra.mxu0 %v1515
    %1538 = vmatpush.msra.mxu0 %v1511
    %1539 = vmatpush.msra.mxu0 %v1507
    %1540 = vmatpush.msra.mxu0 %v1503
    %1541 = vmatpush.msra.mxu0 %v1499
    %1542 = vmatpush.msra.mxu0 %v1495
    %1543 = vmatpush.msra.mxu0 %v1491
    %1544 = vmatpush.msra.mxu0 %v1487
    %1545 = vmatpush.msra.mxu0 %v1483
    %1546 = vmatpush.msra.mxu0 %v1479
    %1547 = vmatpush.msra.mxu0 %v1475
    %1548 = vmatpush.msra.mxu0 %v1471
    %1549 = vmatpush.msra.mxu0 %v1467
    %1550 = vmatmul.f32.gmra.mxu0 %v1532
    %v1551 = vpop.f32.mrf.mxu0
    %v1552 = vadd.f32 0.0, %v1551
    %1553 = vdwg.mxu0
    %1554 = vmatpush.msra.mxu0 %v1528
    %1555 = vmatpush.msra.mxu0 %v1524
    %1556 = vmatpush.msra.mxu0 %v1520
    %1557 = vmatpush.msra.mxu0 %v1516
    %1558 = vmatpush.msra.mxu0 %v1512
    %1559 = vmatpush.msra.mxu0 %v1508
    %1560 = vmatpush.msra.mxu0 %v1504
    %1561 = vmatpush.msra.mxu0 %v1500
    %1562 = vmatpush.msra.mxu0 %v1496
    %1563 = vmatpush.msra.mxu0 %v1492
    %1564 = vmatpush.msra.mxu0 %v1488
    %1565 = vmatpush.msra.mxu0 %v1484
    %1566 = vmatpush.msra.mxu0 %v1480
    %1567 = vmatpush.msra.mxu0 %v1476
    %1568 = vmatpush.msra.mxu0 %v1472
    %1569 = vmatpush.msra.mxu0 %v1468
    %1570 = vmatmul.f32.gmra.mxu0 %v1532
    %v1571 = vpop.f32.mrf.mxu0
    %v1572 = vadd.f32 0.0, %v1571
    %1573 = vdwg.mxu0
    %1574 = vmatpush.msra.mxu0 %v1529
    %1575 = vmatpush.msra.mxu0 %v1525
    %1576 = vmatpush.msra.mxu0 %v1521
    %1577 = vmatpush.msra.mxu0 %v1517
    %1578 = vmatpush.msra.mxu0 %v1513
    %1579 = vmatpush.msra.mxu0 %v1509
    %1580 = vmatpush.msra.mxu0 %v1505
    %1581 = vmatpush.msra.mxu0 %v1501
    %1582 = vmatpush.msra.mxu0 %v1497
    %1583 = vmatpush.msra.mxu0 %v1493
    %1584 = vmatpush.msra.mxu0 %v1489
    %1585 = vmatpush.msra.mxu0 %v1485
    %1586 = vmatpush.msra.mxu0 %v1481
    %1587 = vmatpush.msra.mxu0 %v1477
    %1588 = vmatpush.msra.mxu0 %v1473
    %1589 = vmatpush.msra.mxu0 %v1469
    %1590 = vmatmul.f32.gmra.mxu0 %v1532
    %v1591 = vpop.f32.mrf.mxu0
    %v1592 = vadd.f32 0.0, %v1591
    %1593 = vdwg.mxu0
    %1594 = vmatpush.msra.mxu0 %v1530
    %1595 = vmatpush.msra.mxu0 %v1526
    %1596 = vmatpush.msra.mxu0 %v1522
    %1597 = vmatpush.msra.mxu0 %v1518
    %1598 = vmatpush.msra.mxu0 %v1514
    %1599 = vmatpush.msra.mxu0 %v1510
    %1600 = vmatpush.msra.mxu0 %v1506
    %1601 = vmatpush.msra.mxu0 %v1502
    %1602 = vmatpush.msra.mxu0 %v1498
    %1603 = vmatpush.msra.mxu0 %v1494
    %1604 = vmatpush.msra.mxu0 %v1490
    %1605 = vmatpush.msra.mxu0 %v1486
    %1606 = vmatpush.msra.mxu0 %v1482
    %1607 = vmatpush.msra.mxu0 %v1478
    %1608 = vmatpush.msra.mxu0 %v1474
    %1609 = vmatpush.msra.mxu0 %v1470
    %1610 = vmatmul.f32.gmra.mxu0 %v1532
    %v1611 = vpop.f32.mrf.mxu0
    %v1612 = vadd.f32 0.0, %v1611
    %1613 = vdwg.mxu0
    %v1614 = vadd.f32 %v359, %v1552
    %v1615 = vadd.f32 %v428, %v1572
    %v1616 = vadd.f32 %v497, %v1592
    %v1617 = vadd.f32 %v566, %v1612
    %v1618 = vxor.u32 %v1614, 2147483648
    %v1619 = vmul.f32 %v1618, 1.442695
    %v1620 = vpow.pop %v1619
    %v1621 = vadd.f32 %v1620, 1.0
    %v1622 = vrcp.pop %v1621
    %v1623 = vmul.f32 %v1621, %v1622
    %v1624 = vsub.f32 1.0, %v1623
    %v1625 = vmul.f32 %v1622, %v1624
    %v1626 = vadd.f32 %v1622, %v1625
    %vm1627 = vweird.f32 %v1621
    %vm1628 = vweird.f32 %v1622
    %vm1629 = vmor %vm1627, %vm1628
    %v1630 = vsel %vm1629, %v1622, %v1626
    %v1631 = vand.u32 2147483647, %v1621
    %vm1632 = vcmp.eq.f32.partialorder %v1631, 8.507059e+37
    %v1633 = vand.u32 %v1621, 2147483648
    %v1634 = vor.u32 1.1754944e-38, %v1633
    %v1635 = vsel %vm1632, %v1634, %v1630
    %v1636 = vmul.f32 1.0, %v1635
    %v1637 = vxor.u32 %v1615, 2147483648
    %v1638 = vmul.f32 %v1637, 1.442695
    %v1639 = vpow.pop %v1638
    %v1640 = vadd.f32 %v1639, 1.0
    %v1641 = vrcp.pop %v1640
    %v1642 = vmul.f32 %v1640, %v1641
    %v1643 = vsub.f32 1.0, %v1642
    %v1644 = vmul.f32 %v1641, %v1643
    %v1645 = vadd.f32 %v1641, %v1644
    %vm1646 = vweird.f32 %v1640
    %vm1647 = vweird.f32 %v1641
    %vm1648 = vmor %vm1646, %vm1647
    %v1649 = vsel %vm1648, %v1641, %v1645
    %v1650 = vand.u32 2147483647, %v1640
    %vm1651 = vcmp.eq.f32.partialorder %v1650, 8.507059e+37
    %v1652 = vand.u32 %v1640, 2147483648
    %v1653 = vor.u32 1.1754944e-38, %v1652
    %v1654 = vsel %vm1651, %v1653, %v1649
    %v1655 = vmul.f32 1.0, %v1654
    %v1656 = vtanh.pop %v1616
    %v1657 = vxor.u32 %v1617, 2147483648
    %v1658 = vmul.f32 %v1657, 1.442695
    %v1659 = vpow.pop %v1658
    %v1660 = vadd.f32 %v1659, 1.0
    %v1661 = vrcp.pop %v1660
    %v1662 = vmul.f32 %v1660, %v1661
    %v1663 = vsub.f32 1.0, %v1662
    %v1664 = vmul.f32 %v1661, %v1663
    %v1665 = vadd.f32 %v1661, %v1664
    %vm1666 = vweird.f32 %v1660
    %vm1667 = vweird.f32 %v1661
    %vm1668 = vmor %vm1666, %vm1667
    %v1669 = vsel %vm1668, %v1661, %v1665
    %v1670 = vand.u32 2147483647, %v1660
    %vm1671 = vcmp.eq.f32.partialorder %v1670, 8.507059e+37
    %v1672 = vand.u32 %v1660, 2147483648
    %v1673 = vor.u32 1.1754944e-38, %v1672
    %v1674 = vsel %vm1671, %v1673, %v1669
    %v1675 = vmul.f32 1.0, %v1674
    %v1677 = vrot.slane %v1463, 6
    %v1679 = vmul.f32 %v1655, %v1677
    %v1680 = vmul.f32 %v1636, %v1656
    %v1681 = vadd.f32 %v1679, %v1680
    %v1682 = vtanh.pop %v1681
    %v1683 = vmul.f32 %v1675, %v1682
    %1684 = vst [vmem:[#allocation2 + $0x8] sm:$0x3] %v1683
    %v1685 = vld [vmem:[#allocation6] sm:$0xff]
    %v1686 = vld [vmem:[#allocation6 + $0x8] sm:$0xff]
    %v1687 = vld [vmem:[#allocation6 + $0x10] sm:$0xff]
    %v1688 = vld [vmem:[#allocation6 + $0x18] sm:$0xff]
    %v1689 = vld [vmem:[#allocation6 + $0x20] sm:$0xff]
    %v1690 = vld [vmem:[#allocation6 + $0x28] sm:$0xff]
    %v1691 = vld [vmem:[#allocation6 + $0x30] sm:$0xff]
    %v1692 = vld [vmem:[#allocation6 + $0x38] sm:$0xff]
    %v1693 = vld [vmem:[#allocation6 + $0x40] sm:$0xff]
    %v1694 = vld [vmem:[#allocation6 + $0x48] sm:$0xff]
    %v1695 = vld [vmem:[#allocation6 + $0x50] sm:$0xff]
    %v1696 = vld [vmem:[#allocation6 + $0x58] sm:$0xff]
    %v1697 = vld [vmem:[#allocation6 + $0x60] sm:$0xff]
    %v1698 = vld [vmem:[#allocation6 + $0x68] sm:$0xff]
    %v1699 = vld [vmem:[#allocation6 + $0x70] sm:$0xff]
    %v1700 = vld [vmem:[#allocation6 + $0x78] sm:$0xff]
    %v1701 = vld [vmem:[#allocation6 + $0x80] sm:$0xff]
    %v1702 = vld [vmem:[#allocation6 + $0x88] sm:$0xff]
    %v1703 = vld [vmem:[#allocation6 + $0x90] sm:$0xff]
    %v1704 = vld [vmem:[#allocation6 + $0x98] sm:$0xff]
    %v1705 = vld [vmem:[#allocation6 + $0xa0] sm:$0xff]
    %v1706 = vld [vmem:[#allocation6 + $0xa8] sm:$0xff]
    %v1707 = vld [vmem:[#allocation6 + $0xb0] sm:$0xff]
    %v1708 = vld [vmem:[#allocation6 + $0xb8] sm:$0xff]
    %v1709 = vld [vmem:[#allocation6 + $0xc0] sm:$0xff]
    %v1710 = vld [vmem:[#allocation6 + $0xc8] sm:$0xff]
    %v1711 = vld [vmem:[#allocation6 + $0xd0] sm:$0xff]
    %v1712 = vld [vmem:[#allocation6 + $0xd8] sm:$0xff]
    %v1713 = vld [vmem:[#allocation6 + $0xe0] sm:$0xff]
    %v1714 = vld [vmem:[#allocation6 + $0xe8] sm:$0xff]
    %v1715 = vld [vmem:[#allocation6 + $0xf0] sm:$0xff]
    %v1716 = vld [vmem:[#allocation6 + $0xf8] sm:$0xff]
    %v1717 = vld [vmem:[#allocation6 + $0x100] sm:$0xff]
    %v1718 = vld [vmem:[#allocation6 + $0x108] sm:$0xff]
    %v1719 = vld [vmem:[#allocation6 + $0x110] sm:$0xff]
    %v1720 = vld [vmem:[#allocation6 + $0x118] sm:$0xff]
    %v1721 = vld [vmem:[#allocation6 + $0x120] sm:$0xff]
    %v1722 = vld [vmem:[#allocation6 + $0x128] sm:$0xff]
    %v1723 = vld [vmem:[#allocation6 + $0x130] sm:$0xff]
    %v1724 = vld [vmem:[#allocation6 + $0x138] sm:$0xff]
    %v1725 = vld [vmem:[#allocation6 + $0x140] sm:$0xff]
    %v1726 = vld [vmem:[#allocation6 + $0x148] sm:$0xff]
    %v1727 = vld [vmem:[#allocation6 + $0x150] sm:$0xff]
    %v1728 = vld [vmem:[#allocation6 + $0x158] sm:$0xff]
    %v1729 = vld [vmem:[#allocation6 + $0x160] sm:$0xff]
    %v1730 = vld [vmem:[#allocation6 + $0x168] sm:$0xff]
    %v1731 = vld [vmem:[#allocation6 + $0x170] sm:$0xff]
    %v1732 = vld [vmem:[#allocation6 + $0x178] sm:$0xff]
    %v1733 = vld [vmem:[#allocation6 + $0x180] sm:$0xff]
    %v1734 = vld [vmem:[#allocation6 + $0x188] sm:$0xff]
    %v1735 = vld [vmem:[#allocation6 + $0x190] sm:$0xff]
    %v1736 = vld [vmem:[#allocation6 + $0x198] sm:$0xff]
    %v1737 = vld [vmem:[#allocation6 + $0x1a0] sm:$0xff]
    %v1738 = vld [vmem:[#allocation6 + $0x1a8] sm:$0xff]
    %v1739 = vld [vmem:[#allocation6 + $0x1b0] sm:$0xff]
    %v1740 = vld [vmem:[#allocation6 + $0x1b8] sm:$0xff]
    %v1741 = vld [vmem:[#allocation6 + $0x1c0] sm:$0xff]
    %v1742 = vld [vmem:[#allocation6 + $0x1c8] sm:$0xff]
    %v1743 = vld [vmem:[#allocation6 + $0x1d0] sm:$0xff]
    %v1744 = vld [vmem:[#allocation6 + $0x1d8] sm:$0xff]
    %v1745 = vld [vmem:[#allocation6 + $0x1e0] sm:$0xff]
    %v1746 = vld [vmem:[#allocation6 + $0x1e8] sm:$0xff]
    %v1747 = vld [vmem:[#allocation6 + $0x1f0] sm:$0xff]
    %v1748 = vld [vmem:[#allocation6 + $0x1f8] sm:$0xff]
    %1749 = vmatpush.msra.mxu0 %v1745
    %1750 = vmatpush.msra.mxu0 %v1741
    %1751 = vmatpush.msra.mxu0 %v1737
    %1752 = vmatpush.msra.mxu0 %v1733
    %1753 = vmatpush.msra.mxu0 %v1729
    %1754 = vmatpush.msra.mxu0 %v1725
    %1755 = vmatpush.msra.mxu0 %v1721
    %1756 = vmatpush.msra.mxu0 %v1717
    %1757 = vmatpush.msra.mxu0 %v1713
    %1758 = vmatpush.msra.mxu0 %v1709
    %1759 = vmatpush.msra.mxu0 %v1705
    %1760 = vmatpush.msra.mxu0 %v1701
    %1761 = vmatpush.msra.mxu0 %v1697
    %1762 = vmatpush.msra.mxu0 %v1693
    %1763 = vmatpush.msra.mxu0 %v1689
    %1764 = vmatpush.msra.mxu0 %v1685
    %1765 = vmatmul.f32.gmra.mxu0 %v1683
    %v1766 = vpop.f32.mrf.mxu0
    %v1767 = vadd.f32 0.0, %v1766
    %1768 = vdwg.mxu0
    %1769 = vmatpush.msra.mxu0 %v1746
    %1770 = vmatpush.msra.mxu0 %v1742
    %1771 = vmatpush.msra.mxu0 %v1738
    %1772 = vmatpush.msra.mxu0 %v1734
    %1773 = vmatpush.msra.mxu0 %v1730
    %1774 = vmatpush.msra.mxu0 %v1726
    %1775 = vmatpush.msra.mxu0 %v1722
    %1776 = vmatpush.msra.mxu0 %v1718
    %1777 = vmatpush.msra.mxu0 %v1714
    %1778 = vmatpush.msra.mxu0 %v1710
    %1779 = vmatpush.msra.mxu0 %v1706
    %1780 = vmatpush.msra.mxu0 %v1702
    %1781 = vmatpush.msra.mxu0 %v1698
    %1782 = vmatpush.msra.mxu0 %v1694
    %1783 = vmatpush.msra.mxu0 %v1690
    %1784 = vmatpush.msra.mxu0 %v1686
    %1785 = vmatmul.f32.gmra.mxu0 %v1683
    %v1786 = vpop.f32.mrf.mxu0
    %v1787 = vadd.f32 0.0, %v1786
    %1788 = vdwg.mxu0
    %1789 = vmatpush.msra.mxu0 %v1747
    %1790 = vmatpush.msra.mxu0 %v1743
    %1791 = vmatpush.msra.mxu0 %v1739
    %1792 = vmatpush.msra.mxu0 %v1735
    %1793 = vmatpush.msra.mxu0 %v1731
    %1794 = vmatpush.msra.mxu0 %v1727
    %1795 = vmatpush.msra.mxu0 %v1723
    %1796 = vmatpush.msra.mxu0 %v1719
    %1797 = vmatpush.msra.mxu0 %v1715
    %1798 = vmatpush.msra.mxu0 %v1711
    %1799 = vmatpush.msra.mxu0 %v1707
    %1800 = vmatpush.msra.mxu0 %v1703
    %1801 = vmatpush.msra.mxu0 %v1699
    %1802 = vmatpush.msra.mxu0 %v1695
    %1803 = vmatpush.msra.mxu0 %v1691
    %1804 = vmatpush.msra.mxu0 %v1687
    %1805 = vmatmul.f32.gmra.mxu0 %v1683
    %v1806 = vpop.f32.mrf.mxu0
    %v1807 = vadd.f32 0.0, %v1806
    %1808 = vdwg.mxu0
    %1809 = vmatpush.msra.mxu0 %v1748
    %1810 = vmatpush.msra.mxu0 %v1744
    %1811 = vmatpush.msra.mxu0 %v1740
    %1812 = vmatpush.msra.mxu0 %v1736
    %1813 = vmatpush.msra.mxu0 %v1732
    %1814 = vmatpush.msra.mxu0 %v1728
    %1815 = vmatpush.msra.mxu0 %v1724
    %1816 = vmatpush.msra.mxu0 %v1720
    %1817 = vmatpush.msra.mxu0 %v1716
    %1818 = vmatpush.msra.mxu0 %v1712
    %1819 = vmatpush.msra.mxu0 %v1708
    %1820 = vmatpush.msra.mxu0 %v1704
    %1821 = vmatpush.msra.mxu0 %v1700
    %1822 = vmatpush.msra.mxu0 %v1696
    %1823 = vmatpush.msra.mxu0 %v1692
    %1824 = vmatpush.msra.mxu0 %v1688
    %1825 = vmatmul.f32.gmra.mxu0 %v1683
    %v1826 = vpop.f32.mrf.mxu0
    %v1827 = vadd.f32 0.0, %v1826
    %1828 = vdwg.mxu0
    %v1833 = vrot.slane %v1767, 6
    %v1834 = vrot.slane %v1787, 6
    %v1835 = vrot.slane %v1807, 6
    %v1836 = vrot.slane %v1827, 6
    %v1841 = vadd.f32 %v359, %v1833
    %v1842 = vadd.f32 %v428, %v1834
    %v1843 = vadd.f32 %v497, %v1835
    %v1844 = vadd.f32 %v566, %v1836
    %v1845 = vxor.u32 %v1841, 2147483648
    %v1846 = vmul.f32 %v1845, 1.442695
    %v1847 = vpow.pop %v1846
    %v1848 = vadd.f32 %v1847, 1.0
    %v1849 = vrcp.pop %v1848
    %v1850 = vmul.f32 %v1848, %v1849
    %v1851 = vsub.f32 1.0, %v1850
    %v1852 = vmul.f32 %v1849, %v1851
    %v1853 = vadd.f32 %v1849, %v1852
    %vm1854 = vweird.f32 %v1848
    %vm1855 = vweird.f32 %v1849
    %vm1856 = vmor %vm1854, %vm1855
    %v1857 = vsel %vm1856, %v1849, %v1853
    %v1858 = vand.u32 2147483647, %v1848
    %vm1859 = vcmp.eq.f32.partialorder %v1858, 8.507059e+37
    %v1860 = vand.u32 %v1848, 2147483648
    %v1861 = vor.u32 1.1754944e-38, %v1860
    %v1862 = vsel %vm1859, %v1861, %v1857
    %v1863 = vmul.f32 1.0, %v1862
    %v1864 = vxor.u32 %v1842, 2147483648
    %v1865 = vmul.f32 %v1864, 1.442695
    %v1866 = vpow.pop %v1865
    %v1867 = vadd.f32 %v1866, 1.0
    %v1868 = vrcp.pop %v1867
    %v1869 = vmul.f32 %v1867, %v1868
    %v1870 = vsub.f32 1.0, %v1869
    %v1871 = vmul.f32 %v1868, %v1870
    %v1872 = vadd.f32 %v1868, %v1871
    %vm1873 = vweird.f32 %v1867
    %vm1874 = vweird.f32 %v1868
    %vm1875 = vmor %vm1873, %vm1874
    %v1876 = vsel %vm1875, %v1868, %v1872
    %v1877 = vand.u32 2147483647, %v1867
    %vm1878 = vcmp.eq.f32.partialorder %v1877, 8.507059e+37
    %v1879 = vand.u32 %v1867, 2147483648
    %v1880 = vor.u32 1.1754944e-38, %v1879
    %v1881 = vsel %vm1878, %v1880, %v1876
    %v1882 = vmul.f32 1.0, %v1881
    %v1883 = vtanh.pop %v1843
    %v1884 = vxor.u32 %v1844, 2147483648
    %v1885 = vmul.f32 %v1884, 1.442695
    %v1886 = vpow.pop %v1885
    %v1887 = vadd.f32 %v1886, 1.0
    %v1888 = vrcp.pop %v1887
    %v1889 = vmul.f32 %v1887, %v1888
    %v1890 = vsub.f32 1.0, %v1889
    %v1891 = vmul.f32 %v1888, %v1890
    %v1892 = vadd.f32 %v1888, %v1891
    %vm1893 = vweird.f32 %v1887
    %vm1894 = vweird.f32 %v1888
    %vm1895 = vmor %vm1893, %vm1894
    %v1896 = vsel %vm1895, %v1888, %v1892
    %v1897 = vand.u32 2147483647, %v1887
    %vm1898 = vcmp.eq.f32.partialorder %v1897, 8.507059e+37
    %v1899 = vand.u32 %v1887, 2147483648
    %v1900 = vor.u32 1.1754944e-38, %v1899
    %v1901 = vsel %vm1898, %v1900, %v1896
    %v1902 = vmul.f32 1.0, %v1901
    %v1904 = vrot.slane %v1681, 6
    %v1906 = vmul.f32 %v1882, %v1904
    %v1907 = vmul.f32 %v1863, %v1883
    %v1908 = vadd.f32 %v1906, %v1907
    %v1909 = vtanh.pop %v1908
    %v1910 = vmul.f32 %v1902, %v1909
    %1911 = vst [vmem:[#allocation2 + $0x8] sm:$0xc] %v1910
    %v1912 = vld [vmem:[#allocation6] sm:$0xff]
    %v1913 = vld [vmem:[#allocation6 + $0x8] sm:$0xff]
    %v1914 = vld [vmem:[#allocation6 + $0x10] sm:$0xff]
    %v1915 = vld [vmem:[#allocation6 + $0x18] sm:$0xff]
    %v1916 = vld [vmem:[#allocation6 + $0x20] sm:$0xff]
    %v1917 = vld [vmem:[#allocation6 + $0x28] sm:$0xff]
    %v1918 = vld [vmem:[#allocation6 + $0x30] sm:$0xff]
    %v1919 = vld [vmem:[#allocation6 + $0x38] sm:$0xff]
    %v1920 = vld [vmem:[#allocation6 + $0x40] sm:$0xff]
    %v1921 = vld [vmem:[#allocation6 + $0x48] sm:$0xff]
    %v1922 = vld [vmem:[#allocation6 + $0x50] sm:$0xff]
    %v1923 = vld [vmem:[#allocation6 + $0x58] sm:$0xff]
    %v1924 = vld [vmem:[#allocation6 + $0x60] sm:$0xff]
    %v1925 = vld [vmem:[#allocation6 + $0x68] sm:$0xff]
    %v1926 = vld [vmem:[#allocation6 + $0x70] sm:$0xff]
    %v1927 = vld [vmem:[#allocation6 + $0x78] sm:$0xff]
    %v1928 = vld [vmem:[#allocation6 + $0x80] sm:$0xff]
    %v1929 = vld [vmem:[#allocation6 + $0x88] sm:$0xff]
    %v1930 = vld [vmem:[#allocation6 + $0x90] sm:$0xff]
    %v1931 = vld [vmem:[#allocation6 + $0x98] sm:$0xff]
    %v1932 = vld [vmem:[#allocation6 + $0xa0] sm:$0xff]
    %v1933 = vld [vmem:[#allocation6 + $0xa8] sm:$0xff]
    %v1934 = vld [vmem:[#allocation6 + $0xb0] sm:$0xff]
    %v1935 = vld [vmem:[#allocation6 + $0xb8] sm:$0xff]
    %v1936 = vld [vmem:[#allocation6 + $0xc0] sm:$0xff]
    %v1937 = vld [vmem:[#allocation6 + $0xc8] sm:$0xff]
    %v1938 = vld [vmem:[#allocation6 + $0xd0] sm:$0xff]
    %v1939 = vld [vmem:[#allocation6 + $0xd8] sm:$0xff]
    %v1940 = vld [vmem:[#allocation6 + $0xe0] sm:$0xff]
    %v1941 = vld [vmem:[#allocation6 + $0xe8] sm:$0xff]
    %v1942 = vld [vmem:[#allocation6 + $0xf0] sm:$0xff]
    %v1943 = vld [vmem:[#allocation6 + $0xf8] sm:$0xff]
    %v1944 = vld [vmem:[#allocation6 + $0x100] sm:$0xff]
    %v1945 = vld [vmem:[#allocation6 + $0x108] sm:$0xff]
    %v1946 = vld [vmem:[#allocation6 + $0x110] sm:$0xff]
    %v1947 = vld [vmem:[#allocation6 + $0x118] sm:$0xff]
    %v1948 = vld [vmem:[#allocation6 + $0x120] sm:$0xff]
    %v1949 = vld [vmem:[#allocation6 + $0x128] sm:$0xff]
    %v1950 = vld [vmem:[#allocation6 + $0x130] sm:$0xff]
    %v1951 = vld [vmem:[#allocation6 + $0x138] sm:$0xff]
    %v1952 = vld [vmem:[#allocation6 + $0x140] sm:$0xff]
    %v1953 = vld [vmem:[#allocation6 + $0x148] sm:$0xff]
    %v1954 = vld [vmem:[#allocation6 + $0x150] sm:$0xff]
    %v1955 = vld [vmem:[#allocation6 + $0x158] sm:$0xff]
    %v1956 = vld [vmem:[#allocation6 + $0x160] sm:$0xff]
    %v1957 = vld [vmem:[#allocation6 + $0x168] sm:$0xff]
    %v1958 = vld [vmem:[#allocation6 + $0x170] sm:$0xff]
    %v1959 = vld [vmem:[#allocation6 + $0x178] sm:$0xff]
    %v1960 = vld [vmem:[#allocation6 + $0x180] sm:$0xff]
    %v1961 = vld [vmem:[#allocation6 + $0x188] sm:$0xff]
    %v1962 = vld [vmem:[#allocation6 + $0x190] sm:$0xff]
    %v1963 = vld [vmem:[#allocation6 + $0x198] sm:$0xff]
    %v1964 = vld [vmem:[#allocation6 + $0x1a0] sm:$0xff]
    %v1965 = vld [vmem:[#allocation6 + $0x1a8] sm:$0xff]
    %v1966 = vld [vmem:[#allocation6 + $0x1b0] sm:$0xff]
    %v1967 = vld [vmem:[#allocation6 + $0x1b8] sm:$0xff]
    %v1968 = vld [vmem:[#allocation6 + $0x1c0] sm:$0xff]
    %v1969 = vld [vmem:[#allocation6 + $0x1c8] sm:$0xff]
    %v1970 = vld [vmem:[#allocation6 + $0x1d0] sm:$0xff]
    %v1971 = vld [vmem:[#allocation6 + $0x1d8] sm:$0xff]
    %v1972 = vld [vmem:[#allocation6 + $0x1e0] sm:$0xff]
    %v1973 = vld [vmem:[#allocation6 + $0x1e8] sm:$0xff]
    %v1974 = vld [vmem:[#allocation6 + $0x1f0] sm:$0xff]
    %v1975 = vld [vmem:[#allocation6 + $0x1f8] sm:$0xff]
    %v1977 = vrot.slane %v1910, 2
    %1979 = vmatpush.msra.mxu0 %v1972
    %1980 = vmatpush.msra.mxu0 %v1968
    %1981 = vmatpush.msra.mxu0 %v1964
    %1982 = vmatpush.msra.mxu0 %v1960
    %1983 = vmatpush.msra.mxu0 %v1956
    %1984 = vmatpush.msra.mxu0 %v1952
    %1985 = vmatpush.msra.mxu0 %v1948
    %1986 = vmatpush.msra.mxu0 %v1944
    %1987 = vmatpush.msra.mxu0 %v1940
    %1988 = vmatpush.msra.mxu0 %v1936
    %1989 = vmatpush.msra.mxu0 %v1932
    %1990 = vmatpush.msra.mxu0 %v1928
    %1991 = vmatpush.msra.mxu0 %v1924
    %1992 = vmatpush.msra.mxu0 %v1920
    %1993 = vmatpush.msra.mxu0 %v1916
    %1994 = vmatpush.msra.mxu0 %v1912
    %1995 = vmatmul.f32.gmra.mxu0 %v1977
    %v1996 = vpop.f32.mrf.mxu0
    %v1997 = vadd.f32 0.0, %v1996
    %1998 = vdwg.mxu0
    %1999 = vmatpush.msra.mxu0 %v1973
    %2000 = vmatpush.msra.mxu0 %v1969
    %2001 = vmatpush.msra.mxu0 %v1965
    %2002 = vmatpush.msra.mxu0 %v1961
    %2003 = vmatpush.msra.mxu0 %v1957
    %2004 = vmatpush.msra.mxu0 %v1953
    %2005 = vmatpush.msra.mxu0 %v1949
    %2006 = vmatpush.msra.mxu0 %v1945
    %2007 = vmatpush.msra.mxu0 %v1941
    %2008 = vmatpush.msra.mxu0 %v1937
    %2009 = vmatpush.msra.mxu0 %v1933
    %2010 = vmatpush.msra.mxu0 %v1929
    %2011 = vmatpush.msra.mxu0 %v1925
    %2012 = vmatpush.msra.mxu0 %v1921
    %2013 = vmatpush.msra.mxu0 %v1917
    %2014 = vmatpush.msra.mxu0 %v1913
    %2015 = vmatmul.f32.gmra.mxu0 %v1977
    %v2016 = vpop.f32.mrf.mxu0
    %v2017 = vadd.f32 0.0, %v2016
    %2018 = vdwg.mxu0
    %2019 = vmatpush.msra.mxu0 %v1974
    %2020 = vmatpush.msra.mxu0 %v1970
    %2021 = vmatpush.msra.mxu0 %v1966
    %2022 = vmatpush.msra.mxu0 %v1962
    %2023 = vmatpush.msra.mxu0 %v1958
    %2024 = vmatpush.msra.mxu0 %v1954
    %2025 = vmatpush.msra.mxu0 %v1950
    %2026 = vmatpush.msra.mxu0 %v1946
    %2027 = vmatpush.msra.mxu0 %v1942
    %2028 = vmatpush.msra.mxu0 %v1938
    %2029 = vmatpush.msra.mxu0 %v1934
    %2030 = vmatpush.msra.mxu0 %v1930
    %2031 = vmatpush.msra.mxu0 %v1926
    %2032 = vmatpush.msra.mxu0 %v1922
    %2033 = vmatpush.msra.mxu0 %v1918
    %2034 = vmatpush.msra.mxu0 %v1914
    %2035 = vmatmul.f32.gmra.mxu0 %v1977
    %v2036 = vpop.f32.mrf.mxu0
    %v2037 = vadd.f32 0.0, %v2036
    %2038 = vdwg.mxu0
    %2039 = vmatpush.msra.mxu0 %v1975
    %2040 = vmatpush.msra.mxu0 %v1971
    %2041 = vmatpush.msra.mxu0 %v1967
    %2042 = vmatpush.msra.mxu0 %v1963
    %2043 = vmatpush.msra.mxu0 %v1959
    %2044 = vmatpush.msra.mxu0 %v1955
    %2045 = vmatpush.msra.mxu0 %v1951
    %2046 = vmatpush.msra.mxu0 %v1947
    %2047 = vmatpush.msra.mxu0 %v1943
    %2048 = vmatpush.msra.mxu0 %v1939
    %2049 = vmatpush.msra.mxu0 %v1935
    %2050 = vmatpush.msra.mxu0 %v1931
    %2051 = vmatpush.msra.mxu0 %v1927
    %2052 = vmatpush.msra.mxu0 %v1923
    %2053 = vmatpush.msra.mxu0 %v1919
    %2054 = vmatpush.msra.mxu0 %v1915
    %2055 = vmatmul.f32.gmra.mxu0 %v1977
    %v2056 = vpop.f32.mrf.mxu0
    %v2057 = vadd.f32 0.0, %v2056
    %2058 = vdwg.mxu0
    %v2063 = vrot.slane %v1997, 4
    %v2064 = vrot.slane %v2017, 4
    %v2065 = vrot.slane %v2037, 4
    %v2066 = vrot.slane %v2057, 4
    %v2071 = vadd.f32 %v359, %v2063
    %v2072 = vadd.f32 %v428, %v2064
    %v2073 = vadd.f32 %v497, %v2065
    %v2074 = vadd.f32 %v566, %v2066
    %v2075 = vxor.u32 %v2071, 2147483648
    %v2076 = vmul.f32 %v2075, 1.442695
    %v2077 = vpow.pop %v2076
    %v2078 = vadd.f32 %v2077, 1.0
    %v2079 = vrcp.pop %v2078
    %v2080 = vmul.f32 %v2078, %v2079
    %v2081 = vsub.f32 1.0, %v2080
    %v2082 = vmul.f32 %v2079, %v2081
    %v2083 = vadd.f32 %v2079, %v2082
    %vm2084 = vweird.f32 %v2078
    %vm2085 = vweird.f32 %v2079
    %vm2086 = vmor %vm2084, %vm2085
    %v2087 = vsel %vm2086, %v2079, %v2083
    %v2088 = vand.u32 2147483647, %v2078
    %vm2089 = vcmp.eq.f32.partialorder %v2088, 8.507059e+37
    %v2090 = vand.u32 %v2078, 2147483648
    %v2091 = vor.u32 1.1754944e-38, %v2090
    %v2092 = vsel %vm2089, %v2091, %v2087
    %v2093 = vmul.f32 1.0, %v2092
    %v2094 = vxor.u32 %v2072, 2147483648
    %v2095 = vmul.f32 %v2094, 1.442695
    %v2096 = vpow.pop %v2095
    %v2097 = vadd.f32 %v2096, 1.0
    %v2098 = vrcp.pop %v2097
    %v2099 = vmul.f32 %v2097, %v2098
    %v2100 = vsub.f32 1.0, %v2099
    %v2101 = vmul.f32 %v2098, %v2100
    %v2102 = vadd.f32 %v2098, %v2101
    %vm2103 = vweird.f32 %v2097
    %vm2104 = vweird.f32 %v2098
    %vm2105 = vmor %vm2103, %vm2104
    %v2106 = vsel %vm2105, %v2098, %v2102
    %v2107 = vand.u32 2147483647, %v2097
    %vm2108 = vcmp.eq.f32.partialorder %v2107, 8.507059e+37
    %v2109 = vand.u32 %v2097, 2147483648
    %v2110 = vor.u32 1.1754944e-38, %v2109
    %v2111 = vsel %vm2108, %v2110, %v2106
    %v2112 = vmul.f32 1.0, %v2111
    %v2113 = vtanh.pop %v2073
    %v2114 = vxor.u32 %v2074, 2147483648
    %v2115 = vmul.f32 %v2114, 1.442695
    %v2116 = vpow.pop %v2115
    %v2117 = vadd.f32 %v2116, 1.0
    %v2118 = vrcp.pop %v2117
    %v2119 = vmul.f32 %v2117, %v2118
    %v2120 = vsub.f32 1.0, %v2119
    %v2121 = vmul.f32 %v2118, %v2120
    %v2122 = vadd.f32 %v2118, %v2121
    %vm2123 = vweird.f32 %v2117
    %vm2124 = vweird.f32 %v2118
    %vm2125 = vmor %vm2123, %vm2124
    %v2126 = vsel %vm2125, %v2118, %v2122
    %v2127 = vand.u32 2147483647, %v2117
    %vm2128 = vcmp.eq.f32.partialorder %v2127, 8.507059e+37
    %v2129 = vand.u32 %v2117, 2147483648
    %v2130 = vor.u32 1.1754944e-38, %v2129
    %v2131 = vsel %vm2128, %v2130, %v2126
    %v2132 = vmul.f32 1.0, %v2131
    %v2134 = vrot.slane %v1908, 6
    %v2136 = vmul.f32 %v2112, %v2134
    %v2137 = vmul.f32 %v2093, %v2113
    %v2138 = vadd.f32 %v2136, %v2137
    %v2139 = vtanh.pop %v2138
    %v2140 = vmul.f32 %v2132, %v2139
    %2141 = vst [vmem:[#allocation2 + $0x8] sm:$0x30] %v2140
    %v2142 = vld [vmem:[#allocation6] sm:$0xff]
    %v2143 = vld [vmem:[#allocation6 + $0x8] sm:$0xff]
    %v2144 = vld [vmem:[#allocation6 + $0x10] sm:$0xff]
    %v2145 = vld [vmem:[#allocation6 + $0x18] sm:$0xff]
    %v2146 = vld [vmem:[#allocation6 + $0x20] sm:$0xff]
    %v2147 = vld [vmem:[#allocation6 + $0x28] sm:$0xff]
    %v2148 = vld [vmem:[#allocation6 + $0x30] sm:$0xff]
    %v2149 = vld [vmem:[#allocation6 + $0x38] sm:$0xff]
    %v2150 = vld [vmem:[#allocation6 + $0x40] sm:$0xff]
    %v2151 = vld [vmem:[#allocation6 + $0x48] sm:$0xff]
    %v2152 = vld [vmem:[#allocation6 + $0x50] sm:$0xff]
    %v2153 = vld [vmem:[#allocation6 + $0x58] sm:$0xff]
    %v2154 = vld [vmem:[#allocation6 + $0x60] sm:$0xff]
    %v2155 = vld [vmem:[#allocation6 + $0x68] sm:$0xff]
    %v2156 = vld [vmem:[#allocation6 + $0x70] sm:$0xff]
    %v2157 = vld [vmem:[#allocation6 + $0x78] sm:$0xff]
    %v2158 = vld [vmem:[#allocation6 + $0x80] sm:$0xff]
    %v2159 = vld [vmem:[#allocation6 + $0x88] sm:$0xff]
    %v2160 = vld [vmem:[#allocation6 + $0x90] sm:$0xff]
    %v2161 = vld [vmem:[#allocation6 + $0x98] sm:$0xff]
    %v2162 = vld [vmem:[#allocation6 + $0xa0] sm:$0xff]
    %v2163 = vld [vmem:[#allocation6 + $0xa8] sm:$0xff]
    %v2164 = vld [vmem:[#allocation6 + $0xb0] sm:$0xff]
    %v2165 = vld [vmem:[#allocation6 + $0xb8] sm:$0xff]
    %v2166 = vld [vmem:[#allocation6 + $0xc0] sm:$0xff]
    %v2167 = vld [vmem:[#allocation6 + $0xc8] sm:$0xff]
    %v2168 = vld [vmem:[#allocation6 + $0xd0] sm:$0xff]
    %v2169 = vld [vmem:[#allocation6 + $0xd8] sm:$0xff]
    %v2170 = vld [vmem:[#allocation6 + $0xe0] sm:$0xff]
    %v2171 = vld [vmem:[#allocation6 + $0xe8] sm:$0xff]
    %v2172 = vld [vmem:[#allocation6 + $0xf0] sm:$0xff]
    %v2173 = vld [vmem:[#allocation6 + $0xf8] sm:$0xff]
    %v2174 = vld [vmem:[#allocation6 + $0x100] sm:$0xff]
    %v2175 = vld [vmem:[#allocation6 + $0x108] sm:$0xff]
    %v2176 = vld [vmem:[#allocation6 + $0x110] sm:$0xff]
    %v2177 = vld [vmem:[#allocation6 + $0x118] sm:$0xff]
    %v2178 = vld [vmem:[#allocation6 + $0x120] sm:$0xff]
    %v2179 = vld [vmem:[#allocation6 + $0x128] sm:$0xff]
    %v2180 = vld [vmem:[#allocation6 + $0x130] sm:$0xff]
    %v2181 = vld [vmem:[#allocation6 + $0x138] sm:$0xff]
    %v2182 = vld [vmem:[#allocation6 + $0x140] sm:$0xff]
    %v2183 = vld [vmem:[#allocation6 + $0x148] sm:$0xff]
    %v2184 = vld [vmem:[#allocation6 + $0x150] sm:$0xff]
    %v2185 = vld [vmem:[#allocation6 + $0x158] sm:$0xff]
    %v2186 = vld [vmem:[#allocation6 + $0x160] sm:$0xff]
    %v2187 = vld [vmem:[#allocation6 + $0x168] sm:$0xff]
    %v2188 = vld [vmem:[#allocation6 + $0x170] sm:$0xff]
    %v2189 = vld [vmem:[#allocation6 + $0x178] sm:$0xff]
    %v2190 = vld [vmem:[#allocation6 + $0x180] sm:$0xff]
    %v2191 = vld [vmem:[#allocation6 + $0x188] sm:$0xff]
    %v2192 = vld [vmem:[#allocation6 + $0x190] sm:$0xff]
    %v2193 = vld [vmem:[#allocation6 + $0x198] sm:$0xff]
    %v2194 = vld [vmem:[#allocation6 + $0x1a0] sm:$0xff]
    %v2195 = vld [vmem:[#allocation6 + $0x1a8] sm:$0xff]
    %v2196 = vld [vmem:[#allocation6 + $0x1b0] sm:$0xff]
    %v2197 = vld [vmem:[#allocation6 + $0x1b8] sm:$0xff]
    %v2198 = vld [vmem:[#allocation6 + $0x1c0] sm:$0xff]
    %v2199 = vld [vmem:[#allocation6 + $0x1c8] sm:$0xff]
    %v2200 = vld [vmem:[#allocation6 + $0x1d0] sm:$0xff]
    %v2201 = vld [vmem:[#allocation6 + $0x1d8] sm:$0xff]
    %v2202 = vld [vmem:[#allocation6 + $0x1e0] sm:$0xff]
    %v2203 = vld [vmem:[#allocation6 + $0x1e8] sm:$0xff]
    %v2204 = vld [vmem:[#allocation6 + $0x1f0] sm:$0xff]
    %v2205 = vld [vmem:[#allocation6 + $0x1f8] sm:$0xff]
    %v2207 = vrot.slane %v2140, 4
    %2209 = vmatpush.msra.mxu0 %v2202
    %2210 = vmatpush.msra.mxu0 %v2198
    %2211 = vmatpush.msra.mxu0 %v2194
    %2212 = vmatpush.msra.mxu0 %v2190
    %2213 = vmatpush.msra.mxu0 %v2186
    %2214 = vmatpush.msra.mxu0 %v2182
    %2215 = vmatpush.msra.mxu0 %v2178
    %2216 = vmatpush.msra.mxu0 %v2174
    %2217 = vmatpush.msra.mxu0 %v2170
    %2218 = vmatpush.msra.mxu0 %v2166
    %2219 = vmatpush.msra.mxu0 %v2162
    %2220 = vmatpush.msra.mxu0 %v2158
    %2221 = vmatpush.msra.mxu0 %v2154
    %2222 = vmatpush.msra.mxu0 %v2150
    %2223 = vmatpush.msra.mxu0 %v2146
    %2224 = vmatpush.msra.mxu0 %v2142
    %2225 = vmatmul.f32.gmra.mxu0 %v2207
    %v2226 = vpop.f32.mrf.mxu0
    %v2227 = vadd.f32 0.0, %v2226
    %2228 = vdwg.mxu0
    %2229 = vmatpush.msra.mxu0 %v2203
    %2230 = vmatpush.msra.mxu0 %v2199
    %2231 = vmatpush.msra.mxu0 %v2195
    %2232 = vmatpush.msra.mxu0 %v2191
    %2233 = vmatpush.msra.mxu0 %v2187
    %2234 = vmatpush.msra.mxu0 %v2183
    %2235 = vmatpush.msra.mxu0 %v2179
    %2236 = vmatpush.msra.mxu0 %v2175
    %2237 = vmatpush.msra.mxu0 %v2171
    %2238 = vmatpush.msra.mxu0 %v2167
    %2239 = vmatpush.msra.mxu0 %v2163
    %2240 = vmatpush.msra.mxu0 %v2159
    %2241 = vmatpush.msra.mxu0 %v2155
    %2242 = vmatpush.msra.mxu0 %v2151
    %2243 = vmatpush.msra.mxu0 %v2147
    %2244 = vmatpush.msra.mxu0 %v2143
    %2245 = vmatmul.f32.gmra.mxu0 %v2207
    %v2246 = vpop.f32.mrf.mxu0
    %v2247 = vadd.f32 0.0, %v2246
    %2248 = vdwg.mxu0
    %2249 = vmatpush.msra.mxu0 %v2204
    %2250 = vmatpush.msra.mxu0 %v2200
    %2251 = vmatpush.msra.mxu0 %v2196
    %2252 = vmatpush.msra.mxu0 %v2192
    %2253 = vmatpush.msra.mxu0 %v2188
    %2254 = vmatpush.msra.mxu0 %v2184
    %2255 = vmatpush.msra.mxu0 %v2180
    %2256 = vmatpush.msra.mxu0 %v2176
    %2257 = vmatpush.msra.mxu0 %v2172
    %2258 = vmatpush.msra.mxu0 %v2168
    %2259 = vmatpush.msra.mxu0 %v2164
    %2260 = vmatpush.msra.mxu0 %v2160
    %2261 = vmatpush.msra.mxu0 %v2156
    %2262 = vmatpush.msra.mxu0 %v2152
    %2263 = vmatpush.msra.mxu0 %v2148
    %2264 = vmatpush.msra.mxu0 %v2144
    %2265 = vmatmul.f32.gmra.mxu0 %v2207
    %v2266 = vpop.f32.mrf.mxu0
    %v2267 = vadd.f32 0.0, %v2266
    %2268 = vdwg.mxu0
    %2269 = vmatpush.msra.mxu0 %v2205
    %2270 = vmatpush.msra.mxu0 %v2201
    %2271 = vmatpush.msra.mxu0 %v2197
    %2272 = vmatpush.msra.mxu0 %v2193
    %2273 = vmatpush.msra.mxu0 %v2189
    %2274 = vmatpush.msra.mxu0 %v2185
    %2275 = vmatpush.msra.mxu0 %v2181
    %2276 = vmatpush.msra.mxu0 %v2177
    %2277 = vmatpush.msra.mxu0 %v2173
    %2278 = vmatpush.msra.mxu0 %v2169
    %2279 = vmatpush.msra.mxu0 %v2165
    %2280 = vmatpush.msra.mxu0 %v2161
    %2281 = vmatpush.msra.mxu0 %v2157
    %2282 = vmatpush.msra.mxu0 %v2153
    %2283 = vmatpush.msra.mxu0 %v2149
    %2284 = vmatpush.msra.mxu0 %v2145
    %2285 = vmatmul.f32.gmra.mxu0 %v2207
    %v2286 = vpop.f32.mrf.mxu0
    %v2287 = vadd.f32 0.0, %v2286
    %2288 = vdwg.mxu0
    %v2293 = vrot.slane %v2227, 2
    %v2294 = vrot.slane %v2247, 2
    %v2295 = vrot.slane %v2267, 2
    %v2296 = vrot.slane %v2287, 2
    %v2301 = vadd.f32 %v359, %v2293
    %v2302 = vadd.f32 %v428, %v2294
    %v2303 = vadd.f32 %v497, %v2295
    %v2304 = vadd.f32 %v566, %v2296
    %v2305 = vxor.u32 %v2301, 2147483648
    %v2306 = vmul.f32 %v2305, 1.442695
    %v2307 = vpow.pop %v2306
    %v2308 = vadd.f32 %v2307, 1.0
    %v2309 = vrcp.pop %v2308
    %v2310 = vmul.f32 %v2308, %v2309
    %v2311 = vsub.f32 1.0, %v2310
    %v2312 = vmul.f32 %v2309, %v2311
    %v2313 = vadd.f32 %v2309, %v2312
    %vm2314 = vweird.f32 %v2308
    %vm2315 = vweird.f32 %v2309
    %vm2316 = vmor %vm2314, %vm2315
    %v2317 = vsel %vm2316, %v2309, %v2313
    %v2318 = vand.u32 2147483647, %v2308
    %vm2319 = vcmp.eq.f32.partialorder %v2318, 8.507059e+37
    %v2320 = vand.u32 %v2308, 2147483648
    %v2321 = vor.u32 1.1754944e-38, %v2320
    %v2322 = vsel %vm2319, %v2321, %v2317
    %v2323 = vmul.f32 1.0, %v2322
    %v2324 = vxor.u32 %v2302, 2147483648
    %v2325 = vmul.f32 %v2324, 1.442695
    %v2326 = vpow.pop %v2325
    %v2327 = vadd.f32 %v2326, 1.0
    %v2328 = vrcp.pop %v2327
    %v2329 = vmul.f32 %v2327, %v2328
    %v2330 = vsub.f32 1.0, %v2329
    %v2331 = vmul.f32 %v2328, %v2330
    %v2332 = vadd.f32 %v2328, %v2331
    %vm2333 = vweird.f32 %v2327
    %vm2334 = vweird.f32 %v2328
    %vm2335 = vmor %vm2333, %vm2334
    %v2336 = vsel %vm2335, %v2328, %v2332
    %v2337 = vand.u32 2147483647, %v2327
    %vm2338 = vcmp.eq.f32.partialorder %v2337, 8.507059e+37
    %v2339 = vand.u32 %v2327, 2147483648
    %v2340 = vor.u32 1.1754944e-38, %v2339
    %v2341 = vsel %vm2338, %v2340, %v2336
    %v2342 = vmul.f32 1.0, %v2341
    %v2343 = vtanh.pop %v2303
    %v2344 = vxor.u32 %v2304, 2147483648
    %v2345 = vmul.f32 %v2344, 1.442695
    %v2346 = vpow.pop %v2345
    %v2347 = vadd.f32 %v2346, 1.0
    %v2348 = vrcp.pop %v2347
    %v2349 = vmul.f32 %v2347, %v2348
    %v2350 = vsub.f32 1.0, %v2349
    %v2351 = vmul.f32 %v2348, %v2350
    %v2352 = vadd.f32 %v2348, %v2351
    %vm2353 = vweird.f32 %v2347
    %vm2354 = vweird.f32 %v2348
    %vm2355 = vmor %vm2353, %vm2354
    %v2356 = vsel %vm2355, %v2348, %v2352
    %v2357 = vand.u32 2147483647, %v2347
    %vm2358 = vcmp.eq.f32.partialorder %v2357, 8.507059e+37
    %v2359 = vand.u32 %v2347, 2147483648
    %v2360 = vor.u32 1.1754944e-38, %v2359
    %v2361 = vsel %vm2358, %v2360, %v2356
    %v2362 = vmul.f32 1.0, %v2361
    %v2364 = vrot.slane %v2138, 6
    %v2366 = vmul.f32 %v2342, %v2364
    %v2367 = vmul.f32 %v2323, %v2343
    %v2368 = vadd.f32 %v2366, %v2367
    %v2369 = vtanh.pop %v2368
    %v2370 = vmul.f32 %v2362, %v2369
    %2371 = vst [vmem:[#allocation2 + $0x8] sm:$0xc0] %v2370
    %v2372 = vld [vmem:[#allocation2] sm:$0xff]
    %v2373 = vld [vmem:[#allocation2 + $0x8] sm:$0xff]
    %v2374 = vld [vmem:[#allocation8] sm:$0xff]
    %v2375 = vld [vmem:[#allocation8 + $0x8] sm:$0xff]
    %v2376 = vld [vmem:[#allocation8 + $0x10] sm:$0xff]
    %v2377 = vld [vmem:[#allocation8 + $0x18] sm:$0xff]
    %v2378 = vld [vmem:[#allocation8 + $0x20] sm:$0xff]
    %v2379 = vld [vmem:[#allocation8 + $0x28] sm:$0xff]
    %v2380 = vld [vmem:[#allocation8 + $0x30] sm:$0xff]
    %v2381 = vld [vmem:[#allocation8 + $0x38] sm:$0xff]
    %v2382 = vld [vmem:[#allocation8 + $0x40] sm:$0xff]
    %v2383 = vld [vmem:[#allocation8 + $0x48] sm:$0xff]
    %v2384 = vld [vmem:[#allocation8 + $0x50] sm:$0xff]
    %v2385 = vld [vmem:[#allocation8 + $0x58] sm:$0xff]
    %v2386 = vld [vmem:[#allocation8 + $0x60] sm:$0xff]
    %v2387 = vld [vmem:[#allocation8 + $0x68] sm:$0xff]
    %v2388 = vld [vmem:[#allocation8 + $0x70] sm:$0xff]
    %v2389 = vld [vmem:[#allocation8 + $0x78] sm:$0xff]
    %v2390 = vld [vmem:[#allocation8 + $0x80] sm:$0xff]
    %v2391 = vld [vmem:[#allocation8 + $0x88] sm:$0xff]
    %v2392 = vld [vmem:[#allocation8 + $0x90] sm:$0xff]
    %v2393 = vld [vmem:[#allocation8 + $0x98] sm:$0xff]
    %v2394 = vld [vmem:[#allocation8 + $0xa0] sm:$0xff]
    %v2395 = vld [vmem:[#allocation8 + $0xa8] sm:$0xff]
    %v2396 = vld [vmem:[#allocation8 + $0xb0] sm:$0xff]
    %v2397 = vld [vmem:[#allocation8 + $0xb8] sm:$0xff]
    %v2398 = vld [vmem:[#allocation8 + $0xc0] sm:$0xff]
    %v2399 = vld [vmem:[#allocation8 + $0xc8] sm:$0xff]
    %v2400 = vld [vmem:[#allocation8 + $0xd0] sm:$0xff]
    %v2401 = vld [vmem:[#allocation8 + $0xd8] sm:$0xff]
    %v2402 = vld [vmem:[#allocation8 + $0xe0] sm:$0xff]
    %v2403 = vld [vmem:[#allocation8 + $0xe8] sm:$0xff]
    %v2404 = vld [vmem:[#allocation8 + $0xf0] sm:$0xff]
    %v2405 = vld [vmem:[#allocation8 + $0xf8] sm:$0xff]
    %v2406 = vld [vmem:[#allocation8 + $0x100] sm:$0xff]
    %v2407 = vld [vmem:[#allocation8 + $0x108] sm:$0xff]
    %v2408 = vld [vmem:[#allocation8 + $0x110] sm:$0xff]
    %v2409 = vld [vmem:[#allocation8 + $0x118] sm:$0xff]
    %v2410 = vld [vmem:[#allocation8 + $0x120] sm:$0xff]
    %v2411 = vld [vmem:[#allocation8 + $0x128] sm:$0xff]
    %v2412 = vld [vmem:[#allocation8 + $0x130] sm:$0xff]
    %v2413 = vld [vmem:[#allocation8 + $0x138] sm:$0xff]
    %v2414 = vld [vmem:[#allocation8 + $0x140] sm:$0xff]
    %v2415 = vld [vmem:[#allocation8 + $0x148] sm:$0xff]
    %v2416 = vld [vmem:[#allocation8 + $0x150] sm:$0xff]
    %v2417 = vld [vmem:[#allocation8 + $0x158] sm:$0xff]
    %v2418 = vld [vmem:[#allocation8 + $0x160] sm:$0xff]
    %v2419 = vld [vmem:[#allocation8 + $0x168] sm:$0xff]
    %v2420 = vld [vmem:[#allocation8 + $0x170] sm:$0xff]
    %v2421 = vld [vmem:[#allocation8 + $0x178] sm:$0xff]
    %v2422 = vld [vmem:[#allocation8 + $0x180] sm:$0xff]
    %v2423 = vld [vmem:[#allocation8 + $0x188] sm:$0xff]
    %v2424 = vld [vmem:[#allocation8 + $0x190] sm:$0xff]
    %v2425 = vld [vmem:[#allocation8 + $0x198] sm:$0xff]
    %v2426 = vld [vmem:[#allocation8 + $0x1a0] sm:$0xff]
    %v2427 = vld [vmem:[#allocation8 + $0x1a8] sm:$0xff]
    %v2428 = vld [vmem:[#allocation8 + $0x1b0] sm:$0xff]
    %v2429 = vld [vmem:[#allocation8 + $0x1b8] sm:$0xff]
    %v2430 = vld [vmem:[#allocation8 + $0x1c0] sm:$0xff]
    %v2431 = vld [vmem:[#allocation8 + $0x1c8] sm:$0xff]
    %v2432 = vld [vmem:[#allocation8 + $0x1d0] sm:$0xff]
    %v2433 = vld [vmem:[#allocation8 + $0x1d8] sm:$0xff]
    %v2434 = vld [vmem:[#allocation8 + $0x1e0] sm:$0xff]
    %v2435 = vld [vmem:[#allocation8 + $0x1e8] sm:$0xff]
    %v2436 = vld [vmem:[#allocation8 + $0x1f0] sm:$0xff]
    %v2437 = vld [vmem:[#allocation8 + $0x1f8] sm:$0xff]
    %v2438 = vld [vmem:[%s6] sm:$0xf]
    %v2440 = vperm.slane %v2438, 0
    %v2441 = vperm.slane %v2438, 1
    %v2442 = vperm.slane %v2438, 2
    %v2443 = vperm.slane %v2438, 3
    %2448 = vmatpush.msra.mxu0 %v2434
    %2449 = vmatpush.msra.mxu0 %v2430
    %2450 = vmatpush.msra.mxu0 %v2426
    %2451 = vmatpush.msra.mxu0 %v2422
    %2452 = vmatpush.msra.mxu0 %v2418
    %2453 = vmatpush.msra.mxu0 %v2414
    %2454 = vmatpush.msra.mxu0 %v2410
    %2455 = vmatpush.msra.mxu0 %v2406
    %2456 = vmatpush.msra.mxu0 %v2402
    %2457 = vmatpush.msra.mxu0 %v2398
    %2458 = vmatpush.msra.mxu0 %v2394
    %2459 = vmatpush.msra.mxu0 %v2390
    %2460 = vmatpush.msra.mxu0 %v2386
    %2461 = vmatpush.msra.mxu0 %v2382
    %2462 = vmatpush.msra.mxu0 %v2378
    %2463 = vmatpush.msra.mxu0 %v2374
    %2464 = vmatmul.f32.gmra.mxu0 %v2372
    %v2465 = vpop.f32.mrf.mxu0
    %v2466 = vadd.f32 %v2440, %v2465
    %2467 = vmatmul.f32.gmra.mxu0 %v2373
    %v2468 = vpop.f32.mrf.mxu0
    %v2469 = vadd.f32 %v2440, %v2468
    %2470 = vdwg.mxu0
    %2471 = vmatpush.msra.mxu0 %v2435
    %2472 = vmatpush.msra.mxu0 %v2431
    %2473 = vmatpush.msra.mxu0 %v2427
    %2474 = vmatpush.msra.mxu0 %v2423
    %2475 = vmatpush.msra.mxu0 %v2419
    %2476 = vmatpush.msra.mxu0 %v2415
    %2477 = vmatpush.msra.mxu0 %v2411
    %2478 = vmatpush.msra.mxu0 %v2407
    %2479 = vmatpush.msra.mxu0 %v2403
    %2480 = vmatpush.msra.mxu0 %v2399
    %2481 = vmatpush.msra.mxu0 %v2395
    %2482 = vmatpush.msra.mxu0 %v2391
    %2483 = vmatpush.msra.mxu0 %v2387
    %2484 = vmatpush.msra.mxu0 %v2383
    %2485 = vmatpush.msra.mxu0 %v2379
    %2486 = vmatpush.msra.mxu0 %v2375
    %2487 = vmatmul.f32.gmra.mxu0 %v2372
    %v2488 = vpop.f32.mrf.mxu0
    %v2489 = vadd.f32 %v2441, %v2488
    %2490 = vmatmul.f32.gmra.mxu0 %v2373
    %v2491 = vpop.f32.mrf.mxu0
    %v2492 = vadd.f32 %v2441, %v2491
    %2493 = vdwg.mxu0
    %2494 = vmatpush.msra.mxu0 %v2436
    %2495 = vmatpush.msra.mxu0 %v2432
    %2496 = vmatpush.msra.mxu0 %v2428
    %2497 = vmatpush.msra.mxu0 %v2424
    %2498 = vmatpush.msra.mxu0 %v2420
    %2499 = vmatpush.msra.mxu0 %v2416
    %2500 = vmatpush.msra.mxu0 %v2412
    %2501 = vmatpush.msra.mxu0 %v2408
    %2502 = vmatpush.msra.mxu0 %v2404
    %2503 = vmatpush.msra.mxu0 %v2400
    %2504 = vmatpush.msra.mxu0 %v2396
    %2505 = vmatpush.msra.mxu0 %v2392
    %2506 = vmatpush.msra.mxu0 %v2388
    %2507 = vmatpush.msra.mxu0 %v2384
    %2508 = vmatpush.msra.mxu0 %v2380
    %2509 = vmatpush.msra.mxu0 %v2376
    %2510 = vmatmul.f32.gmra.mxu0 %v2372
    %v2511 = vpop.f32.mrf.mxu0
    %v2512 = vadd.f32 %v2442, %v2511
    %2513 = vmatmul.f32.gmra.mxu0 %v2373
    %v2514 = vpop.f32.mrf.mxu0
    %v2515 = vadd.f32 %v2442, %v2514
    %2516 = vdwg.mxu0
    %2517 = vmatpush.msra.mxu0 %v2437
    %2518 = vmatpush.msra.mxu0 %v2433
    %2519 = vmatpush.msra.mxu0 %v2429
    %2520 = vmatpush.msra.mxu0 %v2425
    %2521 = vmatpush.msra.mxu0 %v2421
    %2522 = vmatpush.msra.mxu0 %v2417
    %2523 = vmatpush.msra.mxu0 %v2413
    %2524 = vmatpush.msra.mxu0 %v2409
    %2525 = vmatpush.msra.mxu0 %v2405
    %2526 = vmatpush.msra.mxu0 %v2401
    %2527 = vmatpush.msra.mxu0 %v2397
    %2528 = vmatpush.msra.mxu0 %v2393
    %2529 = vmatpush.msra.mxu0 %v2389
    %2530 = vmatpush.msra.mxu0 %v2385
    %2531 = vmatpush.msra.mxu0 %v2381
    %2532 = vmatpush.msra.mxu0 %v2377
    %2533 = vmatmul.f32.gmra.mxu0 %v2372
    %v2534 = vpop.f32.mrf.mxu0
    %v2535 = vadd.f32 %v2443, %v2534
    %2536 = vmatmul.f32.gmra.mxu0 %v2373
    %v2537 = vpop.f32.mrf.mxu0
    %v2538 = vadd.f32 %v2443, %v2537
    %2539 = vdwg.mxu0
    %v2540 = vld [vmem:[#allocation9] sm:$0xff]
    %v2541 = vld [vmem:[#allocation9 + $0x8] sm:$0xff]
    %v2542 = vld [vmem:[#allocation9 + $0x10] sm:$0xff]
    %v2543 = vld [vmem:[#allocation9 + $0x18] sm:$0xff]
    %v2544 = vld [vmem:[#allocation9 + $0x20] sm:$0xff]
    %v2545 = vld [vmem:[#allocation9 + $0x28] sm:$0xff]
    %v2546 = vld [vmem:[#allocation9 + $0x30] sm:$0xff]
    %v2547 = vld [vmem:[#allocation9 + $0x38] sm:$0xff]
    %v2548 = vld [vmem:[#allocation9 + $0x40] sm:$0xff]
    %v2549 = vld [vmem:[#allocation9 + $0x48] sm:$0xff]
    %v2550 = vld [vmem:[#allocation9 + $0x50] sm:$0xff]
    %v2551 = vld [vmem:[#allocation9 + $0x58] sm:$0xff]
    %v2552 = vld [vmem:[#allocation9 + $0x60] sm:$0xff]
    %v2553 = vld [vmem:[#allocation9 + $0x68] sm:$0xff]
    %v2554 = vld [vmem:[#allocation9 + $0x70] sm:$0xff]
    %v2555 = vld [vmem:[#allocation9 + $0x78] sm:$0xff]
    %v2556 = vld [vmem:[#allocation9 + $0x80] sm:$0xff]
    %v2557 = vld [vmem:[#allocation9 + $0x88] sm:$0xff]
    %v2558 = vld [vmem:[#allocation9 + $0x90] sm:$0xff]
    %v2559 = vld [vmem:[#allocation9 + $0x98] sm:$0xff]
    %v2560 = vld [vmem:[#allocation9 + $0xa0] sm:$0xff]
    %v2561 = vld [vmem:[#allocation9 + $0xa8] sm:$0xff]
    %v2562 = vld [vmem:[#allocation9 + $0xb0] sm:$0xff]
    %v2563 = vld [vmem:[#allocation9 + $0xb8] sm:$0xff]
    %v2564 = vld [vmem:[#allocation9 + $0xc0] sm:$0xff]
    %v2565 = vld [vmem:[#allocation9 + $0xc8] sm:$0xff]
    %v2566 = vld [vmem:[#allocation9 + $0xd0] sm:$0xff]
    %v2567 = vld [vmem:[#allocation9 + $0xd8] sm:$0xff]
    %v2568 = vld [vmem:[#allocation9 + $0xe0] sm:$0xff]
    %v2569 = vld [vmem:[#allocation9 + $0xe8] sm:$0xff]
    %v2570 = vld [vmem:[#allocation9 + $0xf0] sm:$0xff]
    %v2571 = vld [vmem:[#allocation9 + $0xf8] sm:$0xff]
    %v2572 = vld [vmem:[#allocation9 + $0x100] sm:$0xff]
    %v2573 = vld [vmem:[#allocation9 + $0x108] sm:$0xff]
    %v2574 = vld [vmem:[#allocation9 + $0x110] sm:$0xff]
    %v2575 = vld [vmem:[#allocation9 + $0x118] sm:$0xff]
    %v2576 = vld [vmem:[#allocation9 + $0x120] sm:$0xff]
    %v2577 = vld [vmem:[#allocation9 + $0x128] sm:$0xff]
    %v2578 = vld [vmem:[#allocation9 + $0x130] sm:$0xff]
    %v2579 = vld [vmem:[#allocation9 + $0x138] sm:$0xff]
    %v2580 = vld [vmem:[#allocation9 + $0x140] sm:$0xff]
    %v2581 = vld [vmem:[#allocation9 + $0x148] sm:$0xff]
    %v2582 = vld [vmem:[#allocation9 + $0x150] sm:$0xff]
    %v2583 = vld [vmem:[#allocation9 + $0x158] sm:$0xff]
    %v2584 = vld [vmem:[#allocation9 + $0x160] sm:$0xff]
    %v2585 = vld [vmem:[#allocation9 + $0x168] sm:$0xff]
    %v2586 = vld [vmem:[#allocation9 + $0x170] sm:$0xff]
    %v2587 = vld [vmem:[#allocation9 + $0x178] sm:$0xff]
    %v2588 = vld [vmem:[#allocation9 + $0x180] sm:$0xff]
    %v2589 = vld [vmem:[#allocation9 + $0x188] sm:$0xff]
    %v2590 = vld [vmem:[#allocation9 + $0x190] sm:$0xff]
    %v2591 = vld [vmem:[#allocation9 + $0x198] sm:$0xff]
    %v2592 = vld [vmem:[#allocation9 + $0x1a0] sm:$0xff]
    %v2593 = vld [vmem:[#allocation9 + $0x1a8] sm:$0xff]
    %v2594 = vld [vmem:[#allocation9 + $0x1b0] sm:$0xff]
    %v2595 = vld [vmem:[#allocation9 + $0x1b8] sm:$0xff]
    %v2596 = vld [vmem:[#allocation9 + $0x1c0] sm:$0xff]
    %v2597 = vld [vmem:[#allocation9 + $0x1c8] sm:$0xff]
    %v2598 = vld [vmem:[#allocation9 + $0x1d0] sm:$0xff]
    %v2599 = vld [vmem:[#allocation9 + $0x1d8] sm:$0xff]
    %v2600 = vld [vmem:[#allocation9 + $0x1e0] sm:$0xff]
    %v2601 = vld [vmem:[#allocation9 + $0x1e8] sm:$0xff]
    %v2602 = vld [vmem:[#allocation9 + $0x1f0] sm:$0xff]
    %v2603 = vld [vmem:[#allocation9 + $0x1f8] sm:$0xff]
    %2604 = vmatpush.msra.mxu0 %v2600
    %2605 = vmatpush.msra.mxu0 %v2596
    %2606 = vmatpush.msra.mxu0 %v2592
    %2607 = vmatpush.msra.mxu0 %v2588
    %2608 = vmatpush.msra.mxu0 %v2584
    %2609 = vmatpush.msra.mxu0 %v2580
    %2610 = vmatpush.msra.mxu0 %v2576
    %2611 = vmatpush.msra.mxu0 %v2572
    %2612 = vmatpush.msra.mxu0 %v2568
    %2613 = vmatpush.msra.mxu0 %v2564
    %2614 = vmatpush.msra.mxu0 %v2560
    %2615 = vmatpush.msra.mxu0 %v2556
    %2616 = vmatpush.msra.mxu0 %v2552
    %2617 = vmatpush.msra.mxu0 %v2548
    %2618 = vmatpush.msra.mxu0 %v2544
    %2619 = vmatpush.msra.mxu0 %v2540
    %2620 = vmatmul.f32.gmra.mxu0 0.0
    %v2621 = vpop.f32.mrf.mxu0
    %v2622 = vadd.f32 0.0, %v2621
    %2623 = vdwg.mxu0
    %2624 = vmatpush.msra.mxu0 %v2601
    %2625 = vmatpush.msra.mxu0 %v2597
    %2626 = vmatpush.msra.mxu0 %v2593
    %2627 = vmatpush.msra.mxu0 %v2589
    %2628 = vmatpush.msra.mxu0 %v2585
    %2629 = vmatpush.msra.mxu0 %v2581
    %2630 = vmatpush.msra.mxu0 %v2577
    %2631 = vmatpush.msra.mxu0 %v2573
    %2632 = vmatpush.msra.mxu0 %v2569
    %2633 = vmatpush.msra.mxu0 %v2565
    %2634 = vmatpush.msra.mxu0 %v2561
    %2635 = vmatpush.msra.mxu0 %v2557
    %2636 = vmatpush.msra.mxu0 %v2553
    %2637 = vmatpush.msra.mxu0 %v2549
    %2638 = vmatpush.msra.mxu0 %v2545
    %2639 = vmatpush.msra.mxu0 %v2541
    %2640 = vmatmul.f32.gmra.mxu0 0.0
    %v2641 = vpop.f32.mrf.mxu0
    %v2642 = vadd.f32 0.0, %v2641
    %2643 = vdwg.mxu0
    %2644 = vmatpush.msra.mxu0 %v2602
    %2645 = vmatpush.msra.mxu0 %v2598
    %2646 = vmatpush.msra.mxu0 %v2594
    %2647 = vmatpush.msra.mxu0 %v2590
    %2648 = vmatpush.msra.mxu0 %v2586
    %2649 = vmatpush.msra.mxu0 %v2582
    %2650 = vmatpush.msra.mxu0 %v2578
    %2651 = vmatpush.msra.mxu0 %v2574
    %2652 = vmatpush.msra.mxu0 %v2570
    %2653 = vmatpush.msra.mxu0 %v2566
    %2654 = vmatpush.msra.mxu0 %v2562
    %2655 = vmatpush.msra.mxu0 %v2558
    %2656 = vmatpush.msra.mxu0 %v2554
    %2657 = vmatpush.msra.mxu0 %v2550
    %2658 = vmatpush.msra.mxu0 %v2546
    %2659 = vmatpush.msra.mxu0 %v2542
    %2660 = vmatmul.f32.gmra.mxu0 0.0
    %v2661 = vpop.f32.mrf.mxu0
    %v2662 = vadd.f32 0.0, %v2661
    %2663 = vdwg.mxu0
    %2664 = vmatpush.msra.mxu0 %v2603
    %2665 = vmatpush.msra.mxu0 %v2599
    %2666 = vmatpush.msra.mxu0 %v2595
    %2667 = vmatpush.msra.mxu0 %v2591
    %2668 = vmatpush.msra.mxu0 %v2587
    %2669 = vmatpush.msra.mxu0 %v2583
    %2670 = vmatpush.msra.mxu0 %v2579
    %2671 = vmatpush.msra.mxu0 %v2575
    %2672 = vmatpush.msra.mxu0 %v2571
    %2673 = vmatpush.msra.mxu0 %v2567
    %2674 = vmatpush.msra.mxu0 %v2563
    %2675 = vmatpush.msra.mxu0 %v2559
    %2676 = vmatpush.msra.mxu0 %v2555
    %2677 = vmatpush.msra.mxu0 %v2551
    %2678 = vmatpush.msra.mxu0 %v2547
    %2679 = vmatpush.msra.mxu0 %v2543
    %2680 = vmatmul.f32.gmra.mxu0 0.0
    %v2681 = vpop.f32.mrf.mxu0
    %v2682 = vadd.f32 0.0, %v2681
    %2683 = vdwg.mxu0
    %v2684 = vadd.f32 %v2466, %v2622
    %v2685 = vadd.f32 %v2489, %v2642
    %v2686 = vadd.f32 %v2512, %v2662
    %v2687 = vadd.f32 %v2535, %v2682
    %v2688 = vxor.u32 %v2684, 2147483648
    %v2689 = vmul.f32 %v2688, 1.442695
    %v2690 = vpow.pop %v2689
    %v2691 = vadd.f32 %v2690, 1.0
    %v2692 = vrcp.pop %v2691
    %v2693 = vmul.f32 %v2691, %v2692
    %v2694 = vsub.f32 1.0, %v2693
    %v2695 = vmul.f32 %v2692, %v2694
    %v2696 = vadd.f32 %v2692, %v2695
    %vm2697 = vweird.f32 %v2691
    %vm2698 = vweird.f32 %v2692
    %vm2699 = vmor %vm2697, %vm2698
    %v2700 = vsel %vm2699, %v2692, %v2696
    %v2701 = vand.u32 2147483647, %v2691
    %vm2702 = vcmp.eq.f32.partialorder %v2701, 8.507059e+37
    %v2703 = vand.u32 %v2691, 2147483648
    %v2704 = vor.u32 1.1754944e-38, %v2703
    %v2705 = vsel %vm2702, %v2704, %v2700
    %v2706 = vmul.f32 1.0, %v2705
    %v2707 = vxor.u32 %v2685, 2147483648
    %v2708 = vmul.f32 %v2707, 1.442695
    %v2709 = vpow.pop %v2708
    %v2710 = vadd.f32 %v2709, 1.0
    %v2711 = vrcp.pop %v2710
    %v2712 = vmul.f32 %v2710, %v2711
    %v2713 = vsub.f32 1.0, %v2712
    %v2714 = vmul.f32 %v2711, %v2713
    %v2715 = vadd.f32 %v2711, %v2714
    %vm2716 = vweird.f32 %v2710
    %vm2717 = vweird.f32 %v2711
    %vm2718 = vmor %vm2716, %vm2717
    %v2719 = vsel %vm2718, %v2711, %v2715
    %v2720 = vand.u32 2147483647, %v2710
    %vm2721 = vcmp.eq.f32.partialorder %v2720, 8.507059e+37
    %v2722 = vand.u32 %v2710, 2147483648
    %v2723 = vor.u32 1.1754944e-38, %v2722
    %v2724 = vsel %vm2721, %v2723, %v2719
    %v2725 = vmul.f32 1.0, %v2724
    %v2726 = vtanh.pop %v2686
    %v2727 = vxor.u32 %v2687, 2147483648
    %v2728 = vmul.f32 %v2727, 1.442695
    %v2729 = vpow.pop %v2728
    %v2730 = vadd.f32 %v2729, 1.0
    %v2731 = vrcp.pop %v2730
    %v2732 = vmul.f32 %v2730, %v2731
    %v2733 = vsub.f32 1.0, %v2732
    %v2734 = vmul.f32 %v2731, %v2733
    %v2735 = vadd.f32 %v2731, %v2734
    %vm2736 = vweird.f32 %v2730
    %vm2737 = vweird.f32 %v2731
    %vm2738 = vmor %vm2736, %vm2737
    %v2739 = vsel %vm2738, %v2731, %v2735
    %v2740 = vand.u32 2147483647, %v2730
    %vm2741 = vcmp.eq.f32.partialorder %v2740, 8.507059e+37
    %v2742 = vand.u32 %v2730, 2147483648
    %v2743 = vor.u32 1.1754944e-38, %v2742
    %v2744 = vsel %vm2741, %v2743, %v2739
    %v2745 = vmul.f32 1.0, %v2744
    %v2746 = vmul.f32 %v2725, 0.0
    %v2747 = vmul.f32 %v2706, %v2726
    %v2748 = vadd.f32 %v2746, %v2747
    %v2749 = vtanh.pop %v2748
    %v2750 = vmul.f32 %v2745, %v2749
    %2751 = vmatpush.msra.mxu0 %v2600
    %2752 = vmatpush.msra.mxu0 %v2596
    %2753 = vmatpush.msra.mxu0 %v2592
    %2754 = vmatpush.msra.mxu0 %v2588
    %2755 = vmatpush.msra.mxu0 %v2584
    %2756 = vmatpush.msra.mxu0 %v2580
    %2757 = vmatpush.msra.mxu0 %v2576
    %2758 = vmatpush.msra.mxu0 %v2572
    %2759 = vmatpush.msra.mxu0 %v2568
    %2760 = vmatpush.msra.mxu0 %v2564
    %2761 = vmatpush.msra.mxu0 %v2560
    %2762 = vmatpush.msra.mxu0 %v2556
    %2763 = vmatpush.msra.mxu0 %v2552
    %2764 = vmatpush.msra.mxu0 %v2548
    %2765 = vmatpush.msra.mxu0 %v2544
    %2766 = vmatpush.msra.mxu0 %v2540
    %2767 = vmatmul.f32.gmra.mxu0 %v2750
    %v2768 = vpop.f32.mrf.mxu0
    %v2769 = vadd.f32 0.0, %v2768
    %2770 = vdwg.mxu0
    %2771 = vmatpush.msra.mxu0 %v2601
    %2772 = vmatpush.msra.mxu0 %v2597
    %2773 = vmatpush.msra.mxu0 %v2593
    %2774 = vmatpush.msra.mxu0 %v2589
    %2775 = vmatpush.msra.mxu0 %v2585
    %2776 = vmatpush.msra.mxu0 %v2581
    %2777 = vmatpush.msra.mxu0 %v2577
    %2778 = vmatpush.msra.mxu0 %v2573
    %2779 = vmatpush.msra.mxu0 %v2569
    %2780 = vmatpush.msra.mxu0 %v2565
    %2781 = vmatpush.msra.mxu0 %v2561
    %2782 = vmatpush.msra.mxu0 %v2557
    %2783 = vmatpush.msra.mxu0 %v2553
    %2784 = vmatpush.msra.mxu0 %v2549
    %2785 = vmatpush.msra.mxu0 %v2545
    %2786 = vmatpush.msra.mxu0 %v2541
    %2787 = vmatmul.f32.gmra.mxu0 %v2750
    %v2788 = vpop.f32.mrf.mxu0
    %v2789 = vadd.f32 0.0, %v2788
    %2790 = vdwg.mxu0
    %2791 = vmatpush.msra.mxu0 %v2602
    %2792 = vmatpush.msra.mxu0 %v2598
    %2793 = vmatpush.msra.mxu0 %v2594
    %2794 = vmatpush.msra.mxu0 %v2590
    %2795 = vmatpush.msra.mxu0 %v2586
    %2796 = vmatpush.msra.mxu0 %v2582
    %2797 = vmatpush.msra.mxu0 %v2578
    %2798 = vmatpush.msra.mxu0 %v2574
    %2799 = vmatpush.msra.mxu0 %v2570
    %2800 = vmatpush.msra.mxu0 %v2566
    %2801 = vmatpush.msra.mxu0 %v2562
    %2802 = vmatpush.msra.mxu0 %v2558
    %2803 = vmatpush.msra.mxu0 %v2554
    %2804 = vmatpush.msra.mxu0 %v2550
    %2805 = vmatpush.msra.mxu0 %v2546
    %2806 = vmatpush.msra.mxu0 %v2542
    %2807 = vmatmul.f32.gmra.mxu0 %v2750
    %v2808 = vpop.f32.mrf.mxu0
    %v2809 = vadd.f32 0.0, %v2808
    %2810 = vdwg.mxu0
    %2811 = vmatpush.msra.mxu0 %v2603
    %2812 = vmatpush.msra.mxu0 %v2599
    %2813 = vmatpush.msra.mxu0 %v2595
    %2814 = vmatpush.msra.mxu0 %v2591
    %2815 = vmatpush.msra.mxu0 %v2587
    %2816 = vmatpush.msra.mxu0 %v2583
    %2817 = vmatpush.msra.mxu0 %v2579
    %2818 = vmatpush.msra.mxu0 %v2575
    %2819 = vmatpush.msra.mxu0 %v2571
    %2820 = vmatpush.msra.mxu0 %v2567
    %2821 = vmatpush.msra.mxu0 %v2563
    %2822 = vmatpush.msra.mxu0 %v2559
    %2823 = vmatpush.msra.mxu0 %v2555
    %2824 = vmatpush.msra.mxu0 %v2551
    %2825 = vmatpush.msra.mxu0 %v2547
    %2826 = vmatpush.msra.mxu0 %v2543
    %2827 = vmatmul.f32.gmra.mxu0 %v2750
    %v2828 = vpop.f32.mrf.mxu0
    %v2829 = vadd.f32 0.0, %v2828
    %2830 = vdwg.mxu0
    %v2835 = vrot.slane %v2769, 6
    %v2836 = vrot.slane %v2789, 6
    %v2837 = vrot.slane %v2809, 6
    %v2838 = vrot.slane %v2829, 6
    %v2843 = vadd.f32 %v2466, %v2835
    %v2844 = vadd.f32 %v2489, %v2836
    %v2845 = vadd.f32 %v2512, %v2837
    %v2846 = vadd.f32 %v2535, %v2838
    %v2847 = vxor.u32 %v2843, 2147483648
    %v2848 = vmul.f32 %v2847, 1.442695
    %v2849 = vpow.pop %v2848
    %v2850 = vadd.f32 %v2849, 1.0
    %v2851 = vrcp.pop %v2850
    %v2852 = vmul.f32 %v2850, %v2851
    %v2853 = vsub.f32 1.0, %v2852
    %v2854 = vmul.f32 %v2851, %v2853
    %v2855 = vadd.f32 %v2851, %v2854
    %vm2856 = vweird.f32 %v2850
    %vm2857 = vweird.f32 %v2851
    %vm2858 = vmor %vm2856, %vm2857
    %v2859 = vsel %vm2858, %v2851, %v2855
    %v2860 = vand.u32 2147483647, %v2850
    %vm2861 = vcmp.eq.f32.partialorder %v2860, 8.507059e+37
    %v2862 = vand.u32 %v2850, 2147483648
    %v2863 = vor.u32 1.1754944e-38, %v2862
    %v2864 = vsel %vm2861, %v2863, %v2859
    %v2865 = vmul.f32 1.0, %v2864
    %v2866 = vxor.u32 %v2844, 2147483648
    %v2867 = vmul.f32 %v2866, 1.442695
    %v2868 = vpow.pop %v2867
    %v2869 = vadd.f32 %v2868, 1.0
    %v2870 = vrcp.pop %v2869
    %v2871 = vmul.f32 %v2869, %v2870
    %v2872 = vsub.f32 1.0, %v2871
    %v2873 = vmul.f32 %v2870, %v2872
    %v2874 = vadd.f32 %v2870, %v2873
    %vm2875 = vweird.f32 %v2869
    %vm2876 = vweird.f32 %v2870
    %vm2877 = vmor %vm2875, %vm2876
    %v2878 = vsel %vm2877, %v2870, %v2874
    %v2879 = vand.u32 2147483647, %v2869
    %vm2880 = vcmp.eq.f32.partialorder %v2879, 8.507059e+37
    %v2881 = vand.u32 %v2869, 2147483648
    %v2882 = vor.u32 1.1754944e-38, %v2881
    %v2883 = vsel %vm2880, %v2882, %v2878
    %v2884 = vmul.f32 1.0, %v2883
    %v2885 = vtanh.pop %v2845
    %v2886 = vxor.u32 %v2846, 2147483648
    %v2887 = vmul.f32 %v2886, 1.442695
    %v2888 = vpow.pop %v2887
    %v2889 = vadd.f32 %v2888, 1.0
    %v2890 = vrcp.pop %v2889
    %v2891 = vmul.f32 %v2889, %v2890
    %v2892 = vsub.f32 1.0, %v2891
    %v2893 = vmul.f32 %v2890, %v2892
    %v2894 = vadd.f32 %v2890, %v2893
    %vm2895 = vweird.f32 %v2889
    %vm2896 = vweird.f32 %v2890
    %vm2897 = vmor %vm2895, %vm2896
    %v2898 = vsel %vm2897, %v2890, %v2894
    %v2899 = vand.u32 2147483647, %v2889
    %vm2900 = vcmp.eq.f32.partialorder %v2899, 8.507059e+37
    %v2901 = vand.u32 %v2889, 2147483648
    %v2902 = vor.u32 1.1754944e-38, %v2901
    %v2903 = vsel %vm2900, %v2902, %v2898
    %v2904 = vmul.f32 1.0, %v2903
    %v2906 = vrot.slane %v2748, 6
    %v2908 = vmul.f32 %v2884, %v2906
    %v2909 = vmul.f32 %v2865, %v2885
    %v2910 = vadd.f32 %v2908, %v2909
    %v2911 = vtanh.pop %v2910
    %v2912 = vmul.f32 %v2904, %v2911
    %v2914 = vrot.slane %v2912, 2
    %2916 = vmatpush.msra.mxu0 %v2600
    %2917 = vmatpush.msra.mxu0 %v2596
    %2918 = vmatpush.msra.mxu0 %v2592
    %2919 = vmatpush.msra.mxu0 %v2588
    %2920 = vmatpush.msra.mxu0 %v2584
    %2921 = vmatpush.msra.mxu0 %v2580
    %2922 = vmatpush.msra.mxu0 %v2576
    %2923 = vmatpush.msra.mxu0 %v2572
    %2924 = vmatpush.msra.mxu0 %v2568
    %2925 = vmatpush.msra.mxu0 %v2564
    %2926 = vmatpush.msra.mxu0 %v2560
    %2927 = vmatpush.msra.mxu0 %v2556
    %2928 = vmatpush.msra.mxu0 %v2552
    %2929 = vmatpush.msra.mxu0 %v2548
    %2930 = vmatpush.msra.mxu0 %v2544
    %2931 = vmatpush.msra.mxu0 %v2540
    %2932 = vmatmul.f32.gmra.mxu0 %v2914
    %v2933 = vpop.f32.mrf.mxu0
    %v2934 = vadd.f32 0.0, %v2933
    %2935 = vdwg.mxu0
    %2936 = vmatpush.msra.mxu0 %v2601
    %2937 = vmatpush.msra.mxu0 %v2597
    %2938 = vmatpush.msra.mxu0 %v2593
    %2939 = vmatpush.msra.mxu0 %v2589
    %2940 = vmatpush.msra.mxu0 %v2585
    %2941 = vmatpush.msra.mxu0 %v2581
    %2942 = vmatpush.msra.mxu0 %v2577
    %2943 = vmatpush.msra.mxu0 %v2573
    %2944 = vmatpush.msra.mxu0 %v2569
    %2945 = vmatpush.msra.mxu0 %v2565
    %2946 = vmatpush.msra.mxu0 %v2561
    %2947 = vmatpush.msra.mxu0 %v2557
    %2948 = vmatpush.msra.mxu0 %v2553
    %2949 = vmatpush.msra.mxu0 %v2549
    %2950 = vmatpush.msra.mxu0 %v2545
    %2951 = vmatpush.msra.mxu0 %v2541
    %2952 = vmatmul.f32.gmra.mxu0 %v2914
    %v2953 = vpop.f32.mrf.mxu0
    %v2954 = vadd.f32 0.0, %v2953
    %2955 = vdwg.mxu0
    %2956 = vmatpush.msra.mxu0 %v2602
    %2957 = vmatpush.msra.mxu0 %v2598
    %2958 = vmatpush.msra.mxu0 %v2594
    %2959 = vmatpush.msra.mxu0 %v2590
    %2960 = vmatpush.msra.mxu0 %v2586
    %2961 = vmatpush.msra.mxu0 %v2582
    %2962 = vmatpush.msra.mxu0 %v2578
    %2963 = vmatpush.msra.mxu0 %v2574
    %2964 = vmatpush.msra.mxu0 %v2570
    %2965 = vmatpush.msra.mxu0 %v2566
    %2966 = vmatpush.msra.mxu0 %v2562
    %2967 = vmatpush.msra.mxu0 %v2558
    %2968 = vmatpush.msra.mxu0 %v2554
    %2969 = vmatpush.msra.mxu0 %v2550
    %2970 = vmatpush.msra.mxu0 %v2546
    %2971 = vmatpush.msra.mxu0 %v2542
    %2972 = vmatmul.f32.gmra.mxu0 %v2914
    %v2973 = vpop.f32.mrf.mxu0
    %v2974 = vadd.f32 0.0, %v2973
    %2975 = vdwg.mxu0
    %2976 = vmatpush.msra.mxu0 %v2603
    %2977 = vmatpush.msra.mxu0 %v2599
    %2978 = vmatpush.msra.mxu0 %v2595
    %2979 = vmatpush.msra.mxu0 %v2591
    %2980 = vmatpush.msra.mxu0 %v2587
    %2981 = vmatpush.msra.mxu0 %v2583
    %2982 = vmatpush.msra.mxu0 %v2579
    %2983 = vmatpush.msra.mxu0 %v2575
    %2984 = vmatpush.msra.mxu0 %v2571
    %2985 = vmatpush.msra.mxu0 %v2567
    %2986 = vmatpush.msra.mxu0 %v2563
    %2987 = vmatpush.msra.mxu0 %v2559
    %2988 = vmatpush.msra.mxu0 %v2555
    %2989 = vmatpush.msra.mxu0 %v2551
    %2990 = vmatpush.msra.mxu0 %v2547
    %2991 = vmatpush.msra.mxu0 %v2543
    %2992 = vmatmul.f32.gmra.mxu0 %v2914
    %v2993 = vpop.f32.mrf.mxu0
    %v2994 = vadd.f32 0.0, %v2993
    %2995 = vdwg.mxu0
    %v3000 = vrot.slane %v2934, 4
    %v3001 = vrot.slane %v2954, 4
    %v3002 = vrot.slane %v2974, 4
    %v3003 = vrot.slane %v2994, 4
    %v3008 = vadd.f32 %v2466, %v3000
    %v3009 = vadd.f32 %v2489, %v3001
    %v3010 = vadd.f32 %v2512, %v3002
    %v3011 = vadd.f32 %v2535, %v3003
    %v3012 = vxor.u32 %v3008, 2147483648
    %v3013 = vmul.f32 %v3012, 1.442695
    %v3014 = vpow.pop %v3013
    %v3015 = vadd.f32 %v3014, 1.0
    %v3016 = vrcp.pop %v3015
    %v3017 = vmul.f32 %v3015, %v3016
    %v3018 = vsub.f32 1.0, %v3017
    %v3019 = vmul.f32 %v3016, %v3018
    %v3020 = vadd.f32 %v3016, %v3019
    %vm3021 = vweird.f32 %v3015
    %vm3022 = vweird.f32 %v3016
    %vm3023 = vmor %vm3021, %vm3022
    %v3024 = vsel %vm3023, %v3016, %v3020
    %v3025 = vand.u32 2147483647, %v3015
    %vm3026 = vcmp.eq.f32.partialorder %v3025, 8.507059e+37
    %v3027 = vand.u32 %v3015, 2147483648
    %v3028 = vor.u32 1.1754944e-38, %v3027
    %v3029 = vsel %vm3026, %v3028, %v3024
    %v3030 = vmul.f32 1.0, %v3029
    %v3031 = vxor.u32 %v3009, 2147483648
    %v3032 = vmul.f32 %v3031, 1.442695
    %v3033 = vpow.pop %v3032
    %v3034 = vadd.f32 %v3033, 1.0
    %v3035 = vrcp.pop %v3034
    %v3036 = vmul.f32 %v3034, %v3035
    %v3037 = vsub.f32 1.0, %v3036
    %v3038 = vmul.f32 %v3035, %v3037
    %v3039 = vadd.f32 %v3035, %v3038
    %vm3040 = vweird.f32 %v3034
    %vm3041 = vweird.f32 %v3035
    %vm3042 = vmor %vm3040, %vm3041
    %v3043 = vsel %vm3042, %v3035, %v3039
    %v3044 = vand.u32 2147483647, %v3034
    %vm3045 = vcmp.eq.f32.partialorder %v3044, 8.507059e+37
    %v3046 = vand.u32 %v3034, 2147483648
    %v3047 = vor.u32 1.1754944e-38, %v3046
    %v3048 = vsel %vm3045, %v3047, %v3043
    %v3049 = vmul.f32 1.0, %v3048
    %v3050 = vtanh.pop %v3010
    %v3051 = vxor.u32 %v3011, 2147483648
    %v3052 = vmul.f32 %v3051, 1.442695
    %v3053 = vpow.pop %v3052
    %v3054 = vadd.f32 %v3053, 1.0
    %v3055 = vrcp.pop %v3054
    %v3056 = vmul.f32 %v3054, %v3055
    %v3057 = vsub.f32 1.0, %v3056
    %v3058 = vmul.f32 %v3055, %v3057
    %v3059 = vadd.f32 %v3055, %v3058
    %vm3060 = vweird.f32 %v3054
    %vm3061 = vweird.f32 %v3055
    %vm3062 = vmor %vm3060, %vm3061
    %v3063 = vsel %vm3062, %v3055, %v3059
    %v3064 = vand.u32 2147483647, %v3054
    %vm3065 = vcmp.eq.f32.partialorder %v3064, 8.507059e+37
    %v3066 = vand.u32 %v3054, 2147483648
    %v3067 = vor.u32 1.1754944e-38, %v3066
    %v3068 = vsel %vm3065, %v3067, %v3063
    %v3069 = vmul.f32 1.0, %v3068
    %v3071 = vrot.slane %v2910, 6
    %v3073 = vmul.f32 %v3049, %v3071
    %v3074 = vmul.f32 %v3030, %v3050
    %v3075 = vadd.f32 %v3073, %v3074
    %v3076 = vtanh.pop %v3075
    %v3077 = vmul.f32 %v3069, %v3076
    %v3079 = vrot.slane %v3077, 4
    %3081 = vmatpush.msra.mxu0 %v2600
    %3082 = vmatpush.msra.mxu0 %v2596
    %3083 = vmatpush.msra.mxu0 %v2592
    %3084 = vmatpush.msra.mxu0 %v2588
    %3085 = vmatpush.msra.mxu0 %v2584
    %3086 = vmatpush.msra.mxu0 %v2580
    %3087 = vmatpush.msra.mxu0 %v2576
    %3088 = vmatpush.msra.mxu0 %v2572
    %3089 = vmatpush.msra.mxu0 %v2568
    %3090 = vmatpush.msra.mxu0 %v2564
    %3091 = vmatpush.msra.mxu0 %v2560
    %3092 = vmatpush.msra.mxu0 %v2556
    %3093 = vmatpush.msra.mxu0 %v2552
    %3094 = vmatpush.msra.mxu0 %v2548
    %3095 = vmatpush.msra.mxu0 %v2544
    %3096 = vmatpush.msra.mxu0 %v2540
    %3097 = vmatmul.f32.gmra.mxu0 %v3079
    %v3098 = vpop.f32.mrf.mxu0
    %v3099 = vadd.f32 0.0, %v3098
    %3100 = vdwg.mxu0
    %3101 = vmatpush.msra.mxu0 %v2601
    %3102 = vmatpush.msra.mxu0 %v2597
    %3103 = vmatpush.msra.mxu0 %v2593
    %3104 = vmatpush.msra.mxu0 %v2589
    %3105 = vmatpush.msra.mxu0 %v2585
    %3106 = vmatpush.msra.mxu0 %v2581
    %3107 = vmatpush.msra.mxu0 %v2577
    %3108 = vmatpush.msra.mxu0 %v2573
    %3109 = vmatpush.msra.mxu0 %v2569
    %3110 = vmatpush.msra.mxu0 %v2565
    %3111 = vmatpush.msra.mxu0 %v2561
    %3112 = vmatpush.msra.mxu0 %v2557
    %3113 = vmatpush.msra.mxu0 %v2553
    %3114 = vmatpush.msra.mxu0 %v2549
    %3115 = vmatpush.msra.mxu0 %v2545
    %3116 = vmatpush.msra.mxu0 %v2541
    %3117 = vmatmul.f32.gmra.mxu0 %v3079
    %v3118 = vpop.f32.mrf.mxu0
    %v3119 = vadd.f32 0.0, %v3118
    %3120 = vdwg.mxu0
    %3121 = vmatpush.msra.mxu0 %v2602
    %3122 = vmatpush.msra.mxu0 %v2598
    %3123 = vmatpush.msra.mxu0 %v2594
    %3124 = vmatpush.msra.mxu0 %v2590
    %3125 = vmatpush.msra.mxu0 %v2586
    %3126 = vmatpush.msra.mxu0 %v2582
    %3127 = vmatpush.msra.mxu0 %v2578
    %3128 = vmatpush.msra.mxu0 %v2574
    %3129 = vmatpush.msra.mxu0 %v2570
    %3130 = vmatpush.msra.mxu0 %v2566
    %3131 = vmatpush.msra.mxu0 %v2562
    %3132 = vmatpush.msra.mxu0 %v2558
    %3133 = vmatpush.msra.mxu0 %v2554
    %3134 = vmatpush.msra.mxu0 %v2550
    %3135 = vmatpush.msra.mxu0 %v2546
    %3136 = vmatpush.msra.mxu0 %v2542
    %3137 = vmatmul.f32.gmra.mxu0 %v3079
    %v3138 = vpop.f32.mrf.mxu0
    %v3139 = vadd.f32 0.0, %v3138
    %3140 = vdwg.mxu0
    %3141 = vmatpush.msra.mxu0 %v2603
    %3142 = vmatpush.msra.mxu0 %v2599
    %3143 = vmatpush.msra.mxu0 %v2595
    %3144 = vmatpush.msra.mxu0 %v2591
    %3145 = vmatpush.msra.mxu0 %v2587
    %3146 = vmatpush.msra.mxu0 %v2583
    %3147 = vmatpush.msra.mxu0 %v2579
    %3148 = vmatpush.msra.mxu0 %v2575
    %3149 = vmatpush.msra.mxu0 %v2571
    %3150 = vmatpush.msra.mxu0 %v2567
    %3151 = vmatpush.msra.mxu0 %v2563
    %3152 = vmatpush.msra.mxu0 %v2559
    %3153 = vmatpush.msra.mxu0 %v2555
    %3154 = vmatpush.msra.mxu0 %v2551
    %3155 = vmatpush.msra.mxu0 %v2547
    %3156 = vmatpush.msra.mxu0 %v2543
    %3157 = vmatmul.f32.gmra.mxu0 %v3079
    %v3158 = vpop.f32.mrf.mxu0
    %v3159 = vadd.f32 0.0, %v3158
    %3160 = vdwg.mxu0
    %v3165 = vrot.slane %v3099, 2
    %v3166 = vrot.slane %v3119, 2
    %v3167 = vrot.slane %v3139, 2
    %v3168 = vrot.slane %v3159, 2
    %v3173 = vadd.f32 %v2466, %v3165
    %v3174 = vadd.f32 %v2489, %v3166
    %v3175 = vadd.f32 %v2512, %v3167
    %v3176 = vadd.f32 %v2535, %v3168
    %v3177 = vxor.u32 %v3173, 2147483648
    %v3178 = vmul.f32 %v3177, 1.442695
    %v3179 = vpow.pop %v3178
    %v3180 = vadd.f32 %v3179, 1.0
    %v3181 = vrcp.pop %v3180
    %v3182 = vmul.f32 %v3180, %v3181
    %v3183 = vsub.f32 1.0, %v3182
    %v3184 = vmul.f32 %v3181, %v3183
    %v3185 = vadd.f32 %v3181, %v3184
    %vm3186 = vweird.f32 %v3180
    %vm3187 = vweird.f32 %v3181
    %vm3188 = vmor %vm3186, %vm3187
    %v3189 = vsel %vm3188, %v3181, %v3185
    %v3190 = vand.u32 2147483647, %v3180
    %vm3191 = vcmp.eq.f32.partialorder %v3190, 8.507059e+37
    %v3192 = vand.u32 %v3180, 2147483648
    %v3193 = vor.u32 1.1754944e-38, %v3192
    %v3194 = vsel %vm3191, %v3193, %v3189
    %v3195 = vmul.f32 1.0, %v3194
    %v3196 = vxor.u32 %v3174, 2147483648
    %v3197 = vmul.f32 %v3196, 1.442695
    %v3198 = vpow.pop %v3197
    %v3199 = vadd.f32 %v3198, 1.0
    %v3200 = vrcp.pop %v3199
    %v3201 = vmul.f32 %v3199, %v3200
    %v3202 = vsub.f32 1.0, %v3201
    %v3203 = vmul.f32 %v3200, %v3202
    %v3204 = vadd.f32 %v3200, %v3203
    %vm3205 = vweird.f32 %v3199
    %vm3206 = vweird.f32 %v3200
    %vm3207 = vmor %vm3205, %vm3206
    %v3208 = vsel %vm3207, %v3200, %v3204
    %v3209 = vand.u32 2147483647, %v3199
    %vm3210 = vcmp.eq.f32.partialorder %v3209, 8.507059e+37
    %v3211 = vand.u32 %v3199, 2147483648
    %v3212 = vor.u32 1.1754944e-38, %v3211
    %v3213 = vsel %vm3210, %v3212, %v3208
    %v3214 = vmul.f32 1.0, %v3213
    %v3215 = vtanh.pop %v3175
    %v3216 = vxor.u32 %v3176, 2147483648
    %v3217 = vmul.f32 %v3216, 1.442695
    %v3218 = vpow.pop %v3217
    %v3219 = vadd.f32 %v3218, 1.0
    %v3220 = vrcp.pop %v3219
    %v3221 = vmul.f32 %v3219, %v3220
    %v3222 = vsub.f32 1.0, %v3221
    %v3223 = vmul.f32 %v3220, %v3222
    %v3224 = vadd.f32 %v3220, %v3223
    %vm3225 = vweird.f32 %v3219
    %vm3226 = vweird.f32 %v3220
    %vm3227 = vmor %vm3225, %vm3226
    %v3228 = vsel %vm3227, %v3220, %v3224
    %v3229 = vand.u32 2147483647, %v3219
    %vm3230 = vcmp.eq.f32.partialorder %v3229, 8.507059e+37
    %v3231 = vand.u32 %v3219, 2147483648
    %v3232 = vor.u32 1.1754944e-38, %v3231
    %v3233 = vsel %vm3230, %v3232, %v3228
    %v3234 = vmul.f32 1.0, %v3233
    %v3236 = vrot.slane %v3075, 6
    %v3238 = vmul.f32 %v3214, %v3236
    %v3239 = vmul.f32 %v3195, %v3215
    %v3240 = vadd.f32 %v3238, %v3239
    %v3241 = vtanh.pop %v3240
    %v3242 = vmul.f32 %v3234, %v3241
    %v3244 = vrot.slane %v3242, 6
    %3246 = vmatpush.msra.mxu0 %v2600
    %3247 = vmatpush.msra.mxu0 %v2596
    %3248 = vmatpush.msra.mxu0 %v2592
    %3249 = vmatpush.msra.mxu0 %v2588
    %3250 = vmatpush.msra.mxu0 %v2584
    %3251 = vmatpush.msra.mxu0 %v2580
    %3252 = vmatpush.msra.mxu0 %v2576
    %3253 = vmatpush.msra.mxu0 %v2572
    %3254 = vmatpush.msra.mxu0 %v2568
    %3255 = vmatpush.msra.mxu0 %v2564
    %3256 = vmatpush.msra.mxu0 %v2560
    %3257 = vmatpush.msra.mxu0 %v2556
    %3258 = vmatpush.msra.mxu0 %v2552
    %3259 = vmatpush.msra.mxu0 %v2548
    %3260 = vmatpush.msra.mxu0 %v2544
    %3261 = vmatpush.msra.mxu0 %v2540
    %3262 = vmatmul.f32.gmra.mxu0 %v3244
    %v3263 = vpop.f32.mrf.mxu0
    %v3264 = vadd.f32 0.0, %v3263
    %3265 = vdwg.mxu0
    %3266 = vmatpush.msra.mxu0 %v2601
    %3267 = vmatpush.msra.mxu0 %v2597
    %3268 = vmatpush.msra.mxu0 %v2593
    %3269 = vmatpush.msra.mxu0 %v2589
    %3270 = vmatpush.msra.mxu0 %v2585
    %3271 = vmatpush.msra.mxu0 %v2581
    %3272 = vmatpush.msra.mxu0 %v2577
    %3273 = vmatpush.msra.mxu0 %v2573
    %3274 = vmatpush.msra.mxu0 %v2569
    %3275 = vmatpush.msra.mxu0 %v2565
    %3276 = vmatpush.msra.mxu0 %v2561
    %3277 = vmatpush.msra.mxu0 %v2557
    %3278 = vmatpush.msra.mxu0 %v2553
    %3279 = vmatpush.msra.mxu0 %v2549
    %3280 = vmatpush.msra.mxu0 %v2545
    %3281 = vmatpush.msra.mxu0 %v2541
    %3282 = vmatmul.f32.gmra.mxu0 %v3244
    %v3283 = vpop.f32.mrf.mxu0
    %v3284 = vadd.f32 0.0, %v3283
    %3285 = vdwg.mxu0
    %3286 = vmatpush.msra.mxu0 %v2602
    %3287 = vmatpush.msra.mxu0 %v2598
    %3288 = vmatpush.msra.mxu0 %v2594
    %3289 = vmatpush.msra.mxu0 %v2590
    %3290 = vmatpush.msra.mxu0 %v2586
    %3291 = vmatpush.msra.mxu0 %v2582
    %3292 = vmatpush.msra.mxu0 %v2578
    %3293 = vmatpush.msra.mxu0 %v2574
    %3294 = vmatpush.msra.mxu0 %v2570
    %3295 = vmatpush.msra.mxu0 %v2566
    %3296 = vmatpush.msra.mxu0 %v2562
    %3297 = vmatpush.msra.mxu0 %v2558
    %3298 = vmatpush.msra.mxu0 %v2554
    %3299 = vmatpush.msra.mxu0 %v2550
    %3300 = vmatpush.msra.mxu0 %v2546
    %3301 = vmatpush.msra.mxu0 %v2542
    %3302 = vmatmul.f32.gmra.mxu0 %v3244
    %v3303 = vpop.f32.mrf.mxu0
    %v3304 = vadd.f32 0.0, %v3303
    %3305 = vdwg.mxu0
    %3306 = vmatpush.msra.mxu0 %v2603
    %3307 = vmatpush.msra.mxu0 %v2599
    %3308 = vmatpush.msra.mxu0 %v2595
    %3309 = vmatpush.msra.mxu0 %v2591
    %3310 = vmatpush.msra.mxu0 %v2587
    %3311 = vmatpush.msra.mxu0 %v2583
    %3312 = vmatpush.msra.mxu0 %v2579
    %3313 = vmatpush.msra.mxu0 %v2575
    %3314 = vmatpush.msra.mxu0 %v2571
    %3315 = vmatpush.msra.mxu0 %v2567
    %3316 = vmatpush.msra.mxu0 %v2563
    %3317 = vmatpush.msra.mxu0 %v2559
    %3318 = vmatpush.msra.mxu0 %v2555
    %3319 = vmatpush.msra.mxu0 %v2551
    %3320 = vmatpush.msra.mxu0 %v2547
    %3321 = vmatpush.msra.mxu0 %v2543
    %3322 = vmatmul.f32.gmra.mxu0 %v3244
    %v3323 = vpop.f32.mrf.mxu0
    %v3324 = vadd.f32 0.0, %v3323
    %3325 = vdwg.mxu0
    %v3326 = vadd.f32 %v2469, %v3264
    %v3327 = vadd.f32 %v2492, %v3284
    %v3328 = vadd.f32 %v2515, %v3304
    %v3329 = vadd.f32 %v2538, %v3324
    %v3330 = vxor.u32 %v3326, 2147483648
    %v3331 = vmul.f32 %v3330, 1.442695
    %v3332 = vpow.pop %v3331
    %v3333 = vadd.f32 %v3332, 1.0
    %v3334 = vrcp.pop %v3333
    %v3335 = vmul.f32 %v3333, %v3334
    %v3336 = vsub.f32 1.0, %v3335
    %v3337 = vmul.f32 %v3334, %v3336
    %v3338 = vadd.f32 %v3334, %v3337
    %vm3339 = vweird.f32 %v3333
    %vm3340 = vweird.f32 %v3334
    %vm3341 = vmor %vm3339, %vm3340
    %v3342 = vsel %vm3341, %v3334, %v3338
    %v3343 = vand.u32 2147483647, %v3333
    %vm3344 = vcmp.eq.f32.partialorder %v3343, 8.507059e+37
    %v3345 = vand.u32 %v3333, 2147483648
    %v3346 = vor.u32 1.1754944e-38, %v3345
    %v3347 = vsel %vm3344, %v3346, %v3342
    %v3348 = vmul.f32 1.0, %v3347
    %v3349 = vxor.u32 %v3327, 2147483648
    %v3350 = vmul.f32 %v3349, 1.442695
    %v3351 = vpow.pop %v3350
    %v3352 = vadd.f32 %v3351, 1.0
    %v3353 = vrcp.pop %v3352
    %v3354 = vmul.f32 %v3352, %v3353
    %v3355 = vsub.f32 1.0, %v3354
    %v3356 = vmul.f32 %v3353, %v3355
    %v3357 = vadd.f32 %v3353, %v3356
    %vm3358 = vweird.f32 %v3352
    %vm3359 = vweird.f32 %v3353
    %vm3360 = vmor %vm3358, %vm3359
    %v3361 = vsel %vm3360, %v3353, %v3357
    %v3362 = vand.u32 2147483647, %v3352
    %vm3363 = vcmp.eq.f32.partialorder %v3362, 8.507059e+37
    %v3364 = vand.u32 %v3352, 2147483648
    %v3365 = vor.u32 1.1754944e-38, %v3364
    %v3366 = vsel %vm3363, %v3365, %v3361
    %v3367 = vmul.f32 1.0, %v3366
    %v3368 = vtanh.pop %v3328
    %v3369 = vxor.u32 %v3329, 2147483648
    %v3370 = vmul.f32 %v3369, 1.442695
    %v3371 = vpow.pop %v3370
    %v3372 = vadd.f32 %v3371, 1.0
    %v3373 = vrcp.pop %v3372
    %v3374 = vmul.f32 %v3372, %v3373
    %v3375 = vsub.f32 1.0, %v3374
    %v3376 = vmul.f32 %v3373, %v3375
    %v3377 = vadd.f32 %v3373, %v3376
    %vm3378 = vweird.f32 %v3372
    %vm3379 = vweird.f32 %v3373
    %vm3380 = vmor %vm3378, %vm3379
    %v3381 = vsel %vm3380, %v3373, %v3377
    %v3382 = vand.u32 2147483647, %v3372
    %vm3383 = vcmp.eq.f32.partialorder %v3382, 8.507059e+37
    %v3384 = vand.u32 %v3372, 2147483648
    %v3385 = vor.u32 1.1754944e-38, %v3384
    %v3386 = vsel %vm3383, %v3385, %v3381
    %v3387 = vmul.f32 1.0, %v3386
    %v3389 = vrot.slane %v3240, 6
    %v3391 = vmul.f32 %v3367, %v3389
    %v3392 = vmul.f32 %v3348, %v3368
    %v3393 = vadd.f32 %v3391, %v3392
    %v3394 = vtanh.pop %v3393
    %v3395 = vmul.f32 %v3387, %v3394
    %3396 = vmatpush.msra.mxu0 %v2600
    %3397 = vmatpush.msra.mxu0 %v2596
    %3398 = vmatpush.msra.mxu0 %v2592
    %3399 = vmatpush.msra.mxu0 %v2588
    %3400 = vmatpush.msra.mxu0 %v2584
    %3401 = vmatpush.msra.mxu0 %v2580
    %3402 = vmatpush.msra.mxu0 %v2576
    %3403 = vmatpush.msra.mxu0 %v2572
    %3404 = vmatpush.msra.mxu0 %v2568
    %3405 = vmatpush.msra.mxu0 %v2564
    %3406 = vmatpush.msra.mxu0 %v2560
    %3407 = vmatpush.msra.mxu0 %v2556
    %3408 = vmatpush.msra.mxu0 %v2552
    %3409 = vmatpush.msra.mxu0 %v2548
    %3410 = vmatpush.msra.mxu0 %v2544
    %3411 = vmatpush.msra.mxu0 %v2540
    %3412 = vmatmul.f32.gmra.mxu0 %v3395
    %v3413 = vpop.f32.mrf.mxu0
    %v3414 = vadd.f32 0.0, %v3413
    %3415 = vdwg.mxu0
    %3416 = vmatpush.msra.mxu0 %v2601
    %3417 = vmatpush.msra.mxu0 %v2597
    %3418 = vmatpush.msra.mxu0 %v2593
    %3419 = vmatpush.msra.mxu0 %v2589
    %3420 = vmatpush.msra.mxu0 %v2585
    %3421 = vmatpush.msra.mxu0 %v2581
    %3422 = vmatpush.msra.mxu0 %v2577
    %3423 = vmatpush.msra.mxu0 %v2573
    %3424 = vmatpush.msra.mxu0 %v2569
    %3425 = vmatpush.msra.mxu0 %v2565
    %3426 = vmatpush.msra.mxu0 %v2561
    %3427 = vmatpush.msra.mxu0 %v2557
    %3428 = vmatpush.msra.mxu0 %v2553
    %3429 = vmatpush.msra.mxu0 %v2549
    %3430 = vmatpush.msra.mxu0 %v2545
    %3431 = vmatpush.msra.mxu0 %v2541
    %3432 = vmatmul.f32.gmra.mxu0 %v3395
    %v3433 = vpop.f32.mrf.mxu0
    %v3434 = vadd.f32 0.0, %v3433
    %3435 = vdwg.mxu0
    %3436 = vmatpush.msra.mxu0 %v2602
    %3437 = vmatpush.msra.mxu0 %v2598
    %3438 = vmatpush.msra.mxu0 %v2594
    %3439 = vmatpush.msra.mxu0 %v2590
    %3440 = vmatpush.msra.mxu0 %v2586
    %3441 = vmatpush.msra.mxu0 %v2582
    %3442 = vmatpush.msra.mxu0 %v2578
    %3443 = vmatpush.msra.mxu0 %v2574
    %3444 = vmatpush.msra.mxu0 %v2570
    %3445 = vmatpush.msra.mxu0 %v2566
    %3446 = vmatpush.msra.mxu0 %v2562
    %3447 = vmatpush.msra.mxu0 %v2558
    %3448 = vmatpush.msra.mxu0 %v2554
    %3449 = vmatpush.msra.mxu0 %v2550
    %3450 = vmatpush.msra.mxu0 %v2546
    %3451 = vmatpush.msra.mxu0 %v2542
    %3452 = vmatmul.f32.gmra.mxu0 %v3395
    %v3453 = vpop.f32.mrf.mxu0
    %v3454 = vadd.f32 0.0, %v3453
    %3455 = vdwg.mxu0
    %3456 = vmatpush.msra.mxu0 %v2603
    %3457 = vmatpush.msra.mxu0 %v2599
    %3458 = vmatpush.msra.mxu0 %v2595
    %3459 = vmatpush.msra.mxu0 %v2591
    %3460 = vmatpush.msra.mxu0 %v2587
    %3461 = vmatpush.msra.mxu0 %v2583
    %3462 = vmatpush.msra.mxu0 %v2579
    %3463 = vmatpush.msra.mxu0 %v2575
    %3464 = vmatpush.msra.mxu0 %v2571
    %3465 = vmatpush.msra.mxu0 %v2567
    %3466 = vmatpush.msra.mxu0 %v2563
    %3467 = vmatpush.msra.mxu0 %v2559
    %3468 = vmatpush.msra.mxu0 %v2555
    %3469 = vmatpush.msra.mxu0 %v2551
    %3470 = vmatpush.msra.mxu0 %v2547
    %3471 = vmatpush.msra.mxu0 %v2543
    %3472 = vmatmul.f32.gmra.mxu0 %v3395
    %v3473 = vpop.f32.mrf.mxu0
    %v3474 = vadd.f32 0.0, %v3473
    %3475 = vdwg.mxu0
    %v3480 = vrot.slane %v3414, 6
    %v3481 = vrot.slane %v3434, 6
    %v3482 = vrot.slane %v3454, 6
    %v3483 = vrot.slane %v3474, 6
    %v3488 = vadd.f32 %v2469, %v3480
    %v3489 = vadd.f32 %v2492, %v3481
    %v3490 = vadd.f32 %v2515, %v3482
    %v3491 = vadd.f32 %v2538, %v3483
    %v3492 = vxor.u32 %v3488, 2147483648
    %v3493 = vmul.f32 %v3492, 1.442695
    %v3494 = vpow.pop %v3493
    %v3495 = vadd.f32 %v3494, 1.0
    %v3496 = vrcp.pop %v3495
    %v3497 = vmul.f32 %v3495, %v3496
    %v3498 = vsub.f32 1.0, %v3497
    %v3499 = vmul.f32 %v3496, %v3498
    %v3500 = vadd.f32 %v3496, %v3499
    %vm3501 = vweird.f32 %v3495
    %vm3502 = vweird.f32 %v3496
    %vm3503 = vmor %vm3501, %vm3502
    %v3504 = vsel %vm3503, %v3496, %v3500
    %v3505 = vand.u32 2147483647, %v3495
    %vm3506 = vcmp.eq.f32.partialorder %v3505, 8.507059e+37
    %v3507 = vand.u32 %v3495, 2147483648
    %v3508 = vor.u32 1.1754944e-38, %v3507
    %v3509 = vsel %vm3506, %v3508, %v3504
    %v3510 = vmul.f32 1.0, %v3509
    %v3511 = vxor.u32 %v3489, 2147483648
    %v3512 = vmul.f32 %v3511, 1.442695
    %v3513 = vpow.pop %v3512
    %v3514 = vadd.f32 %v3513, 1.0
    %v3515 = vrcp.pop %v3514
    %v3516 = vmul.f32 %v3514, %v3515
    %v3517 = vsub.f32 1.0, %v3516
    %v3518 = vmul.f32 %v3515, %v3517
    %v3519 = vadd.f32 %v3515, %v3518
    %vm3520 = vweird.f32 %v3514
    %vm3521 = vweird.f32 %v3515
    %vm3522 = vmor %vm3520, %vm3521
    %v3523 = vsel %vm3522, %v3515, %v3519
    %v3524 = vand.u32 2147483647, %v3514
    %vm3525 = vcmp.eq.f32.partialorder %v3524, 8.507059e+37
    %v3526 = vand.u32 %v3514, 2147483648
    %v3527 = vor.u32 1.1754944e-38, %v3526
    %v3528 = vsel %vm3525, %v3527, %v3523
    %v3529 = vmul.f32 1.0, %v3528
    %v3530 = vtanh.pop %v3490
    %v3531 = vxor.u32 %v3491, 2147483648
    %v3532 = vmul.f32 %v3531, 1.442695
    %v3533 = vpow.pop %v3532
    %v3534 = vadd.f32 %v3533, 1.0
    %v3535 = vrcp.pop %v3534
    %v3536 = vmul.f32 %v3534, %v3535
    %v3537 = vsub.f32 1.0, %v3536
    %v3538 = vmul.f32 %v3535, %v3537
    %v3539 = vadd.f32 %v3535, %v3538
    %vm3540 = vweird.f32 %v3534
    %vm3541 = vweird.f32 %v3535
    %vm3542 = vmor %vm3540, %vm3541
    %v3543 = vsel %vm3542, %v3535, %v3539
    %v3544 = vand.u32 2147483647, %v3534
    %vm3545 = vcmp.eq.f32.partialorder %v3544, 8.507059e+37
    %v3546 = vand.u32 %v3534, 2147483648
    %v3547 = vor.u32 1.1754944e-38, %v3546
    %v3548 = vsel %vm3545, %v3547, %v3543
    %v3549 = vmul.f32 1.0, %v3548
    %v3551 = vrot.slane %v3393, 6
    %v3553 = vmul.f32 %v3529, %v3551
    %v3554 = vmul.f32 %v3510, %v3530
    %v3555 = vadd.f32 %v3553, %v3554
    %v3556 = vtanh.pop %v3555
    %v3557 = vmul.f32 %v3549, %v3556
    %v3559 = vrot.slane %v3557, 2
    %3561 = vmatpush.msra.mxu0 %v2600
    %3562 = vmatpush.msra.mxu0 %v2596
    %3563 = vmatpush.msra.mxu0 %v2592
    %3564 = vmatpush.msra.mxu0 %v2588
    %3565 = vmatpush.msra.mxu0 %v2584
    %3566 = vmatpush.msra.mxu0 %v2580
    %3567 = vmatpush.msra.mxu0 %v2576
    %3568 = vmatpush.msra.mxu0 %v2572
    %3569 = vmatpush.msra.mxu0 %v2568
    %3570 = vmatpush.msra.mxu0 %v2564
    %3571 = vmatpush.msra.mxu0 %v2560
    %3572 = vmatpush.msra.mxu0 %v2556
    %3573 = vmatpush.msra.mxu0 %v2552
    %3574 = vmatpush.msra.mxu0 %v2548
    %3575 = vmatpush.msra.mxu0 %v2544
    %3576 = vmatpush.msra.mxu0 %v2540
    %3577 = vmatmul.f32.gmra.mxu0 %v3559
    %v3578 = vpop.f32.mrf.mxu0
    %v3579 = vadd.f32 0.0, %v3578
    %3580 = vdwg.mxu0
    %3581 = vmatpush.msra.mxu0 %v2601
    %3582 = vmatpush.msra.mxu0 %v2597
    %3583 = vmatpush.msra.mxu0 %v2593
    %3584 = vmatpush.msra.mxu0 %v2589
    %3585 = vmatpush.msra.mxu0 %v2585
    %3586 = vmatpush.msra.mxu0 %v2581
    %3587 = vmatpush.msra.mxu0 %v2577
    %3588 = vmatpush.msra.mxu0 %v2573
    %3589 = vmatpush.msra.mxu0 %v2569
    %3590 = vmatpush.msra.mxu0 %v2565
    %3591 = vmatpush.msra.mxu0 %v2561
    %3592 = vmatpush.msra.mxu0 %v2557
    %3593 = vmatpush.msra.mxu0 %v2553
    %3594 = vmatpush.msra.mxu0 %v2549
    %3595 = vmatpush.msra.mxu0 %v2545
    %3596 = vmatpush.msra.mxu0 %v2541
    %3597 = vmatmul.f32.gmra.mxu0 %v3559
    %v3598 = vpop.f32.mrf.mxu0
    %v3599 = vadd.f32 0.0, %v3598
    %3600 = vdwg.mxu0
    %3601 = vmatpush.msra.mxu0 %v2602
    %3602 = vmatpush.msra.mxu0 %v2598
    %3603 = vmatpush.msra.mxu0 %v2594
    %3604 = vmatpush.msra.mxu0 %v2590
    %3605 = vmatpush.msra.mxu0 %v2586
    %3606 = vmatpush.msra.mxu0 %v2582
    %3607 = vmatpush.msra.mxu0 %v2578
    %3608 = vmatpush.msra.mxu0 %v2574
    %3609 = vmatpush.msra.mxu0 %v2570
    %3610 = vmatpush.msra.mxu0 %v2566
    %3611 = vmatpush.msra.mxu0 %v2562
    %3612 = vmatpush.msra.mxu0 %v2558
    %3613 = vmatpush.msra.mxu0 %v2554
    %3614 = vmatpush.msra.mxu0 %v2550
    %3615 = vmatpush.msra.mxu0 %v2546
    %3616 = vmatpush.msra.mxu0 %v2542
    %3617 = vmatmul.f32.gmra.mxu0 %v3559
    %v3618 = vpop.f32.mrf.mxu0
    %v3619 = vadd.f32 0.0, %v3618
    %3620 = vdwg.mxu0
    %3621 = vmatpush.msra.mxu0 %v2603
    %3622 = vmatpush.msra.mxu0 %v2599
    %3623 = vmatpush.msra.mxu0 %v2595
    %3624 = vmatpush.msra.mxu0 %v2591
    %3625 = vmatpush.msra.mxu0 %v2587
    %3626 = vmatpush.msra.mxu0 %v2583
    %3627 = vmatpush.msra.mxu0 %v2579
    %3628 = vmatpush.msra.mxu0 %v2575
    %3629 = vmatpush.msra.mxu0 %v2571
    %3630 = vmatpush.msra.mxu0 %v2567
    %3631 = vmatpush.msra.mxu0 %v2563
    %3632 = vmatpush.msra.mxu0 %v2559
    %3633 = vmatpush.msra.mxu0 %v2555
    %3634 = vmatpush.msra.mxu0 %v2551
    %3635 = vmatpush.msra.mxu0 %v2547
    %3636 = vmatpush.msra.mxu0 %v2543
    %3637 = vmatmul.f32.gmra.mxu0 %v3559
    %v3638 = vpop.f32.mrf.mxu0
    %v3639 = vadd.f32 0.0, %v3638
    %3640 = vdwg.mxu0
    %v3645 = vrot.slane %v3579, 4
    %v3646 = vrot.slane %v3599, 4
    %v3647 = vrot.slane %v3619, 4
    %v3648 = vrot.slane %v3639, 4
    %v3653 = vadd.f32 %v2469, %v3645
    %v3654 = vadd.f32 %v2492, %v3646
    %v3655 = vadd.f32 %v2515, %v3647
    %v3656 = vadd.f32 %v2538, %v3648
    %v3657 = vxor.u32 %v3653, 2147483648
    %v3658 = vmul.f32 %v3657, 1.442695
    %v3659 = vpow.pop %v3658
    %v3660 = vadd.f32 %v3659, 1.0
    %v3661 = vrcp.pop %v3660
    %v3662 = vmul.f32 %v3660, %v3661
    %v3663 = vsub.f32 1.0, %v3662
    %v3664 = vmul.f32 %v3661, %v3663
    %v3665 = vadd.f32 %v3661, %v3664
    %vm3666 = vweird.f32 %v3660
    %vm3667 = vweird.f32 %v3661
    %vm3668 = vmor %vm3666, %vm3667
    %v3669 = vsel %vm3668, %v3661, %v3665
    %v3670 = vand.u32 2147483647, %v3660
    %vm3671 = vcmp.eq.f32.partialorder %v3670, 8.507059e+37
    %v3672 = vand.u32 %v3660, 2147483648
    %v3673 = vor.u32 1.1754944e-38, %v3672
    %v3674 = vsel %vm3671, %v3673, %v3669
    %v3675 = vmul.f32 1.0, %v3674
    %v3676 = vxor.u32 %v3654, 2147483648
    %v3677 = vmul.f32 %v3676, 1.442695
    %v3678 = vpow.pop %v3677
    %v3679 = vadd.f32 %v3678, 1.0
    %v3680 = vrcp.pop %v3679
    %v3681 = vmul.f32 %v3679, %v3680
    %v3682 = vsub.f32 1.0, %v3681
    %v3683 = vmul.f32 %v3680, %v3682
    %v3684 = vadd.f32 %v3680, %v3683
    %vm3685 = vweird.f32 %v3679
    %vm3686 = vweird.f32 %v3680
    %vm3687 = vmor %vm3685, %vm3686
    %v3688 = vsel %vm3687, %v3680, %v3684
    %v3689 = vand.u32 2147483647, %v3679
    %vm3690 = vcmp.eq.f32.partialorder %v3689, 8.507059e+37
    %v3691 = vand.u32 %v3679, 2147483648
    %v3692 = vor.u32 1.1754944e-38, %v3691
    %v3693 = vsel %vm3690, %v3692, %v3688
    %v3694 = vmul.f32 1.0, %v3693
    %v3695 = vtanh.pop %v3655
    %v3696 = vxor.u32 %v3656, 2147483648
    %v3697 = vmul.f32 %v3696, 1.442695
    %v3698 = vpow.pop %v3697
    %v3699 = vadd.f32 %v3698, 1.0
    %v3700 = vrcp.pop %v3699
    %v3701 = vmul.f32 %v3699, %v3700
    %v3702 = vsub.f32 1.0, %v3701
    %v3703 = vmul.f32 %v3700, %v3702
    %v3704 = vadd.f32 %v3700, %v3703
    %vm3705 = vweird.f32 %v3699
    %vm3706 = vweird.f32 %v3700
    %vm3707 = vmor %vm3705, %vm3706
    %v3708 = vsel %vm3707, %v3700, %v3704
    %v3709 = vand.u32 2147483647, %v3699
    %vm3710 = vcmp.eq.f32.partialorder %v3709, 8.507059e+37
    %v3711 = vand.u32 %v3699, 2147483648
    %v3712 = vor.u32 1.1754944e-38, %v3711
    %v3713 = vsel %vm3710, %v3712, %v3708
    %v3714 = vmul.f32 1.0, %v3713
    %v3716 = vrot.slane %v3555, 6
    %v3718 = vmul.f32 %v3694, %v3716
    %v3719 = vmul.f32 %v3675, %v3695
    %v3720 = vadd.f32 %v3718, %v3719
    %v3721 = vtanh.pop %v3720
    %v3722 = vmul.f32 %v3714, %v3721
    %v3724 = vrot.slane %v3722, 4
    %3726 = vmatpush.msra.mxu0 %v2600
    %3727 = vmatpush.msra.mxu0 %v2596
    %3728 = vmatpush.msra.mxu0 %v2592
    %3729 = vmatpush.msra.mxu0 %v2588
    %3730 = vmatpush.msra.mxu0 %v2584
    %3731 = vmatpush.msra.mxu0 %v2580
    %3732 = vmatpush.msra.mxu0 %v2576
    %3733 = vmatpush.msra.mxu0 %v2572
    %3734 = vmatpush.msra.mxu0 %v2568
    %3735 = vmatpush.msra.mxu0 %v2564
    %3736 = vmatpush.msra.mxu0 %v2560
    %3737 = vmatpush.msra.mxu0 %v2556
    %3738 = vmatpush.msra.mxu0 %v2552
    %3739 = vmatpush.msra.mxu0 %v2548
    %3740 = vmatpush.msra.mxu0 %v2544
    %3741 = vmatpush.msra.mxu0 %v2540
    %3742 = vmatmul.f32.gmra.mxu0 %v3724
    %v3743 = vpop.f32.mrf.mxu0
    %v3744 = vadd.f32 0.0, %v3743
    %3745 = vdwg.mxu0
    %3746 = vmatpush.msra.mxu0 %v2601
    %3747 = vmatpush.msra.mxu0 %v2597
    %3748 = vmatpush.msra.mxu0 %v2593
    %3749 = vmatpush.msra.mxu0 %v2589
    %3750 = vmatpush.msra.mxu0 %v2585
    %3751 = vmatpush.msra.mxu0 %v2581
    %3752 = vmatpush.msra.mxu0 %v2577
    %3753 = vmatpush.msra.mxu0 %v2573
    %3754 = vmatpush.msra.mxu0 %v2569
    %3755 = vmatpush.msra.mxu0 %v2565
    %3756 = vmatpush.msra.mxu0 %v2561
    %3757 = vmatpush.msra.mxu0 %v2557
    %3758 = vmatpush.msra.mxu0 %v2553
    %3759 = vmatpush.msra.mxu0 %v2549
    %3760 = vmatpush.msra.mxu0 %v2545
    %3761 = vmatpush.msra.mxu0 %v2541
    %3762 = vmatmul.f32.gmra.mxu0 %v3724
    %v3763 = vpop.f32.mrf.mxu0
    %v3764 = vadd.f32 0.0, %v3763
    %3765 = vdwg.mxu0
    %3766 = vmatpush.msra.mxu0 %v2602
    %3767 = vmatpush.msra.mxu0 %v2598
    %3768 = vmatpush.msra.mxu0 %v2594
    %3769 = vmatpush.msra.mxu0 %v2590
    %3770 = vmatpush.msra.mxu0 %v2586
    %3771 = vmatpush.msra.mxu0 %v2582
    %3772 = vmatpush.msra.mxu0 %v2578
    %3773 = vmatpush.msra.mxu0 %v2574
    %3774 = vmatpush.msra.mxu0 %v2570
    %3775 = vmatpush.msra.mxu0 %v2566
    %3776 = vmatpush.msra.mxu0 %v2562
    %3777 = vmatpush.msra.mxu0 %v2558
    %3778 = vmatpush.msra.mxu0 %v2554
    %3779 = vmatpush.msra.mxu0 %v2550
    %3780 = vmatpush.msra.mxu0 %v2546
    %3781 = vmatpush.msra.mxu0 %v2542
    %3782 = vmatmul.f32.gmra.mxu0 %v3724
    %v3783 = vpop.f32.mrf.mxu0
    %v3784 = vadd.f32 0.0, %v3783
    %3785 = vdwg.mxu0
    %3786 = vmatpush.msra.mxu0 %v2603
    %3787 = vmatpush.msra.mxu0 %v2599
    %3788 = vmatpush.msra.mxu0 %v2595
    %3789 = vmatpush.msra.mxu0 %v2591
    %3790 = vmatpush.msra.mxu0 %v2587
    %3791 = vmatpush.msra.mxu0 %v2583
    %3792 = vmatpush.msra.mxu0 %v2579
    %3793 = vmatpush.msra.mxu0 %v2575
    %3794 = vmatpush.msra.mxu0 %v2571
    %3795 = vmatpush.msra.mxu0 %v2567
    %3796 = vmatpush.msra.mxu0 %v2563
    %3797 = vmatpush.msra.mxu0 %v2559
    %3798 = vmatpush.msra.mxu0 %v2555
    %3799 = vmatpush.msra.mxu0 %v2551
    %3800 = vmatpush.msra.mxu0 %v2547
    %3801 = vmatpush.msra.mxu0 %v2543
    %3802 = vmatmul.f32.gmra.mxu0 %v3724
    %v3803 = vpop.f32.mrf.mxu0
    %v3804 = vadd.f32 0.0, %v3803
    %3805 = vdwg.mxu0
    %v3810 = vrot.slane %v3744, 2
    %v3811 = vrot.slane %v3764, 2
    %v3812 = vrot.slane %v3784, 2
    %v3813 = vrot.slane %v3804, 2
    %v3818 = vadd.f32 %v2469, %v3810
    %v3819 = vadd.f32 %v2492, %v3811
    %v3820 = vadd.f32 %v2515, %v3812
    %v3821 = vadd.f32 %v2538, %v3813
    %v3822 = vxor.u32 %v3818, 2147483648
    %v3823 = vmul.f32 %v3822, 1.442695
    %v3824 = vpow.pop %v3823
    %v3825 = vadd.f32 %v3824, 1.0
    %v3826 = vrcp.pop %v3825
    %v3827 = vmul.f32 %v3825, %v3826
    %v3828 = vsub.f32 1.0, %v3827
    %v3829 = vmul.f32 %v3826, %v3828
    %v3830 = vadd.f32 %v3826, %v3829
    %vm3831 = vweird.f32 %v3825
    %vm3832 = vweird.f32 %v3826
    %vm3833 = vmor %vm3831, %vm3832
    %v3834 = vsel %vm3833, %v3826, %v3830
    %v3835 = vand.u32 2147483647, %v3825
    %vm3836 = vcmp.eq.f32.partialorder %v3835, 8.507059e+37
    %v3837 = vand.u32 %v3825, 2147483648
    %v3838 = vor.u32 1.1754944e-38, %v3837
    %v3839 = vsel %vm3836, %v3838, %v3834
    %v3840 = vmul.f32 1.0, %v3839
    %v3841 = vxor.u32 %v3819, 2147483648
    %v3842 = vmul.f32 %v3841, 1.442695
    %v3843 = vpow.pop %v3842
    %v3844 = vadd.f32 %v3843, 1.0
    %v3845 = vrcp.pop %v3844
    %v3846 = vmul.f32 %v3844, %v3845
    %v3847 = vsub.f32 1.0, %v3846
    %v3848 = vmul.f32 %v3845, %v3847
    %v3849 = vadd.f32 %v3845, %v3848
    %vm3850 = vweird.f32 %v3844
    %vm3851 = vweird.f32 %v3845
    %vm3852 = vmor %vm3850, %vm3851
    %v3853 = vsel %vm3852, %v3845, %v3849
    %v3854 = vand.u32 2147483647, %v3844
    %vm3855 = vcmp.eq.f32.partialorder %v3854, 8.507059e+37
    %v3856 = vand.u32 %v3844, 2147483648
    %v3857 = vor.u32 1.1754944e-38, %v3856
    %v3858 = vsel %vm3855, %v3857, %v3853
    %v3859 = vmul.f32 1.0, %v3858
    %v3860 = vtanh.pop %v3820
    %v3861 = vxor.u32 %v3821, 2147483648
    %v3862 = vmul.f32 %v3861, 1.442695
    %v3863 = vpow.pop %v3862
    %v3864 = vadd.f32 %v3863, 1.0
    %v3865 = vrcp.pop %v3864
    %v3866 = vmul.f32 %v3864, %v3865
    %v3867 = vsub.f32 1.0, %v3866
    %v3868 = vmul.f32 %v3865, %v3867
    %v3869 = vadd.f32 %v3865, %v3868
    %vm3870 = vweird.f32 %v3864
    %vm3871 = vweird.f32 %v3865
    %vm3872 = vmor %vm3870, %vm3871
    %v3873 = vsel %vm3872, %v3865, %v3869
    %v3874 = vand.u32 2147483647, %v3864
    %vm3875 = vcmp.eq.f32.partialorder %v3874, 8.507059e+37
    %v3876 = vand.u32 %v3864, 2147483648
    %v3877 = vor.u32 1.1754944e-38, %v3876
    %v3878 = vsel %vm3875, %v3877, %v3873
    %v3879 = vmul.f32 1.0, %v3878
    %v3881 = vrot.slane %v3720, 6
    %v3883 = vmul.f32 %v3859, %v3881
    %v3884 = vmul.f32 %v3840, %v3860
    %v3885 = vadd.f32 %v3883, %v3884
    %v3886 = vtanh.pop %v3885
    %v3887 = vmul.f32 %v3879, %v3886
    %v3888 = vld [vmem:[%s7] sm:$0xff]
    %v3889 = vld [vmem:[%s7 + $0x8] sm:$0xff]
    %v3890 = vld [vmem:[%s7 + $0x10] sm:$0xff]
    %v3891 = vld [vmem:[%s7 + $0x18] sm:$0xff]
    %v3892 = vld [vmem:[%s7 + $0x20] sm:$0xff]
    %v3893 = vld [vmem:[%s7 + $0x28] sm:$0xff]
    %v3894 = vld [vmem:[%s7 + $0x30] sm:$0xff]
    %v3895 = vld [vmem:[%s7 + $0x38] sm:$0xff]
    %v3896 = vld [vmem:[%s7 + $0x40] sm:$0xff]
    %v3897 = vld [vmem:[%s7 + $0x48] sm:$0xff]
    %v3898 = vld [vmem:[%s7 + $0x50] sm:$0xff]
    %v3899 = vld [vmem:[%s7 + $0x58] sm:$0xff]
    %v3900 = vld [vmem:[%s7 + $0x60] sm:$0xff]
    %v3901 = vld [vmem:[%s7 + $0x68] sm:$0xff]
    %v3902 = vld [vmem:[%s7 + $0x70] sm:$0xff]
    %v3903 = vld [vmem:[%s7 + $0x78] sm:$0xff]
    %v3904 = vld [vmem:[%s8] sm:$0x1]
    %v3906 = vperm.slane %v3904, 0
    %v3909 = vrot.slane %v3887, 6
    %3911 = vmatpush.msra.mxu0 %v3903
    %3912 = vmatpush.msra.mxu0 %v3902
    %3913 = vmatpush.msra.mxu0 %v3901
    %3914 = vmatpush.msra.mxu0 %v3900
    %3915 = vmatpush.msra.mxu0 %v3899
    %3916 = vmatpush.msra.mxu0 %v3898
    %3917 = vmatpush.msra.mxu0 %v3897
    %3918 = vmatpush.msra.mxu0 %v3896
    %3919 = vmatpush.msra.mxu0 %v3895
    %3920 = vmatpush.msra.mxu0 %v3894
    %3921 = vmatpush.msra.mxu0 %v3893
    %3922 = vmatpush.msra.mxu0 %v3892
    %3923 = vmatpush.msra.mxu0 %v3891
    %3924 = vmatpush.msra.mxu0 %v3890
    %3925 = vmatpush.msra.mxu0 %v3889
    %3926 = vmatpush.msra.mxu0 %v3888
    %3927 = vmatmul.f32.gmra.mxu0 %v3909
    %v3928 = vpop.f32.mrf.mxu0
    %v3929 = vadd.f32 %v3906, %v3928
    %3930 = vdwg.mxu0
    %v3931 = vxor.u32 %v3929, 2147483648
    %v3932 = vmul.f32 %v3931, 1.442695
    %v3933 = vpow.pop %v3932
    %v3934 = vadd.f32 %v3933, 1.0
    %v3935 = vrcp.pop %v3934
    %v3936 = vmul.f32 %v3934, %v3935
    %v3937 = vsub.f32 1.0, %v3936
    %v3938 = vmul.f32 %v3935, %v3937
    %v3939 = vadd.f32 %v3935, %v3938
    %vm3940 = vweird.f32 %v3934
    %vm3941 = vweird.f32 %v3935
    %vm3942 = vmor %vm3940, %vm3941
    %v3943 = vsel %vm3942, %v3935, %v3939
    %v3944 = vand.u32 2147483647, %v3934
    %vm3945 = vcmp.eq.f32.partialorder %v3944, 8.507059e+37
    %v3946 = vand.u32 %v3934, 2147483648
    %v3947 = vor.u32 1.1754944e-38, %v3946
    %v3948 = vsel %vm3945, %v3947, %v3943
    %v3949 = vmul.f32 1.0, %v3948
    %3950 = vst [vmem:[#allocation11] sm:$0x3] %v3949
    // Predicated region
    $region54: #{_forward.1} parent=1 // pred_check
      _
    $region55: #{_forward.1} parent=1 // pred_check_branch
      %3952 = sbr.rel (0) target = $region57
    $region56: #{_forward.1} parent=1 // pred_region
      %3954 = vsyncadd [#allocation5], 0
      %s3956 = sshll.u32 [#allocation11], 4
      %s3957 = int_to_ptr.vmem [resolvable:$true] %s3956
      %s3958 = sshll.u32 %s9, 4
      %s3959 = int_to_ptr.hbm [resolvable:$true] %s3958
      %3961 = dma.vmem_to_hbm [thread:$0]  %s3957, 32, %s3959, [#allocation5]
    $region57: #{_forward.1} parent=1 // pred_fallthru
      _
    // Predicated region
    $region58: #{_forward.1} parent=1 // pred_check
      _
    $region59: #{_forward.1} parent=1 // pred_check_branch
      %3963 = sbr.rel (0) target = $region61
    $region60: #{_forward.1} parent=1 // pred_region
      %3965 = dma.done [#allocation5], 32
    $region61: #{_forward.1} parent=1 // pred_fallthru
      _
    %3966 = vsyncpa [#allocation4], 1
    %3967 = vsyncpa [#allocation7], 1
    %3968 = vsyncpa [#allocation10], 1
    %3969 = vsyncpa [#allocation5], 1

</llo_original>
